<compile_context>
chip_gen: v7x
topology: tpu7x:2x2x1
jax: 0.10.0
libtpu: 0.0.40
codegen_flags: <defaults>
</compile_context>

<pallas_src>
import jax
import jax.numpy as jnp
from jax.experimental import pallas as pl
from jax.experimental.pallas import tpu as pltpu


def _act(x):
    # swish / SiLU, the standard DimeNet activation
    return x * jax.nn.sigmoid(x)


def interaction_kernel(
    # data
    x_ref, rbf_ref, sbfemb_ref, idxkj_ref, idxji_ref,
    # params (weights bf16, biases f32; rbf chain folded; alpha folded in w_up)
    w_jikj, b_jikj, w_rbf, w_down, w_up,
    res_b_w, res_b_b, w_lin, b_lin, res_a_w, res_a_b,
    # output
    out_ref,
    # scratch
    acc_ref, xkj_ref, xji_ref, iota_te_ref, iota_et_ref,
):
    f32 = jnp.float32
    bf16 = jnp.bfloat16
    step = pl.program_id(0)
    E = x_ref.shape[0]
    Hp = x_ref.shape[1]          # padded hidden dim (lane-dense, 128)
    tT = sbfemb_ref.shape[0]

    # ---- step 0: edge-level pre-processing, kept resident in VMEM scratch ----
    @pl.when(step == 0)
    def _init():
        # constant one-hot comparands, cached across grid steps
        iota_te_ref[...] = jax.lax.broadcasted_iota(jnp.int32, (tT, E), 1)
        iota_et_ref[...] = jax.lax.broadcasted_iota(jnp.int32, (E, tT), 0)

        x = x_ref[...]
        # fused ji/kj projection: one (Hp, 2Hp) matmul, slice the (E, 2Hp) result
        xx = _act(jnp.dot(x, w_jikj[...], preferred_element_type=f32) + b_jikj[...])
        x_ji = xx[:, :Hp]
        x_kj = xx[:, Hp:]
        # folded rbf embedding: (E, R) @ (R, Hp)
        rbf = jnp.dot(rbf_ref[...], w_rbf[...], preferred_element_type=f32)
        x_kj = x_kj * rbf
        xji_ref[...] = x_ji
        xkj_ref[...] = _act(
            jnp.dot(x_kj, w_down[...], preferred_element_type=f32)).astype(bf16)
        acc_ref[...] = jnp.zeros_like(acc_ref)

    # ---- every step: gather / sbf-weight / scatter-accumulate one T tile ----
    sbf = sbfemb_ref[...]                                                       # (tT, Ip)

    # gather x_kj[idx_kj]: (tT, E) bf16 one-hot @ (E, Ip) bf16, f32 accumulate
    onehot_kj = (idxkj_ref[...] == iota_te_ref[...]).astype(bf16)               # (tT, E)
    gathered = jnp.dot(onehot_kj, xkj_ref[...], preferred_element_type=f32)     # (tT, Ip)
    x_kj_t = gathered * sbf

    # scatter-sum over idx_ji: one-hot built pre-transposed as (E, tT) so the
    # contraction runs as a plain matmul with no XLU transpose.
    onehot_ji = (idxji_ref[...] == iota_et_ref[...]).astype(bf16)               # (E, tT)
    acc_ref[...] += jnp.dot(onehot_ji, x_kj_t.astype(bf16),
                            preferred_element_type=f32)                         # (E, Ip)

    # ---- last step: up-projection, residual stacks, skip connection, store ----
    @pl.when(step == pl.num_programs(0) - 1)
    def _finish():
        x = x_ref[...]
        # alpha is already folded into w_up
        x_kj_up = _act(jnp.dot(acc_ref[...], w_up[...], preferred_element_type=f32))
        h = xji_ref[...] + x_kj_up

        nb = res_b_w.shape[0]
        for i in range(nb):
            t1 = _act(jnp.dot(h, res_b_w[i, 0], preferred_element_type=f32)
                      + res_b_b[i, 0])
            h = h + _act(jnp.dot(t1, res_b_w[i, 1], preferred_element_type=f32)
                         + res_b_b[i, 1])

        h = _act(jnp.dot(h, w_lin[...], preferred_element_type=f32) + b_lin[...]) + x

        na = res_a_w.shape[0]
        for i in range(na):
            t1 = _act(jnp.dot(h, res_a_w[i, 0], preferred_element_type=f32)
                      + res_a_b[i, 0])
            h = h + _act(jnp.dot(t1, res_a_w[i, 1], preferred_element_type=f32)
                         + res_a_b[i, 1])

        out_ref[...] = h


def _pad_to(a, shape):
    pads = [(0, s - d) for d, s in zip(a.shape, shape)]
    return jnp.pad(a, pads)


def interaction_pp_block_swm(x, rbf, sbf, idx_kj, idx_ji, alpha_eff, params,
                             *, t_tile=256, lane_pad=128):
    f32, bf16 = jnp.float32, jnp.bfloat16
    E, H = x.shape
    T = sbf.shape[0]
    R = rbf.shape[1]
    I = params["w_down"].shape[1]
    nb = params["res_b_w"].shape[0]
    na = params["res_a_w"].shape[0]

    # lane-dense padded dims
    Hp = max(lane_pad, ((H + lane_pad - 1) // lane_pad) * lane_pad)
    Ip = max(lane_pad, ((I + lane_pad - 1) // lane_pad) * lane_pad)
    T_pad = ((T + t_tile - 1) // t_tile) * t_tile

    # ---- exact parameter folding + zero padding (done once, outside kernel) ----
    # Padded weight rows/cols and biases are zero and silu(0)=0, so padded
    # lanes remain identically zero end-to-end.
    w_rbf = _pad_to(params["w_rbf1"] @ params["w_rbf2"], (R, Hp)).astype(f32)
    w_ji_p = _pad_to(params["w_ji"], (Hp, Hp))
    w_kj_p = _pad_to(params["w_kj"], (Hp, Hp))
    w_jikj = jnp.concatenate([w_ji_p, w_kj_p], axis=1).astype(bf16)        # (Hp, 2Hp)
    b_jikj = jnp.concatenate([_pad_to(params["b_ji"], (1, Hp)),
                              _pad_to(params["b_kj"], (1, Hp))], axis=1).astype(f32)
    w_down = _pad_to(params["w_down"], (Hp, Ip)).astype(bf16)
    # lin_up has no bias: alpha * scatter(...) @ w_up == scatter(...) @ (alpha*w_up)
    w_up = _pad_to(jnp.float32(alpha_eff) * params["w_up"], (Ip, Hp)).astype(bf16)
    res_b_w = _pad_to(params["res_b_w"], (nb, 2, Hp, Hp)).astype(bf16)
    res_b_b = _pad_to(params["res_b_b"], (nb, 2, 1, Hp)).astype(f32)
    w_lin = _pad_to(params["w_lin"], (Hp, Hp)).astype(bf16)
    b_lin = _pad_to(params["b_lin"], (1, Hp)).astype(f32)
    res_a_w = _pad_to(params["res_a_w"], (na, 2, Hp, Hp)).astype(bf16)
    res_a_b = _pad_to(params["res_a_b"], (na, 2, 1, Hp)).astype(f32)

    param_inputs = (w_jikj, b_jikj, w_rbf, w_down, w_up,
                    res_b_w, res_b_b, w_lin, b_lin, res_a_w, res_a_b)

    # ---- data prep: hoist sbf embedding, pad T with dropped indices ----
    sbf_emb = sbf.astype(f32) @ (params["w_sbf1"] @ params["w_sbf2"]).astype(f32)
    sbf_emb = _pad_to(sbf_emb, (T_pad, Ip)).astype(f32)                    # (T_pad, Ip)

    # padded triplets use index E (out of range) -> dropped by one-hot compare
    idx_kj_p = jnp.full((T_pad,), E, jnp.int32).at[:T].set(idx_kj.astype(jnp.int32))
    idx_ji_p = jnp.full((T_pad,), E, jnp.int32).at[:T].set(idx_ji.astype(jnp.int32))
    # index layouts chosen so both one-hots are built with zero in-kernel transposes:
    #   idx_kj as a (T, 1) column -> gather one-hot (tT, E)
    #   idx_ji as a (1, T) row    -> scatter one-hot (E, tT)
    idx_kj2 = idx_kj_p.reshape(T_pad, 1)
    idx_ji2 = idx_ji_p.reshape(1, T_pad)

    x_p = _pad_to(x.astype(f32), (E, Hp))
    data_inputs = (x_p, rbf.astype(f32), sbf_emb, idx_kj2, idx_ji2)

    def resident(shape):
        zeros = (0,) * len(shape)
        return pl.BlockSpec(shape, lambda t, z=zeros: z)

    in_specs = [
        resident((E, Hp)),                                # x (resident every step)
        resident((E, R)),                                 # rbf
        pl.BlockSpec((t_tile, Ip), lambda t: (t, 0)),     # sbf embedding tile (streamed)
        pl.BlockSpec((t_tile, 1), lambda t: (t, 0)),      # idx_kj tile
        pl.BlockSpec((1, t_tile), lambda t: (0, t)),      # idx_ji tile
    ] + [resident(p.shape) for p in param_inputs]

    out = pl.pallas_call(
        interaction_kernel,
        out_shape=jax.ShapeDtypeStruct((E, Hp), f32),
        grid=(T_pad // t_tile,),
        in_specs=in_specs,
        out_specs=pl.BlockSpec((E, Hp), lambda t: (0, 0)),
        scratch_shapes=[
            pltpu.VMEM((E, Ip), f32),            # scatter accumulator
            pltpu.VMEM((E, Ip), bf16),           # x_kj after lin_down (gather source)
            pltpu.VMEM((E, Hp), f32),            # x_ji
            pltpu.VMEM((t_tile, E), jnp.int32),  # cached iota for gather one-hot
            pltpu.VMEM((E, t_tile), jnp.int32),  # cached iota for scatter one-hot
        ],
        compiler_params=pltpu.CompilerParams(
            dimension_semantics=("arbitrary",),   # T axis is a reduction
            vmem_limit_bytes=32 * 1024 * 1024,
        ),
    )(*data_inputs, *param_inputs)

    # slice the lane-padded output slab back to the true hidden size
    return out[:, :H]


def make_params(key, H, I, B, S, R, num_before_skip):
    """Deterministic glorot-ish init. Weight layout: [in_features, out_features].

    Weights are rounded to bf16-representable values so passing them to the
    kernel as bf16 is exact (the f32 reference uses the identical values)."""
    def lin(key, fan_in, fan_out):
        scale = (2.0 / (fan_in + fan_out)) ** 0.5
        w = scale * jax.random.normal(key, (fan_in, fan_out), jnp.float32)
        return w.astype(jnp.bfloat16).astype(jnp.float32)

    keys = iter(jax.random.split(key, 64))
    nb = num_before_skip
    params = {
        "w_rbf1": lin(next(keys), R, B),
        "w_rbf2": lin(next(keys), B, H),
        "w_sbf1": lin(next(keys), S * R, B),
        "w_sbf2": lin(next(keys), B, I),
        "w_kj": lin(next(keys), H, H), "b_kj": jnp.zeros((1, H), jnp.float32),
        "w_ji": lin(next(keys), H, H), "b_ji": jnp.zeros((1, H), jnp.float32),
        "w_down": lin(next(keys), H, I),
        "w_up": lin(next(keys), I, H),
        "w_lin": lin(next(keys), H, H), "b_lin": jnp.zeros((1, H), jnp.float32),
    }
    # residual stacks: weights [nb, 2, H, H], biases [nb, 2, 1, H]
    params["res_b_w"] = jnp.stack(
        [jnp.stack([lin(next(keys), H, H), lin(next(keys), H, H)]) for _ in range(nb)])
    params["res_b_b"] = jnp.zeros((nb, 2, 1, H), jnp.float32)
    # module uses num_before_skip for layers_after_skip too (reproduced)
    params["res_a_w"] = jnp.stack(
        [jnp.stack([lin(next(keys), H, H), lin(next(keys), H, H)]) for _ in range(nb)])
    params["res_a_b"] = jnp.zeros((nb, 2, 1, H), jnp.float32)
    return params


def ref_forward(x, rbf, sbf, idx_kj, idx_ji, alpha_eff, params):
    """Pure-JAX f32 reference mirroring the PyTorch forward (bt=None path)."""
    act = jax.nn.silu
    E = x.shape[0]
    x_ji = act(x @ params["w_ji"] + params["b_ji"])
    x_kj = act(x @ params["w_kj"] + params["b_kj"])
    r = rbf @ params["w_rbf1"] @ params["w_rbf2"]
    x_kj = x_kj * r
    x_kj = act(x_kj @ params["w_down"])
    s = sbf @ params["w_sbf1"] @ params["w_sbf2"]
    x_kj = x_kj[idx_kj] * s
    x_kj_spe = alpha_eff * jax.ops.segment_sum(x_kj, idx_ji, num_segments=E)
    x_kj_up = act(x_kj_spe @ params["w_up"])
    h = x_ji + x_kj_up
    nb = params["res_b_w"].shape[0]
    for i in range(nb):
        t = act(h @ params["res_b_w"][i, 0] + params["res_b_b"][i, 0])
        h = h + act(t @ params["res_b_w"][i, 1] + params["res_b_b"][i, 1])
    h = act(h @ params["w_lin"] + params["b_lin"]) + x
    na = params["res_a_w"].shape[0]
    for i in range(na):
        t = act(h @ params["res_a_w"][i, 0] + params["res_a_b"][i, 0])
        h = h + act(t @ params["res_a_w"][i, 1] + params["res_a_b"][i, 1])
    return h


if __name__ == "__main__":
    # small DimeNet++-like sizes
    H = 32            # hidden_channels
    I = 16            # int_emb_size
    B = 8             # basis_emb_size
    S = 4             # num_spherical
    R = 8             # num_radial
    NUM_BEFORE_SKIP = 1
    E = 64            # number of edges
    T = 384           # number of triplets (not a multiple of t_tile -> exercises
                      # the padded / dropped-index path; padded grid has 2 steps)

    key = jax.random.PRNGKey(0)
    kx, kr, ks, kkj, kji, kp = jax.random.split(key, 6)

    x = jax.random.normal(kx, (E, H), jnp.float32)
    rbf = jax.random.normal(kr, (E, R), jnp.float32)
    sbf = jax.random.normal(ks, (T, S * R), jnp.float32)
    idx_kj = jax.random.randint(kkj, (T,), 0, E, jnp.int32)
    idx_ji = jax.random.randint(kji, (T,), 0, E, jnp.int32)

    params = make_params(kp, H, I, B, S, R, NUM_BEFORE_SKIP)

    # bt=None path: alpha is replaced by 1.0 in the PyTorch forward
    alpha_eff = 1.0

    out = interaction_pp_block_swm(x, rbf, sbf, idx_kj, idx_ji, alpha_eff, params,
                                   t_tile=256)
    out = jax.block_until_ready(out)

    ref = ref_forward(x, rbf, sbf, idx_kj, idx_ji, alpha_eff, params)
    assert out.shape == (E, H)
    # Tolerance covers the bf16 rounding of the gather/scatter data path and the
    # re-associated (folded) rbf/sbf basis chains; dense-weight math runs in f32
    # with bf16-representable weights.
    assert jnp.allclose(out, ref, rtol=2e-2, atol=2e-2), \
        float(jnp.max(jnp.abs(out - ref)))

    print("KERNEL_OK")
</pallas_src>

<mosaic_0001>
module attributes {stable_mosaic.version = 11 : i64} {
  func.func @interaction_kernel(%arg0: i32, %arg1: memref<64x128xf32, #tpu.memory_space<vmem>>, %arg2: memref<64x8xf32, #tpu.memory_space<vmem>>, %arg3: memref<256x128xf32, #tpu.memory_space<vmem>>, %arg4: memref<256x1xi32, #tpu.memory_space<vmem>>, %arg5: memref<1x256xi32, #tpu.memory_space<vmem>>, %arg6: memref<128x256xbf16, #tpu.memory_space<vmem>>, %arg7: memref<1x256xf32, #tpu.memory_space<vmem>>, %arg8: memref<8x128xf32, #tpu.memory_space<vmem>>, %arg9: memref<128x128xbf16, #tpu.memory_space<vmem>>, %arg10: memref<128x128xbf16, #tpu.memory_space<vmem>>, %arg11: memref<1x2x128x128xbf16, #tpu.memory_space<vmem>>, %arg12: memref<1x2x1x128xf32, #tpu.memory_space<vmem>>, %arg13: memref<128x128xbf16, #tpu.memory_space<vmem>>, %arg14: memref<1x128xf32, #tpu.memory_space<vmem>>, %arg15: memref<1x2x128x128xbf16, #tpu.memory_space<vmem>>, %arg16: memref<1x2x1x128xf32, #tpu.memory_space<vmem>>, %arg17: memref<64x128xf32, #tpu.memory_space<vmem>>, %arg18: memref<64x128xf32, #tpu.memory_space<vmem>>, %arg19: memref<64x128xbf16, #tpu.memory_space<vmem>>, %arg20: memref<64x128xf32, #tpu.memory_space<vmem>>, %arg21: memref<256x64xi32, #tpu.memory_space<vmem>>, %arg22: memref<64x256xi32, #tpu.memory_space<vmem>>) attributes {dimension_semantics = [#tpu.dimension_semantics<arbitrary>], iteration_bounds = array<i64: 2>, scalar_prefetch = 0 : i64, scratch_operands = 5 : i64, tpu.core_type = #tpu.core_type<tc>, window_params = [{pipeline_mode = #tpu.pipeline_mode<synchronous>, transform_indices = @transform_0, window_bounds = array<i64: 64, 128>}, {pipeline_mode = #tpu.pipeline_mode<synchronous>, transform_indices = @transform_1, window_bounds = array<i64: 64, 8>}, {transform_indices = @transform_2, window_bounds = array<i64: 256, 128>}, {transform_indices = @transform_3, window_bounds = array<i64: 256, 1>}, {transform_indices = @transform_4, window_bounds = array<i64: 1, 256>}, {pipeline_mode = #tpu.pipeline_mode<synchronous>, transform_indices = @transform_5, window_bounds = array<i64: 128, 256>}, {pipeline_mode = #tpu.pipeline_mode<synchronous>, transform_indices = @transform_6, window_bounds = array<i64: 1, 256>}, {pipeline_mode = #tpu.pipeline_mode<synchronous>, transform_indices = @transform_7, window_bounds = array<i64: 8, 128>}, {pipeline_mode = #tpu.pipeline_mode<synchronous>, transform_indices = @transform_8, window_bounds = array<i64: 128, 128>}, {pipeline_mode = #tpu.pipeline_mode<synchronous>, transform_indices = @transform_9, window_bounds = array<i64: 128, 128>}, {pipeline_mode = #tpu.pipeline_mode<synchronous>, transform_indices = @transform_10, window_bounds = array<i64: 1, 2, 128, 128>}, {pipeline_mode = #tpu.pipeline_mode<synchronous>, transform_indices = @transform_11, window_bounds = array<i64: 1, 2, 1, 128>}, {pipeline_mode = #tpu.pipeline_mode<synchronous>, transform_indices = @transform_12, window_bounds = array<i64: 128, 128>}, {pipeline_mode = #tpu.pipeline_mode<synchronous>, transform_indices = @transform_13, window_bounds = array<i64: 1, 128>}, {pipeline_mode = #tpu.pipeline_mode<synchronous>, transform_indices = @transform_14, window_bounds = array<i64: 1, 2, 128, 128>}, {pipeline_mode = #tpu.pipeline_mode<synchronous>, transform_indices = @transform_15, window_bounds = array<i64: 1, 2, 1, 128>}, {pipeline_mode = #tpu.pipeline_mode<synchronous>, transform_indices = @transform_16, window_bounds = array<i64: 64, 128>}]} {
    %c0_i32 = arith.constant 0 : i32
    %0 = arith.cmpi eq, %arg0, %c0_i32 : i32
    %1 = arith.extui %0 : i1 to i32
    %c0_i32_0 = arith.constant 0 : i32
    %2 = arith.cmpi ne, %1, %c0_i32_0 : i32
    scf.if %2 {
      %29 = tpu.iota {dimensions = array<i32: 1>} : vector<256x64xi32>
      %c0_18 = arith.constant 0 : index
      %c0_19 = arith.constant 0 : index
      %30 = vector.load %arg21[%c0_18, %c0_19] : memref<256x64xi32, #tpu.memory_space<vmem>>, vector<256x64xi32>
      tpu.vector_store %arg21[%c0_18, %c0_19], %29 {strides = array<i32>} : memref<256x64xi32, #tpu.memory_space<vmem>>, vector<256x64xi32>,
      %31 = tpu.iota {dimensions = array<i32: 0>} : vector<64x256xi32>
      %c0_20 = arith.constant 0 : index
      %c0_21 = arith.constant 0 : index
      %32 = vector.load %arg22[%c0_20, %c0_21] : memref<64x256xi32, #tpu.memory_space<vmem>>, vector<64x256xi32>
      tpu.vector_store %arg22[%c0_20, %c0_21], %31 {strides = array<i32>} : memref<64x256xi32, #tpu.memory_space<vmem>>, vector<64x256xi32>,
      %c0_22 = arith.constant 0 : index
      %c0_23 = arith.constant 0 : index
      %33 = vector.load %arg1[%c0_22, %c0_23] : memref<64x128xf32, #tpu.memory_space<vmem>>, vector<64x128xf32>
      %c0_24 = arith.constant 0 : index
      %c0_25 = arith.constant 0 : index
      %34 = vector.load %arg6[%c0_24, %c0_25] : memref<128x256xbf16, #tpu.memory_space<vmem>>, vector<128x256xbf16>
      %cst_26 = arith.constant dense<0.000000e+00> : vector<64x256xf32>
      %35 = tpu.matmul %33, %34, %cst_26 {dimension_numbers = #tpu.dot_dimension_numbers<[1], [0], [0], [1], [0, 0, 1, 1], [], []>} : vector<64x128xf32>, vector<128x256xbf16>, vector<64x256xf32> -> vector<64x256xf32>
      %c0_27 = arith.constant 0 : index
      %c0_28 = arith.constant 0 : index
      %36 = vector.load %arg7[%c0_27, %c0_28] : memref<1x256xf32, #tpu.memory_space<vmem>>, vector<1x256xf32>
      %37 = vector.broadcast %36 : vector<1x256xf32> to vector<64x256xf32>
      %38 = arith.addf %35, %37 : vector<64x256xf32>
      %39 = arith.negf %38 : vector<64x256xf32>
      %40 = math.exp %39 : vector<64x256xf32>
      %cst_29 = arith.constant 1.000000e+00 : f32
      %41 = vector.broadcast %cst_29 : f32 to vector<64x256xf32>
      %42 = arith.addf %41, %40 : vector<64x256xf32>
      %43 = arith.divf %41, %42 : vector<64x256xf32>
      %44 = arith.mulf %38, %43 : vector<64x256xf32>
      %45 = vector.extract_strided_slice %44 {offsets = [0, 0], sizes = [64, 128], strides = [1, 1]} : vector<64x256xf32> to vector<64x128xf32>
      %46 = vector.extract_strided_slice %44 {offsets = [0, 128], sizes = [64, 128], strides = [1, 1]} : vector<64x256xf32> to vector<64x128xf32>
      %c0_30 = arith.constant 0 : index
      %c0_31 = arith.constant 0 : index
      %47 = vector.load %arg2[%c0_30, %c0_31] : memref<64x8xf32, #tpu.memory_space<vmem>>, vector<64x8xf32>
      %c0_32 = arith.constant 0 : index
      %c0_33 = arith.constant 0 : index
      %48 = vector.load %arg8[%c0_32, %c0_33] : memref<8x128xf32, #tpu.memory_space<vmem>>, vector<8x128xf32>
      %cst_34 = arith.constant dense<0.000000e+00> : vector<64x128xf32>
      %49 = tpu.matmul %47, %48, %cst_34 {dimension_numbers = #tpu.dot_dimension_numbers<[1], [0], [0], [1], [0, 0, 1, 1], [], []>} : vector<64x8xf32>, vector<8x128xf32>, vector<64x128xf32> -> vector<64x128xf32>
      %50 = arith.mulf %46, %49 : vector<64x128xf32>
      %c0_35 = arith.constant 0 : index
      %c0_36 = arith.constant 0 : index
      %51 = vector.load %arg20[%c0_35, %c0_36] : memref<64x128xf32, #tpu.memory_space<vmem>>, vector<64x128xf32>
      tpu.vector_store %arg20[%c0_35, %c0_36], %45 {strides = array<i32>} : memref<64x128xf32, #tpu.memory_space<vmem>>, vector<64x128xf32>,
      %c0_37 = arith.constant 0 : index
      %c0_38 = arith.constant 0 : index
      %52 = vector.load %arg9[%c0_37, %c0_38] : memref<128x128xbf16, #tpu.memory_space<vmem>>, vector<128x128xbf16>
      %cst_39 = arith.constant dense<0.000000e+00> : vector<64x128xf32>
      %53 = tpu.matmul %50, %52, %cst_39 {dimension_numbers = #tpu.dot_dimension_numbers<[1], [0], [0], [1], [0, 0, 1, 1], [], []>} : vector<64x128xf32>, vector<128x128xbf16>, vector<64x128xf32> -> vector<64x128xf32>
      %54 = arith.negf %53 : vector<64x128xf32>
      %55 = math.exp %54 : vector<64x128xf32>
      %cst_40 = arith.constant 1.000000e+00 : f32
      %56 = vector.broadcast %cst_40 : f32 to vector<64x128xf32>
      %57 = arith.addf %56, %55 : vector<64x128xf32>
      %58 = arith.divf %56, %57 : vector<64x128xf32>
      %59 = arith.mulf %53, %58 : vector<64x128xf32>
      %60 = arith.truncf %59 : vector<64x128xf32> to vector<64x128xbf16>
      %c0_41 = arith.constant 0 : index
      %c0_42 = arith.constant 0 : index
      %61 = vector.load %arg19[%c0_41, %c0_42] : memref<64x128xbf16, #tpu.memory_space<vmem>>, vector<64x128xbf16>
      tpu.vector_store %arg19[%c0_41, %c0_42], %60 {strides = array<i32>} : memref<64x128xbf16, #tpu.memory_space<vmem>>, vector<64x128xbf16>,
      %cst_43 = arith.constant 0.000000e+00 : f32
      %62 = vector.broadcast %cst_43 : f32 to vector<64x128xf32>
      %c0_44 = arith.constant 0 : index
      %c0_45 = arith.constant 0 : index
      %63 = vector.load %arg18[%c0_44, %c0_45] : memref<64x128xf32, #tpu.memory_space<vmem>>, vector<64x128xf32>
      tpu.vector_store %arg18[%c0_44, %c0_45], %62 {strides = array<i32>} : memref<64x128xf32, #tpu.memory_space<vmem>>, vector<64x128xf32>,
    } else {
    }
    %c0 = arith.constant 0 : index
    %c0_1 = arith.constant 0 : index
    %3 = vector.load %arg3[%c0, %c0_1] : memref<256x128xf32, #tpu.memory_space<vmem>>, vector<256x128xf32>
    %c0_2 = arith.constant 0 : index
    %c0_3 = arith.constant 0 : index
    %4 = vector.load %arg4[%c0_2, %c0_3] : memref<256x1xi32, #tpu.memory_space<vmem>>, vector<256x1xi32>
    %c0_4 = arith.constant 0 : index
    %c0_5 = arith.constant 0 : index
    %5 = vector.load %arg21[%c0_4, %c0_5] : memref<256x64xi32, #tpu.memory_space<vmem>>, vector<256x64xi32>
    %6 = vector.broadcast %4 : vector<256x1xi32> to vector<256x64xi32>
    %7 = arith.cmpi eq, %6, %5 : vector<256x64xi32>
    %8 = arith.extui %7 : vector<256x64xi1> to vector<256x64xi32>
    %9 = arith.sitofp %8 : vector<256x64xi32> to vector<256x64xf32>
    %10 = arith.truncf %9 : vector<256x64xf32> to vector<256x64xbf16>
    %c0_6 = arith.constant 0 : index
    %c0_7 = arith.constant 0 : index
    %11 = vector.load %arg19[%c0_6, %c0_7] : memref<64x128xbf16, #tpu.memory_space<vmem>>, vector<64x128xbf16>
    %cst = arith.constant dense<0.000000e+00> : vector<256x128xf32>
    %12 = tpu.matmul %10, %11, %cst {dimension_numbers = #tpu.dot_dimension_numbers<[1], [0], [0], [1], [0, 0, 1, 1], [], []>} : vector<256x64xbf16>, vector<64x128xbf16>, vector<256x128xf32> -> vector<256x128xf32>
    %13 = arith.mulf %12, %3 : vector<256x128xf32>
    %c0_8 = arith.constant 0 : index
    %c0_9 = arith.constant 0 : index
    %14 = vector.load %arg5[%c0_8, %c0_9] : memref<1x256xi32, #tpu.memory_space<vmem>>, vector<1x256xi32>
    %c0_10 = arith.constant 0 : index
    %c0_11 = arith.constant 0 : index
    %15 = vector.load %arg22[%c0_10, %c0_11] : memref<64x256xi32, #tpu.memory_space<vmem>>, vector<64x256xi32>
    %16 = vector.broadcast %14 : vector<1x256xi32> to vector<64x256xi32>
    %17 = arith.cmpi eq, %16, %15 : vector<64x256xi32>
    %18 = arith.extui %17 : vector<64x256xi1> to vector<64x256xi32>
    %19 = arith.sitofp %18 : vector<64x256xi32> to vector<64x256xf32>
    %20 = arith.truncf %19 : vector<64x256xf32> to vector<64x256xbf16>
    %c0_12 = arith.constant 0 : index
    %c0_13 = arith.constant 0 : index
    %21 = vector.load %arg18[%c0_12, %c0_13] : memref<64x128xf32, #tpu.memory_space<vmem>>, vector<64x128xf32>
    %22 = arith.truncf %13 : vector<256x128xf32> to vector<256x128xbf16>
    %cst_14 = arith.constant dense<0.000000e+00> : vector<64x128xf32>
    %23 = tpu.matmul %20, %22, %cst_14 {dimension_numbers = #tpu.dot_dimension_numbers<[1], [0], [0], [1], [0, 0, 1, 1], [], []>} : vector<64x256xbf16>, vector<256x128xbf16>, vector<64x128xf32> -> vector<64x128xf32>
    %24 = arith.addf %21, %23 : vector<64x128xf32>
    %c0_15 = arith.constant 0 : index
    %c0_16 = arith.constant 0 : index
    %25 = vector.load %arg18[%c0_15, %c0_16] : memref<64x128xf32, #tpu.memory_space<vmem>>, vector<64x128xf32>
    tpu.vector_store %arg18[%c0_15, %c0_16], %24 {strides = array<i32>} : memref<64x128xf32, #tpu.memory_space<vmem>>, vector<64x128xf32>,
    %c1_i32 = arith.constant 1 : i32
    %26 = arith.cmpi eq, %arg0, %c1_i32 : i32
    %27 = arith.extui %26 : i1 to i32
    %c0_i32_17 = arith.constant 0 : i32
    %28 = arith.cmpi ne, %27, %c0_i32_17 : i32
    scf.if %28 {
      %c0_18 = arith.constant 0 : index
      %c0_19 = arith.constant 0 : index
      %29 = vector.load %arg1[%c0_18, %c0_19] : memref<64x128xf32, #tpu.memory_space<vmem>>, vector<64x128xf32>
      %c0_20 = arith.constant 0 : index
      %c0_21 = arith.constant 0 : index
      %30 = vector.load %arg18[%c0_20, %c0_21] : memref<64x128xf32, #tpu.memory_space<vmem>>, vector<64x128xf32>
      %c0_22 = arith.constant 0 : index
      %c0_23 = arith.constant 0 : index
      %31 = vector.load %arg10[%c0_22, %c0_23] : memref<128x128xbf16, #tpu.memory_space<vmem>>, vector<128x128xbf16>
      %cst_24 = arith.constant dense<0.000000e+00> : vector<64x128xf32>
      %32 = tpu.matmul %30, %31, %cst_24 {dimension_numbers = #tpu.dot_dimension_numbers<[1], [0], [0], [1], [0, 0, 1, 1], [], []>} : vector<64x128xf32>, vector<128x128xbf16>, vector<64x128xf32> -> vector<64x128xf32>
      %33 = arith.negf %32 : vector<64x128xf32>
      %34 = math.exp %33 : vector<64x128xf32>
      %cst_25 = arith.constant 1.000000e+00 : f32
      %35 = vector.broadcast %cst_25 : f32 to vector<64x128xf32>
      %36 = arith.addf %35, %34 : vector<64x128xf32>
      %37 = arith.divf %35, %36 : vector<64x128xf32>
      %38 = arith.mulf %32, %37 : vector<64x128xf32>
      %c0_26 = arith.constant 0 : index
      %c0_27 = arith.constant 0 : index
      %39 = vector.load %arg20[%c0_26, %c0_27] : memref<64x128xf32, #tpu.memory_space<vmem>>, vector<64x128xf32>
      %40 = arith.addf %39, %38 : vector<64x128xf32>
      %c0_28 = arith.constant 0 : index
      %c0_29 = arith.constant 0 : index
      %c0_30 = arith.constant 0 : index
      %c0_31 = arith.constant 0 : index
      %41 = vector.load %arg11[%c0_28, %c0_29, %c0_30, %c0_31] : memref<1x2x128x128xbf16, #tpu.memory_space<vmem>>, vector<1x1x128x128xbf16>
      %42 = vector.shape_cast %41 : vector<1x1x128x128xbf16> to vector<128x128xbf16>
      %cst_32 = arith.constant dense<0.000000e+00> : vector<64x128xf32>
      %43 = tpu.matmul %40, %42, %cst_32 {dimension_numbers = #tpu.dot_dimension_numbers<[1], [0], [0], [1], [0, 0, 1, 1], [], []>} : vector<64x128xf32>, vector<128x128xbf16>, vector<64x128xf32> -> vector<64x128xf32>
      %c0_33 = arith.constant 0 : index
      %c0_34 = arith.constant 0 : index
      %c0_35 = arith.constant 0 : index
      %c0_36 = arith.constant 0 : index
      %44 = vector.load %arg12[%c0_33, %c0_34, %c0_35, %c0_36] : memref<1x2x1x128xf32, #tpu.memory_space<vmem>>, vector<1x1x1x128xf32>
      %45 = vector.shape_cast %44 : vector<1x1x1x128xf32> to vector<1x128xf32>
      %46 = vector.broadcast %45 : vector<1x128xf32> to vector<64x128xf32>
      %47 = arith.addf %43, %46 : vector<64x128xf32>
      %48 = arith.negf %47 : vector<64x128xf32>
      %49 = math.exp %48 : vector<64x128xf32>
      %cst_37 = arith.constant 1.000000e+00 : f32
      %50 = vector.broadcast %cst_37 : f32 to vector<64x128xf32>
      %51 = arith.addf %50, %49 : vector<64x128xf32>
      %52 = arith.divf %50, %51 : vector<64x128xf32>
      %53 = arith.mulf %47, %52 : vector<64x128xf32>
      %c0_38 = arith.constant 0 : index
      %c1 = arith.constant 1 : index
      %c0_39 = arith.constant 0 : index
      %c0_40 = arith.constant 0 : index
      %54 = vector.load %arg11[%c0_38, %c1, %c0_39, %c0_40] : memref<1x2x128x128xbf16, #tpu.memory_space<vmem>>, vector<1x1x128x128xbf16>
      %55 = vector.shape_cast %54 : vector<1x1x128x128xbf16> to vector<128x128xbf16>
      %cst_41 = arith.constant dense<0.000000e+00> : vector<64x128xf32>
      %56 = tpu.matmul %53, %55, %cst_41 {dimension_numbers = #tpu.dot_dimension_numbers<[1], [0], [0], [1], [0, 0, 1, 1], [], []>} : vector<64x128xf32>, vector<128x128xbf16>, vector<64x128xf32> -> vector<64x128xf32>
      %c0_42 = arith.constant 0 : index
      %c1_43 = arith.constant 1 : index
      %c0_44 = arith.constant 0 : index
      %c0_45 = arith.constant 0 : index
      %57 = vector.load %arg12[%c0_42, %c1_43, %c0_44, %c0_45] : memref<1x2x1x128xf32, #tpu.memory_space<vmem>>, vector<1x1x1x128xf32>
      %58 = vector.shape_cast %57 : vector<1x1x1x128xf32> to vector<1x128xf32>
      %59 = vector.broadcast %58 : vector<1x128xf32> to vector<64x128xf32>
      %60 = arith.addf %56, %59 : vector<64x128xf32>
      %61 = arith.negf %60 : vector<64x128xf32>
      %62 = math.exp %61 : vector<64x128xf32>
      %cst_46 = arith.constant 1.000000e+00 : f32
      %63 = vector.broadcast %cst_46 : f32 to vector<64x128xf32>
      %64 = arith.addf %63, %62 : vector<64x128xf32>
      %65 = arith.divf %63, %64 : vector<64x128xf32>
      %66 = arith.mulf %60, %65 : vector<64x128xf32>
      %67 = arith.addf %40, %66 : vector<64x128xf32>
      %c0_47 = arith.constant 0 : index
      %c0_48 = arith.constant 0 : index
      %68 = vector.load %arg13[%c0_47, %c0_48] : memref<128x128xbf16, #tpu.memory_space<vmem>>, vector<128x128xbf16>
      %cst_49 = arith.constant dense<0.000000e+00> : vector<64x128xf32>
      %69 = tpu.matmul %67, %68, %cst_49 {dimension_numbers = #tpu.dot_dimension_numbers<[1], [0], [0], [1], [0, 0, 1, 1], [], []>} : vector<64x128xf32>, vector<128x128xbf16>, vector<64x128xf32> -> vector<64x128xf32>
      %c0_50 = arith.constant 0 : index
      %c0_51 = arith.constant 0 : index
      %70 = vector.load %arg14[%c0_50, %c0_51] : memref<1x128xf32, #tpu.memory_space<vmem>>, vector<1x128xf32>
      %71 = vector.broadcast %70 : vector<1x128xf32> to vector<64x128xf32>
      %72 = arith.addf %69, %71 : vector<64x128xf32>
      %73 = arith.negf %72 : vector<64x128xf32>
      %74 = math.exp %73 : vector<64x128xf32>
      %cst_52 = arith.constant 1.000000e+00 : f32
      %75 = vector.broadcast %cst_52 : f32 to vector<64x128xf32>
      %76 = arith.addf %75, %74 : vector<64x128xf32>
      %77 = arith.divf %75, %76 : vector<64x128xf32>
      %78 = arith.mulf %72, %77 : vector<64x128xf32>
      %79 = arith.addf %78, %29 : vector<64x128xf32>
      %c0_53 = arith.constant 0 : index
      %c0_54 = arith.constant 0 : index
      %c0_55 = arith.constant 0 : index
      %c0_56 = arith.constant 0 : index
      %80 = vector.load %arg15[%c0_53, %c0_54, %c0_55, %c0_56] : memref<1x2x128x128xbf16, #tpu.memory_space<vmem>>, vector<1x1x128x128xbf16>
      %81 = vector.shape_cast %80 : vector<1x1x128x128xbf16> to vector<128x128xbf16>
      %cst_57 = arith.constant dense<0.000000e+00> : vector<64x128xf32>
      %82 = tpu.matmul %79, %81, %cst_57 {dimension_numbers = #tpu.dot_dimension_numbers<[1], [0], [0], [1], [0, 0, 1, 1], [], []>} : vector<64x128xf32>, vector<128x128xbf16>, vector<64x128xf32> -> vector<64x128xf32>
      %c0_58 = arith.constant 0 : index
      %c0_59 = arith.constant 0 : index
      %c0_60 = arith.constant 0 : index
      %c0_61 = arith.constant 0 : index
      %83 = vector.load %arg16[%c0_58, %c0_59, %c0_60, %c0_61] : memref<1x2x1x128xf32, #tpu.memory_space<vmem>>, vector<1x1x1x128xf32>
      %84 = vector.shape_cast %83 : vector<1x1x1x128xf32> to vector<1x128xf32>
      %85 = vector.broadcast %84 : vector<1x128xf32> to vector<64x128xf32>
      %86 = arith.addf %82, %85 : vector<64x128xf32>
      %87 = arith.negf %86 : vector<64x128xf32>
      %88 = math.exp %87 : vector<64x128xf32>
      %cst_62 = arith.constant 1.000000e+00 : f32
      %89 = vector.broadcast %cst_62 : f32 to vector<64x128xf32>
      %90 = arith.addf %89, %88 : vector<64x128xf32>
      %91 = arith.divf %89, %90 : vector<64x128xf32>
      %92 = arith.mulf %86, %91 : vector<64x128xf32>
      %c0_63 = arith.constant 0 : index
      %c1_64 = arith.constant 1 : index
      %c0_65 = arith.constant 0 : index
      %c0_66 = arith.constant 0 : index
      %93 = vector.load %arg15[%c0_63, %c1_64, %c0_65, %c0_66] : memref<1x2x128x128xbf16, #tpu.memory_space<vmem>>, vector<1x1x128x128xbf16>
      %94 = vector.shape_cast %93 : vector<1x1x128x128xbf16> to vector<128x128xbf16>
      %cst_67 = arith.constant dense<0.000000e+00> : vector<64x128xf32>
      %95 = tpu.matmul %92, %94, %cst_67 {dimension_numbers = #tpu.dot_dimension_numbers<[1], [0], [0], [1], [0, 0, 1, 1], [], []>} : vector<64x128xf32>, vector<128x128xbf16>, vector<64x128xf32> -> vector<64x128xf32>
      %c0_68 = arith.constant 0 : index
      %c1_69 = arith.constant 1 : index
      %c0_70 = arith.constant 0 : index
      %c0_71 = arith.constant 0 : index
      %96 = vector.load %arg16[%c0_68, %c1_69, %c0_70, %c0_71] : memref<1x2x1x128xf32, #tpu.memory_space<vmem>>, vector<1x1x1x128xf32>
      %97 = vector.shape_cast %96 : vector<1x1x1x128xf32> to vector<1x128xf32>
      %98 = vector.broadcast %97 : vector<1x128xf32> to vector<64x128xf32>
      %99 = arith.addf %95, %98 : vector<64x128xf32>
      %100 = arith.negf %99 : vector<64x128xf32>
      %101 = math.exp %100 : vector<64x128xf32>
      %cst_72 = arith.constant 1.000000e+00 : f32
      %102 = vector.broadcast %cst_72 : f32 to vector<64x128xf32>
      %103 = arith.addf %102, %101 : vector<64x128xf32>
      %104 = arith.divf %102, %103 : vector<64x128xf32>
      %105 = arith.mulf %99, %104 : vector<64x128xf32>
      %106 = arith.addf %79, %105 : vector<64x128xf32>
      %c0_73 = arith.constant 0 : index
      %c0_74 = arith.constant 0 : index
      %107 = vector.load %arg17[%c0_73, %c0_74] : memref<64x128xf32, #tpu.memory_space<vmem>>, vector<64x128xf32>
      tpu.vector_store %arg17[%c0_73, %c0_74], %106 {strides = array<i32>} : memref<64x128xf32, #tpu.memory_space<vmem>>, vector<64x128xf32>,
    } else {
    }
    return
  }
  func.func @transform_0(%arg0: i32) -> (i32, i32) {
    %c0_i32 = arith.constant 0 : i32
    %c0_i32_0 = arith.constant 0 : i32
    %c0_i32_1 = arith.constant 0 : i32
    return %c0_i32, %c0_i32_0 : i32, i32
  }
  func.func @transform_1(%arg0: i32) -> (i32, i32) {
    %c0_i32 = arith.constant 0 : i32
    %c0_i32_0 = arith.constant 0 : i32
    %c0_i32_1 = arith.constant 0 : i32
    return %c0_i32, %c0_i32_0 : i32, i32
  }
  func.func @transform_2(%arg0: i32) -> (i32, i32) {
    %c0_i32 = arith.constant 0 : i32
    %c0_i32_0 = arith.constant 0 : i32
    return %arg0, %c0_i32 : i32, i32
  }
  func.func @transform_3(%arg0: i32) -> (i32, i32) {
    %c0_i32 = arith.constant 0 : i32
    %c0_i32_0 = arith.constant 0 : i32
    return %arg0, %c0_i32 : i32, i32
  }
  func.func @transform_4(%arg0: i32) -> (i32, i32) {
    %c0_i32 = arith.constant 0 : i32
    %c0_i32_0 = arith.constant 0 : i32
    return %c0_i32, %arg0 : i32, i32
  }
  func.func @transform_5(%arg0: i32) -> (i32, i32) {
    %c0_i32 = arith.constant 0 : i32
    %c0_i32_0 = arith.constant 0 : i32
    %c0_i32_1 = arith.constant 0 : i32
    return %c0_i32, %c0_i32_0 : i32, i32
  }
  func.func @transform_6(%arg0: i32) -> (i32, i32) {
    %c0_i32 = arith.constant 0 : i32
    %c0_i32_0 = arith.constant 0 : i32
    %c0_i32_1 = arith.constant 0 : i32
    return %c0_i32, %c0_i32_0 : i32, i32
  }
  func.func @transform_7(%arg0: i32) -> (i32, i32) {
    %c0_i32 = arith.constant 0 : i32
    %c0_i32_0 = arith.constant 0 : i32
    %c0_i32_1 = arith.constant 0 : i32
    return %c0_i32, %c0_i32_0 : i32, i32
  }
  func.func @transform_8(%arg0: i32) -> (i32, i32) {
    %c0_i32 = arith.constant 0 : i32
    %c0_i32_0 = arith.constant 0 : i32
    %c0_i32_1 = arith.constant 0 : i32
    return %c0_i32, %c0_i32_0 : i32, i32
  }
  func.func @transform_9(%arg0: i32) -> (i32, i32) {
    %c0_i32 = arith.constant 0 : i32
    %c0_i32_0 = arith.constant 0 : i32
    %c0_i32_1 = arith.constant 0 : i32
    return %c0_i32, %c0_i32_0 : i32, i32
  }
  func.func @transform_10(%arg0: i32) -> (i32, i32, i32, i32) {
    %c0_i32 = arith.constant 0 : i32
    %c0_i32_0 = arith.constant 0 : i32
    %c0_i32_1 = arith.constant 0 : i32
    %c0_i32_2 = arith.constant 0 : i32
    %c0_i32_3 = arith.constant 0 : i32
    return %c0_i32, %c0_i32_0, %c0_i32_1, %c0_i32_2 : i32, i32, i32, i32
  }
  func.func @transform_11(%arg0: i32) -> (i32, i32, i32, i32) {
    %c0_i32 = arith.constant 0 : i32
    %c0_i32_0 = arith.constant 0 : i32
    %c0_i32_1 = arith.constant 0 : i32
    %c0_i32_2 = arith.constant 0 : i32
    %c0_i32_3 = arith.constant 0 : i32
    return %c0_i32, %c0_i32_0, %c0_i32_1, %c0_i32_2 : i32, i32, i32, i32
  }
  func.func @transform_12(%arg0: i32) -> (i32, i32) {
    %c0_i32 = arith.constant 0 : i32
    %c0_i32_0 = arith.constant 0 : i32
    %c0_i32_1 = arith.constant 0 : i32
    return %c0_i32, %c0_i32_0 : i32, i32
  }
  func.func @transform_13(%arg0: i32) -> (i32, i32) {
    %c0_i32 = arith.constant 0 : i32
    %c0_i32_0 = arith.constant 0 : i32
    %c0_i32_1 = arith.constant 0 : i32
    return %c0_i32, %c0_i32_0 : i32, i32
  }
  func.func @transform_14(%arg0: i32) -> (i32, i32, i32, i32) {
    %c0_i32 = arith.constant 0 : i32
    %c0_i32_0 = arith.constant 0 : i32
    %c0_i32_1 = arith.constant 0 : i32
    %c0_i32_2 = arith.constant 0 : i32
    %c0_i32_3 = arith.constant 0 : i32
    return %c0_i32, %c0_i32_0, %c0_i32_1, %c0_i32_2 : i32, i32, i32, i32
  }
  func.func @transform_15(%arg0: i32) -> (i32, i32, i32, i32) {
    %c0_i32 = arith.constant 0 : i32
    %c0_i32_0 = arith.constant 0 : i32
    %c0_i32_1 = arith.constant 0 : i32
    %c0_i32_2 = arith.constant 0 : i32
    %c0_i32_3 = arith.constant 0 : i32
    return %c0_i32, %c0_i32_0, %c0_i32_1, %c0_i32_2 : i32, i32, i32, i32
  }
  func.func @transform_16(%arg0: i32) -> (i32, i32) {
    %c0_i32 = arith.constant 0 : i32
    %c0_i32_0 = arith.constant 0 : i32
    %c0_i32_1 = arith.constant 0 : i32
    return %c0_i32, %c0_i32_0 : i32, i32
  }
}

</mosaic_0001>

<llo_original>
// kernel: tpu_custom_call.1
$region0: #{tpu_custom_call.1}
  #allocation0 [shape = 'u32[]', space=smem, size = 0x4, offset = 0x4, fixed_abs, tag = 'smem constant byte address 0x4 - core index']
  #allocation1 [shape = 'u32[144,128]{1,0:T(1,128)}', space=vmem, size = 0x12000, scoped, tag = 'internal scratch']
  #allocation2 [shape = 'f32[64,128]{1,0:T(8,128)}', space=vmem, size = 0x8000, scoped, tag = 'scratch operand']
  #allocation3 [shape = 'bf16[64,128]{1,0:T(16,128)(2,1)}', space=vmem, size = 0x4000, scoped, tag = 'scratch operand']
  #allocation4 [shape = 'f32[64,128]{1,0:T(8,128)}', space=vmem, size = 0x8000, scoped, tag = 'scratch operand']
  #allocation5 [shape = 's32[256,64]{1,0:T(8,128)}', space=vmem, size = 0x20000, scoped, tag = 'scratch operand']
  #allocation6 [shape = 's32[64,256]{1,0:T(8,128)}', space=vmem, size = 0x10000, scoped, tag = 'scratch operand']
  %s0 = inlined_call_operand.hbm [shape: f32[64,128], index: 0, kind: input, shape index: {}]
  %s1 = inlined_call_operand.vmem [shape: f32[64,8], index: 1, kind: input, shape index: {}]
  %s2 = inlined_call_operand.vmem [shape: f32[512,128], index: 2, kind: input, shape index: {}]
  %s3 = inlined_call_operand.vmem [shape: s32[512,1], index: 3, kind: input, shape index: {}]
  %s4 = inlined_call_operand.hbm [shape: s32[1,512], index: 4, kind: input, shape index: {}]
  %s5 = inlined_call_operand.hbm [shape: bf16[128,256], index: 5, kind: input, shape index: {}]
  %s6 = inlined_call_operand.hbm [shape: f32[1,256], index: 6, kind: input, shape index: {}]
  %s7 = inlined_call_operand.hbm [shape: f32[8,128], index: 7, kind: input, shape index: {}]
  %s8 = inlined_call_operand.hbm [shape: bf16[128,128], index: 8, kind: input, shape index: {}]
  %s9 = inlined_call_operand.hbm [shape: bf16[128,128], index: 9, kind: input, shape index: {}]
  %s10 = inlined_call_operand.hbm [shape: bf16[1,2,128,128], index: 10, kind: input, shape index: {}]
  %s11 = inlined_call_operand.hbm [shape: f32[1,2,1,128], index: 11, kind: input, shape index: {}]
  %s12 = inlined_call_operand.hbm [shape: bf16[128,128], index: 12, kind: input, shape index: {}]
  %s13 = inlined_call_operand.hbm [shape: f32[1,128], index: 13, kind: input, shape index: {}]
  %s14 = inlined_call_operand.vmem [shape: bf16[1,2,128,128], index: 14, kind: input, shape index: {}]
  %s15 = inlined_call_operand.hbm [shape: f32[1,2,1,128], index: 15, kind: input, shape index: {}]
  %s16 = inlined_call_operand.hbm [shape: f32[64,128], index: 16, kind: output, shape index: {}]
  %s17 = sld [smem:[#allocation0]]
  $region153: #{tpu_custom_call.1} parent=0
    _
  %s19 = ssub.s32 1, %s17
  %s20 = scalar_select 0, %s19, %s17
  $region1: #{tpu_custom_call.1} parent=0
    #allocation7 [shape = 'u8[32768]{0}', space=vmem, size = 0x8000, scoped, tag = 'input window, operand 0, single buffered']
    #allocation8 [shape = 's32[2]{0}', space=sflag, size = 0x8, scoped, tag = 'scoped memory for tpu_custom_call.1']
    #allocation9 [shape = 's32[2]{0}', space=sflag, size = 0x8, scoped, tag = 'scoped memory for tpu_custom_call.1']
    #allocation10 [shape = 'u8[2048]{0}', space=vmem, size = 0x800, scoped, tag = 'input window, operand 4']
    #allocation11 [shape = 's32[2]{0}', space=sflag, size = 0x8, scoped, tag = 'scoped memory for tpu_custom_call.1']
    #allocation12 [shape = 'u8[65536]{0}', space=vmem, size = 0x10000, scoped, tag = 'input window, operand 5, single buffered']
    #allocation13 [shape = 'u8[1024]{0}', space=vmem, size = 0x400, scoped, tag = 'input window, operand 6, single buffered']
    #allocation14 [shape = 's32[1]{0}', space=sflag, size = 0x4, scoped, tag = 'scoped memory for tpu_custom_call.1']
    #allocation15 [shape = 'u8[4096]{0}', space=vmem, size = 0x1000, scoped, tag = 'input window, operand 7, single buffered']
    #allocation16 [shape = 'u8[32768]{0}', space=vmem, size = 0x8000, scoped, tag = 'input window, operand 8, single buffered']
    #allocation17 [shape = 's32[1]{0}', space=sflag, size = 0x4, scoped, tag = 'scoped memory for tpu_custom_call.1']
    #allocation18 [shape = 'u8[32768]{0}', space=vmem, size = 0x8000, scoped, tag = 'input window, operand 9, single buffered']
    #allocation19 [shape = 'u8[65536]{0}', space=vmem, size = 0x10000, scoped, tag = 'input window, operand 10, single buffered']
    #allocation20 [shape = 's32[1]{0}', space=sflag, size = 0x4, scoped, tag = 'scoped memory for tpu_custom_call.1']
    #allocation21 [shape = 'u8[1024]{0}', space=vmem, size = 0x400, scoped, tag = 'input window, operand 11, single buffered']
    #allocation22 [shape = 'u8[32768]{0}', space=vmem, size = 0x8000, scoped, tag = 'input window, operand 12, single buffered']
    #allocation23 [shape = 's32[1]{0}', space=sflag, size = 0x4, scoped, tag = 'scoped memory for tpu_custom_call.1']
    #allocation24 [shape = 'u8[512]{0}', space=vmem, size = 0x400, scoped, tag = 'input window, operand 13, single buffered']
    #allocation25 [shape = 'u8[1024]{0}', space=vmem, size = 0x400, scoped, tag = 'input window, operand 15, single buffered']
    #allocation26 [shape = 's32[1]{0}', space=sflag, size = 0x4, scoped, tag = 'scoped memory for tpu_custom_call.1']
    #allocation27 [shape = 'u8[32768]{0}', space=vmem, size = 0x8000, scoped, tag = 'output window, operand 0, single buffered']
    %21 = vsyncpa [#allocation8], 0
    %22 = vsyncpa [#allocation11], 0
    %s23 = scalar_lea.sflag [#allocation11], 1
    %24 = vsyncpa %s23, 0
    %25 = vsyncpa [#allocation14], 0
    %26 = vsyncpa [#allocation17], 0
    %27 = vsyncpa [#allocation20], 0
    %28 = vsyncpa [#allocation23], 0
    %29 = vsyncpa [#allocation26], 0
    %30 = vsyncpa [#allocation9], 0
    loop: start=0, step=1, limit=4
    $region2: #{tpu_custom_call.1} parent=1 // loop_pre_header
      _
    $region3: #{tpu_custom_call.1} parent=1 // loop_header
      %s32 = sphi 0, %s36
      %p33 = scmp.ge.s32.totalorder %s32, 4
      %s40 = sphi 0, %s40
      %s42 = sphi 0, %s40
      %s43 = sphi 0, %s42
      %s57 = sphi 0, %s43
      %s61 = sphi 0, %s61
      %s63 = sphi 0, %s61
      %s64 = sphi 0, %s63
      %s78 = sphi 0, %s64
      %s84 = sphi 0, %s86
      %s87 = sphi 0, %s84
      %s88 = sphi 0, %s87
      %s104 = sphi 0, %s88
      %s110 = sphi 0, %s112
      %s113 = sphi 0, %s110
      %s114 = sphi 0, %s113
      %s130 = sphi 0, %s114
      %s136 = sphi 0, %s138
      %s139 = sphi 0, %s136
      %s140 = sphi 0, %s139
      %s156 = sphi 0, %s140
      %s160 = sphi 0, %s160
      %s162 = sphi 0, %s160
      %s163 = sphi 0, %s162
      %s177 = sphi 0, %s163
      %s181 = sphi 0, %s181
      %s183 = sphi 0, %s181
      %s184 = sphi 0, %s183
      %s198 = sphi 0, %s184
      %s202 = sphi 0, %s202
      %s204 = sphi 0, %s202
      %s205 = sphi 0, %s204
      %s219 = sphi 0, %s205
      %s223 = sphi 0, %s223
      %s225 = sphi 0, %s223
      %s226 = sphi 0, %s225
      %s240 = sphi 0, %s226
      %s244 = sphi 0, %s244
      %s246 = sphi 0, %s244
      %s247 = sphi 0, %s246
      %s261 = sphi 0, %s247
      %s265 = sphi 0, %s265
      %s267 = sphi 0, %s265
      %s268 = sphi 0, %s267
      %s282 = sphi 0, %s268
      %s286 = sphi 0, %s286
      %s288 = sphi 0, %s286
      %s289 = sphi 0, %s288
      %s303 = sphi 0, %s289
      %s307 = sphi 0, %s307
      %s309 = sphi 0, %s307
      %s310 = sphi 0, %s309
      %s324 = sphi 0, %s310
      %s328 = sphi 0, %s328
      %s330 = sphi 0, %s328
      %s331 = sphi 0, %s330
      %s345 = sphi 0, %s331
      %s349 = sphi 0, %s349
      %s351 = sphi 0, %s349
      %s352 = sphi 0, %s351
      %s366 = sphi 0, %s352
      %s370 = sphi 0, %s370
      %s372 = sphi 0, %s370
      %s373 = sphi 0, %s372
      %s387 = sphi 0, %s373
      %s391 = sphi 0, %s391
      %s393 = sphi 0, %s391
      %s394 = sphi 0, %s393
      %s408 = sphi 0, %s394
    $region4: #{tpu_custom_call.1} parent=1 // loop_header_branch
      %35 = sbr.rel (%p33) target = $region8
    $region5: #{tpu_custom_call.1} parent=1 // loop_body
      %s37 = ssub.s32 %s32, 1
      %s38 = ssub.s32 %s32, 2
      %s39 = sadd.s32 %s32, 1
      %s41 = sadd.s32 %s40, 1
      %p44 = scmp.eq.s32.totalorder %s32, 1
      %p45 = scmp.ne.s32.totalorder %s40, %s42
      %p46 = scmp.eq.s32.totalorder %s32, 0
      %p47 = por %p45, %p46
      %p48 = scmp.ne.s32.totalorder %s40, %s42
      %p49 = scmp.eq.s32.totalorder %s37, 1
      %p50 = por %p48, %p49
      %p51 = scmp.ne.s32.totalorder %s42, %s43
      %p52 = scmp.eq.s32.totalorder %s37, 0
      %p53 = por %p51, %p52
      %p54 = scmp.ne.s32.totalorder %s42, %s43
      %p55 = scmp.eq.s32.totalorder %s38, 1
      %p56 = por %p54, %p55
      %p58 = scmp.ne.s32.totalorder %s43, %s57
      %p59 = scmp.eq.s32.totalorder %s38, 0
      %p60 = por %p58, %p59
      %s62 = sadd.s32 %s61, 1
      %p65 = scmp.eq.s32.totalorder %s32, 1
      %p66 = scmp.ne.s32.totalorder %s61, %s63
      %p67 = scmp.eq.s32.totalorder %s32, 0
      %p68 = por %p66, %p67
      %p69 = scmp.ne.s32.totalorder %s61, %s63
      %p70 = scmp.eq.s32.totalorder %s37, 1
      %p71 = por %p69, %p70
      %p72 = scmp.ne.s32.totalorder %s63, %s64
      %p73 = scmp.eq.s32.totalorder %s37, 0
      %p74 = por %p72, %p73
      %p75 = scmp.ne.s32.totalorder %s63, %s64
      %p76 = scmp.eq.s32.totalorder %s38, 1
      %p77 = por %p75, %p76
      %p79 = scmp.ne.s32.totalorder %s64, %s78
      %p80 = scmp.eq.s32.totalorder %s38, 0
      %p81 = por %p79, %p80
      %s82 = ssub.s32 %s32, %s39
      %p83 = scmp.eq.s32.totalorder %s82, 0
      %s85 = sadd.s32 %s84, 1
      %s86 = scalar_select %p83, %s84, %s85
      %p89 = pneg %p83
      %p90 = scmp.eq.s32.totalorder %s32, 1
      %p91 = por %p89, %p90
      %p92 = scmp.ne.s32.totalorder %s84, %s87
      %p93 = scmp.eq.s32.totalorder %s32, 0
      %p94 = por %p92, %p93
      %p95 = scmp.ne.s32.totalorder %s84, %s87
      %p96 = scmp.eq.s32.totalorder %s37, 1
      %p97 = por %p95, %p96
      %p98 = scmp.ne.s32.totalorder %s87, %s88
      %p99 = scmp.eq.s32.totalorder %s37, 0
      %p100 = por %p98, %p99
      %p101 = scmp.ne.s32.totalorder %s87, %s88
      %p102 = scmp.eq.s32.totalorder %s38, 1
      %p103 = por %p101, %p102
      %p105 = scmp.ne.s32.totalorder %s88, %s104
      %p106 = scmp.eq.s32.totalorder %s38, 0
      %p107 = por %p105, %p106
      %s108 = ssub.s32 %s32, %s39
      %p109 = scmp.eq.s32.totalorder %s108, 0
      %s111 = sadd.s32 %s110, 1
      %s112 = scalar_select %p109, %s110, %s111
      %p115 = pneg %p109
      %p116 = scmp.eq.s32.totalorder %s32, 1
      %p117 = por %p115, %p116
      %p118 = scmp.ne.s32.totalorder %s110, %s113
      %p119 = scmp.eq.s32.totalorder %s32, 0
      %p120 = por %p118, %p119
      %p121 = scmp.ne.s32.totalorder %s110, %s113
      %p122 = scmp.eq.s32.totalorder %s37, 1
      %p123 = por %p121, %p122
      %p124 = scmp.ne.s32.totalorder %s113, %s114
      %p125 = scmp.eq.s32.totalorder %s37, 0
      %p126 = por %p124, %p125
      %p127 = scmp.ne.s32.totalorder %s113, %s114
      %p128 = scmp.eq.s32.totalorder %s38, 1
      %p129 = por %p127, %p128
      %p131 = scmp.ne.s32.totalorder %s114, %s130
      %p132 = scmp.eq.s32.totalorder %s38, 0
      %p133 = por %p131, %p132
      %s134 = ssub.s32 %s32, %s39
      %p135 = scmp.eq.s32.totalorder %s134, 0
      %s137 = sadd.s32 %s136, 1
      %s138 = scalar_select %p135, %s136, %s137
      %p141 = pneg %p135
      %p142 = scmp.eq.s32.totalorder %s32, 1
      %p143 = por %p141, %p142
      %p144 = scmp.ne.s32.totalorder %s136, %s139
      %p145 = scmp.eq.s32.totalorder %s32, 0
      %p146 = por %p144, %p145
      %p147 = scmp.ne.s32.totalorder %s136, %s139
      %p148 = scmp.eq.s32.totalorder %s37, 1
      %p149 = por %p147, %p148
      %p150 = scmp.ne.s32.totalorder %s139, %s140
      %p151 = scmp.eq.s32.totalorder %s37, 0
      %p152 = por %p150, %p151
      %p153 = scmp.ne.s32.totalorder %s139, %s140
      %p154 = scmp.eq.s32.totalorder %s38, 1
      %p155 = por %p153, %p154
      %p157 = scmp.ne.s32.totalorder %s140, %s156
      %p158 = scmp.eq.s32.totalorder %s38, 0
      %p159 = por %p157, %p158
      %s161 = sadd.s32 %s160, 1
      %p164 = scmp.eq.s32.totalorder %s32, 1
      %p165 = scmp.ne.s32.totalorder %s160, %s162
      %p166 = scmp.eq.s32.totalorder %s32, 0
      %p167 = por %p165, %p166
      %p168 = scmp.ne.s32.totalorder %s160, %s162
      %p169 = scmp.eq.s32.totalorder %s37, 1
      %p170 = por %p168, %p169
      %p171 = scmp.ne.s32.totalorder %s162, %s163
      %p172 = scmp.eq.s32.totalorder %s37, 0
      %p173 = por %p171, %p172
      %p174 = scmp.ne.s32.totalorder %s162, %s163
      %p175 = scmp.eq.s32.totalorder %s38, 1
      %p176 = por %p174, %p175
      %p178 = scmp.ne.s32.totalorder %s163, %s177
      %p179 = scmp.eq.s32.totalorder %s38, 0
      %p180 = por %p178, %p179
      %s182 = sadd.s32 %s181, 1
      %p185 = scmp.eq.s32.totalorder %s32, 1
      %p186 = scmp.ne.s32.totalorder %s181, %s183
      %p187 = scmp.eq.s32.totalorder %s32, 0
      %p188 = por %p186, %p187
      %p189 = scmp.ne.s32.totalorder %s181, %s183
      %p190 = scmp.eq.s32.totalorder %s37, 1
      %p191 = por %p189, %p190
      %p192 = scmp.ne.s32.totalorder %s183, %s184
      %p193 = scmp.eq.s32.totalorder %s37, 0
      %p194 = por %p192, %p193
      %p195 = scmp.ne.s32.totalorder %s183, %s184
      %p196 = scmp.eq.s32.totalorder %s38, 1
      %p197 = por %p195, %p196
      %p199 = scmp.ne.s32.totalorder %s184, %s198
      %p200 = scmp.eq.s32.totalorder %s38, 0
      %p201 = por %p199, %p200
      %s203 = sadd.s32 %s202, 1
      %p206 = scmp.eq.s32.totalorder %s32, 1
      %p207 = scmp.ne.s32.totalorder %s202, %s204
      %p208 = scmp.eq.s32.totalorder %s32, 0
      %p209 = por %p207, %p208
      %p210 = scmp.ne.s32.totalorder %s202, %s204
      %p211 = scmp.eq.s32.totalorder %s37, 1
      %p212 = por %p210, %p211
      %p213 = scmp.ne.s32.totalorder %s204, %s205
      %p214 = scmp.eq.s32.totalorder %s37, 0
      %p215 = por %p213, %p214
      %p216 = scmp.ne.s32.totalorder %s204, %s205
      %p217 = scmp.eq.s32.totalorder %s38, 1
      %p218 = por %p216, %p217
      %p220 = scmp.ne.s32.totalorder %s205, %s219
      %p221 = scmp.eq.s32.totalorder %s38, 0
      %p222 = por %p220, %p221
      %s224 = sadd.s32 %s223, 1
      %p227 = scmp.eq.s32.totalorder %s32, 1
      %p228 = scmp.ne.s32.totalorder %s223, %s225
      %p229 = scmp.eq.s32.totalorder %s32, 0
      %p230 = por %p228, %p229
      %p231 = scmp.ne.s32.totalorder %s223, %s225
      %p232 = scmp.eq.s32.totalorder %s37, 1
      %p233 = por %p231, %p232
      %p234 = scmp.ne.s32.totalorder %s225, %s226
      %p235 = scmp.eq.s32.totalorder %s37, 0
      %p236 = por %p234, %p235
      %p237 = scmp.ne.s32.totalorder %s225, %s226
      %p238 = scmp.eq.s32.totalorder %s38, 1
      %p239 = por %p237, %p238
      %p241 = scmp.ne.s32.totalorder %s226, %s240
      %p242 = scmp.eq.s32.totalorder %s38, 0
      %p243 = por %p241, %p242
      %s245 = sadd.s32 %s244, 1
      %p248 = scmp.eq.s32.totalorder %s32, 1
      %p249 = scmp.ne.s32.totalorder %s244, %s246
      %p250 = scmp.eq.s32.totalorder %s32, 0
      %p251 = por %p249, %p250
      %p252 = scmp.ne.s32.totalorder %s244, %s246
      %p253 = scmp.eq.s32.totalorder %s37, 1
      %p254 = por %p252, %p253
      %p255 = scmp.ne.s32.totalorder %s246, %s247
      %p256 = scmp.eq.s32.totalorder %s37, 0
      %p257 = por %p255, %p256
      %p258 = scmp.ne.s32.totalorder %s246, %s247
      %p259 = scmp.eq.s32.totalorder %s38, 1
      %p260 = por %p258, %p259
      %p262 = scmp.ne.s32.totalorder %s247, %s261
      %p263 = scmp.eq.s32.totalorder %s38, 0
      %p264 = por %p262, %p263
      %s266 = sadd.s32 %s265, 1
      %p269 = scmp.eq.s32.totalorder %s32, 1
      %p270 = scmp.ne.s32.totalorder %s265, %s267
      %p271 = scmp.eq.s32.totalorder %s32, 0
      %p272 = por %p270, %p271
      %p273 = scmp.ne.s32.totalorder %s265, %s267
      %p274 = scmp.eq.s32.totalorder %s37, 1
      %p275 = por %p273, %p274
      %p276 = scmp.ne.s32.totalorder %s267, %s268
      %p277 = scmp.eq.s32.totalorder %s37, 0
      %p278 = por %p276, %p277
      %p279 = scmp.ne.s32.totalorder %s267, %s268
      %p280 = scmp.eq.s32.totalorder %s38, 1
      %p281 = por %p279, %p280
      %p283 = scmp.ne.s32.totalorder %s268, %s282
      %p284 = scmp.eq.s32.totalorder %s38, 0
      %p285 = por %p283, %p284
      %s287 = sadd.s32 %s286, 1
      %p290 = scmp.eq.s32.totalorder %s32, 1
      %p291 = scmp.ne.s32.totalorder %s286, %s288
      %p292 = scmp.eq.s32.totalorder %s32, 0
      %p293 = por %p291, %p292
      %p294 = scmp.ne.s32.totalorder %s286, %s288
      %p295 = scmp.eq.s32.totalorder %s37, 1
      %p296 = por %p294, %p295
      %p297 = scmp.ne.s32.totalorder %s288, %s289
      %p298 = scmp.eq.s32.totalorder %s37, 0
      %p299 = por %p297, %p298
      %p300 = scmp.ne.s32.totalorder %s288, %s289
      %p301 = scmp.eq.s32.totalorder %s38, 1
      %p302 = por %p300, %p301
      %p304 = scmp.ne.s32.totalorder %s289, %s303
      %p305 = scmp.eq.s32.totalorder %s38, 0
      %p306 = por %p304, %p305
      %s308 = sadd.s32 %s307, 1
      %p311 = scmp.eq.s32.totalorder %s32, 1
      %p312 = scmp.ne.s32.totalorder %s307, %s309
      %p313 = scmp.eq.s32.totalorder %s32, 0
      %p314 = por %p312, %p313
      %p315 = scmp.ne.s32.totalorder %s307, %s309
      %p316 = scmp.eq.s32.totalorder %s37, 1
      %p317 = por %p315, %p316
      %p318 = scmp.ne.s32.totalorder %s309, %s310
      %p319 = scmp.eq.s32.totalorder %s37, 0
      %p320 = por %p318, %p319
      %p321 = scmp.ne.s32.totalorder %s309, %s310
      %p322 = scmp.eq.s32.totalorder %s38, 1
      %p323 = por %p321, %p322
      %p325 = scmp.ne.s32.totalorder %s310, %s324
      %p326 = scmp.eq.s32.totalorder %s38, 0
      %p327 = por %p325, %p326
      %s329 = sadd.s32 %s328, 1
      %p332 = scmp.eq.s32.totalorder %s32, 1
      %p333 = scmp.ne.s32.totalorder %s328, %s330
      %p334 = scmp.eq.s32.totalorder %s32, 0
      %p335 = por %p333, %p334
      %p336 = scmp.ne.s32.totalorder %s328, %s330
      %p337 = scmp.eq.s32.totalorder %s37, 1
      %p338 = por %p336, %p337
      %p339 = scmp.ne.s32.totalorder %s330, %s331
      %p340 = scmp.eq.s32.totalorder %s37, 0
      %p341 = por %p339, %p340
      %p342 = scmp.ne.s32.totalorder %s330, %s331
      %p343 = scmp.eq.s32.totalorder %s38, 1
      %p344 = por %p342, %p343
      %p346 = scmp.ne.s32.totalorder %s331, %s345
      %p347 = scmp.eq.s32.totalorder %s38, 0
      %p348 = por %p346, %p347
      %s350 = sadd.s32 %s349, 1
      %p353 = scmp.eq.s32.totalorder %s32, 1
      %p354 = scmp.ne.s32.totalorder %s349, %s351
      %p355 = scmp.eq.s32.totalorder %s32, 0
      %p356 = por %p354, %p355
      %p357 = scmp.ne.s32.totalorder %s349, %s351
      %p358 = scmp.eq.s32.totalorder %s37, 1
      %p359 = por %p357, %p358
      %p360 = scmp.ne.s32.totalorder %s351, %s352
      %p361 = scmp.eq.s32.totalorder %s37, 0
      %p362 = por %p360, %p361
      %p363 = scmp.ne.s32.totalorder %s351, %s352
      %p364 = scmp.eq.s32.totalorder %s38, 1
      %p365 = por %p363, %p364
      %p367 = scmp.ne.s32.totalorder %s352, %s366
      %p368 = scmp.eq.s32.totalorder %s38, 0
      %p369 = por %p367, %p368
      %s371 = sadd.s32 %s370, 1
      %p374 = scmp.eq.s32.totalorder %s32, 1
      %p375 = scmp.ne.s32.totalorder %s370, %s372
      %p376 = scmp.eq.s32.totalorder %s32, 0
      %p377 = por %p375, %p376
      %p378 = scmp.ne.s32.totalorder %s370, %s372
      %p379 = scmp.eq.s32.totalorder %s37, 1
      %p380 = por %p378, %p379
      %p381 = scmp.ne.s32.totalorder %s372, %s373
      %p382 = scmp.eq.s32.totalorder %s37, 0
      %p383 = por %p381, %p382
      %p384 = scmp.ne.s32.totalorder %s372, %s373
      %p385 = scmp.eq.s32.totalorder %s38, 1
      %p386 = por %p384, %p385
      %p388 = scmp.ne.s32.totalorder %s373, %s387
      %p389 = scmp.eq.s32.totalorder %s38, 0
      %p390 = por %p388, %p389
      %s392 = sadd.s32 %s391, 1
      %p395 = scmp.eq.s32.totalorder %s32, 1
      %p396 = scmp.ne.s32.totalorder %s391, %s393
      %p397 = scmp.eq.s32.totalorder %s32, 0
      %p398 = por %p396, %p397
      %p399 = scmp.ne.s32.totalorder %s391, %s393
      %p400 = scmp.eq.s32.totalorder %s37, 1
      %p401 = por %p399, %p400
      %p402 = scmp.ne.s32.totalorder %s393, %s394
      %p403 = scmp.eq.s32.totalorder %s37, 0
      %p404 = por %p402, %p403
      %p405 = scmp.ne.s32.totalorder %s393, %s394
      %p406 = scmp.eq.s32.totalorder %s38, 1
      %p407 = por %p405, %p406
      %p409 = scmp.ne.s32.totalorder %s394, %s408
      %p410 = scmp.eq.s32.totalorder %s38, 0
      %p411 = por %p409, %p410
      %p412 = scmp.le.s32.totalorder 1, %s32
      %p413 = scmp.lt.s32.totalorder %s32, 3
      %p414 = pnand %p412, %p413
      %p415 = pneg %p414
      // Predicated region
      $region9: #{tpu_custom_call.1} parent=5 // pred_check
        _
      $region10: #{tpu_custom_call.1} parent=5 // pred_check_branch
        %417 = sbr.rel (%p414) target = $region12
      $region11: #{tpu_custom_call.1} parent=5 // pred_region
        %s418 = ssub.s32 %s32, 1
        // Predicated region
        $region13: #{tpu_custom_call.1} parent=11 // pred_check
          %p419 = pneg %p53
        $region14: #{tpu_custom_call.1} parent=11 // pred_check_branch
          %421 = sbr.rel (%p419) target = $region16
        $region15: #{tpu_custom_call.1} parent=11 // pred_region
          %s423 = ssub.s32 1024, 1024
          %424 = vsyncadd [#allocation8], %s423
          %s425 = sshll.u32 [#allocation7], 4
          %s426 = int_to_ptr.vmem [resolvable:$true] %s425
          %431 = dma.hbm_to_vmem [thread:$0]  %s0, 1024, %s426, [#allocation8], 128, 128, 8
        $region16: #{tpu_custom_call.1} parent=11 // pred_fallthru
          _
        // Predicated region
        $region17: #{tpu_custom_call.1} parent=11 // pred_check
          %p432 = pneg %p74
        $region18: #{tpu_custom_call.1} parent=11 // pred_check_branch
          %434 = sbr.rel (%p432) target = $region20
        $region19: #{tpu_custom_call.1} parent=11 // pred_region
          _
        $region20: #{tpu_custom_call.1} parent=11 // pred_fallthru
          _
        // Predicated region
        $region21: #{tpu_custom_call.1} parent=11 // pred_check
          %p435 = pneg %p173
        $region22: #{tpu_custom_call.1} parent=11 // pred_check_branch
          %437 = sbr.rel (%p435) target = $region24
        $region23: #{tpu_custom_call.1} parent=11 // pred_region
          %s439 = ssub.s32 2048, 2048
          %440 = vsyncadd [#allocation11], %s439
          %s441 = sshll.u32 [#allocation12], 4
          %s442 = int_to_ptr.vmem [resolvable:$true] %s441
          %447 = dma.hbm_to_vmem [thread:$0]  %s5, 2048, %s442, [#allocation11], 128, 128, 8
        $region24: #{tpu_custom_call.1} parent=11 // pred_fallthru
          _
        // Predicated region
        $region25: #{tpu_custom_call.1} parent=11 // pred_check
          %p448 = pneg %p194
        $region26: #{tpu_custom_call.1} parent=11 // pred_check_branch
          %450 = sbr.rel (%p448) target = $region28
        $region27: #{tpu_custom_call.1} parent=11 // pred_region
          %s452 = ssub.s32 32, 32
          %453 = vsyncadd [#allocation14], %s452
          %s455 = sshll.u32 [#allocation13], 4
          %s456 = int_to_ptr.vmem [resolvable:$true] %s455
          %458 = dma.hbm_to_vmem [thread:$0]  %s6, 32, %s456, [#allocation14]
        $region28: #{tpu_custom_call.1} parent=11 // pred_fallthru
          _
        // Predicated region
        $region29: #{tpu_custom_call.1} parent=11 // pred_check
          %p459 = pneg %p215
        $region30: #{tpu_custom_call.1} parent=11 // pred_check_branch
          %461 = sbr.rel (%p459) target = $region32
        $region31: #{tpu_custom_call.1} parent=11 // pred_region
          %s463 = ssub.s32 128, 128
          %464 = vsyncadd [#allocation14], %s463
          %s466 = sshll.u32 [#allocation15], 4
          %s467 = int_to_ptr.vmem [resolvable:$true] %s466
          %469 = dma.hbm_to_vmem [thread:$0]  %s7, 128, %s467, [#allocation14]
        $region32: #{tpu_custom_call.1} parent=11 // pred_fallthru
          _
        // Predicated region
        $region33: #{tpu_custom_call.1} parent=11 // pred_check
          %p470 = pneg %p236
        $region34: #{tpu_custom_call.1} parent=11 // pred_check_branch
          %472 = sbr.rel (%p470) target = $region36
        $region35: #{tpu_custom_call.1} parent=11 // pred_region
          %s474 = ssub.s32 1024, 1024
          %475 = vsyncadd [#allocation17], %s474
          %s476 = sshll.u32 [#allocation16], 4
          %s477 = int_to_ptr.vmem [resolvable:$true] %s476
          %482 = dma.hbm_to_vmem [thread:$0]  %s8, 1024, %s477, [#allocation17], 64, 64, 4
        $region36: #{tpu_custom_call.1} parent=11 // pred_fallthru
          _
        // Predicated region
        $region37: #{tpu_custom_call.1} parent=11 // pred_check
          %p483 = pneg %p257
        $region38: #{tpu_custom_call.1} parent=11 // pred_check_branch
          %485 = sbr.rel (%p483) target = $region40
        $region39: #{tpu_custom_call.1} parent=11 // pred_region
          %s487 = ssub.s32 1024, 1024
          %488 = vsyncadd [#allocation17], %s487
          %s489 = sshll.u32 [#allocation18], 4
          %s490 = int_to_ptr.vmem [resolvable:$true] %s489
          %495 = dma.hbm_to_vmem [thread:$0]  %s9, 1024, %s490, [#allocation17], 64, 64, 4
        $region40: #{tpu_custom_call.1} parent=11 // pred_fallthru
          _
        // Predicated region
        $region41: #{tpu_custom_call.1} parent=11 // pred_check
          %p496 = pneg %p278
        $region42: #{tpu_custom_call.1} parent=11 // pred_check_branch
          %498 = sbr.rel (%p496) target = $region44
        $region43: #{tpu_custom_call.1} parent=11 // pred_region
          %s500 = ssub.s32 2048, 2048
          %501 = vsyncadd [#allocation20], %s500
          %s502 = sshll.u32 [#allocation19], 4
          %s503 = int_to_ptr.vmem [resolvable:$true] %s502
          %508 = dma.hbm_to_vmem [thread:$0]  %s10, 2048, %s503, [#allocation20], 64, 64, 4
        $region44: #{tpu_custom_call.1} parent=11 // pred_fallthru
          _
        // Predicated region
        $region45: #{tpu_custom_call.1} parent=11 // pred_check
          %p509 = pneg %p299
        $region46: #{tpu_custom_call.1} parent=11 // pred_check_branch
          %511 = sbr.rel (%p509) target = $region48
        $region47: #{tpu_custom_call.1} parent=11 // pred_region
          %s513 = ssub.s32 32, 32
          %514 = vsyncadd [#allocation20], %s513
          %s515 = sshll.u32 [#allocation21], 4
          %s516 = int_to_ptr.vmem [resolvable:$true] %s515
          %521 = dma.hbm_to_vmem [thread:$0]  %s11, 32, %s516, [#allocation20], 16, 16, 1
        $region48: #{tpu_custom_call.1} parent=11 // pred_fallthru
          _
        // Predicated region
        $region49: #{tpu_custom_call.1} parent=11 // pred_check
          %p522 = pneg %p320
        $region50: #{tpu_custom_call.1} parent=11 // pred_check_branch
          %524 = sbr.rel (%p522) target = $region52
        $region51: #{tpu_custom_call.1} parent=11 // pred_region
          %s526 = ssub.s32 1024, 1024
          %527 = vsyncadd [#allocation23], %s526
          %s528 = sshll.u32 [#allocation22], 4
          %s529 = int_to_ptr.vmem [resolvable:$true] %s528
          %534 = dma.hbm_to_vmem [thread:$0]  %s12, 1024, %s529, [#allocation23], 64, 64, 4
        $region52: #{tpu_custom_call.1} parent=11 // pred_fallthru
          _
        // Predicated region
        $region53: #{tpu_custom_call.1} parent=11 // pred_check
          %p535 = pneg %p341
        $region54: #{tpu_custom_call.1} parent=11 // pred_check_branch
          %537 = sbr.rel (%p535) target = $region56
        $region55: #{tpu_custom_call.1} parent=11 // pred_region
          %s539 = ssub.s32 16, 16
          %540 = vsyncadd [#allocation23], %s539
          %s542 = sshll.u32 [#allocation24], 4
          %s543 = int_to_ptr.vmem [resolvable:$true] %s542
          %545 = dma.hbm_to_vmem [thread:$0]  %s13, 16, %s543, [#allocation23]
        $region56: #{tpu_custom_call.1} parent=11 // pred_fallthru
          _
        // Predicated region
        $region57: #{tpu_custom_call.1} parent=11 // pred_check
          %p546 = pneg %p362
        $region58: #{tpu_custom_call.1} parent=11 // pred_check_branch
          %548 = sbr.rel (%p546) target = $region60
        $region59: #{tpu_custom_call.1} parent=11 // pred_region
          _
        $region60: #{tpu_custom_call.1} parent=11 // pred_fallthru
          _
        // Predicated region
        $region61: #{tpu_custom_call.1} parent=11 // pred_check
          %p549 = pneg %p383
        $region62: #{tpu_custom_call.1} parent=11 // pred_check_branch
          %551 = sbr.rel (%p549) target = $region64
        $region63: #{tpu_custom_call.1} parent=11 // pred_region
          %s553 = ssub.s32 32, 32
          %554 = vsyncadd [#allocation26], %s553
          %s555 = sshll.u32 [#allocation25], 4
          %s556 = int_to_ptr.vmem [resolvable:$true] %s555
          %561 = dma.hbm_to_vmem [thread:$0]  %s15, 32, %s556, [#allocation26], 16, 16, 1
        $region64: #{tpu_custom_call.1} parent=11 // pred_fallthru
          _
      $region12: #{tpu_custom_call.1} parent=5 // pred_fallthru
        _
      %p562 = scmp.lt.s32.totalorder %s32, 2
      // Predicated region
      $region65: #{tpu_custom_call.1} parent=5 // pred_check
        %p563 = pneg %p562
      $region66: #{tpu_custom_call.1} parent=5 // pred_check_branch
        %565 = sbr.rel (%p563) target = $region68
      $region67: #{tpu_custom_call.1} parent=5 // pred_region
        // Predicated region
        $region69: #{tpu_custom_call.1} parent=67 // pred_check
          %p566 = pneg %p94
        $region70: #{tpu_custom_call.1} parent=67 // pred_check_branch
          %568 = sbr.rel (%p566) target = $region72
        $region71: #{tpu_custom_call.1} parent=67 // pred_region
          %s569 = smul.u32 32, %s32
          %p570 = scmp.lt.s32.totalorder %s569, 63
          %s571 = scalar_select %p570, %s569, 63
          %s572 = smul.addr %s571, 8
          %s573 = scalar_lea.vmem %s2, %s572
          %s574 = smul.u32 32, %s32
        $region72: #{tpu_custom_call.1} parent=67 // pred_fallthru
          _
        // Predicated region
        $region73: #{tpu_custom_call.1} parent=67 // pred_check
          %p575 = pneg %p120
        $region74: #{tpu_custom_call.1} parent=67 // pred_check_branch
          %577 = sbr.rel (%p575) target = $region76
        $region75: #{tpu_custom_call.1} parent=67 // pred_region
          %s578 = smul.u32 32, %s32
          %p579 = scmp.lt.s32.totalorder %s578, 63
          %s580 = scalar_select %p579, %s578, 63
          %s581 = smul.addr %s580, 8
          %s582 = scalar_lea.vmem %s3, %s581
          %s583 = smul.u32 32, %s32
        $region76: #{tpu_custom_call.1} parent=67 // pred_fallthru
          _
        // Predicated region
        $region77: #{tpu_custom_call.1} parent=67 // pred_check
          %p584 = pneg %p146
        $region78: #{tpu_custom_call.1} parent=67 // pred_check_branch
          %586 = sbr.rel (%p584) target = $region80
        $region79: #{tpu_custom_call.1} parent=67 // pred_region
          %s587 = sand.u32 %s32, 1
          %s588 = scalar_lea.sflag [#allocation11], %s587
          %s589 = sand.u32 %s136, 1
          %s590 = smul.addr %s589, 2
          %s591 = scalar_lea.vmem [#allocation10], %s590
          %s592 = smul.u32 2, %s32
          %s594 = ssub.s32 32, 32
          %595 = vsyncadd %s588, %s594
          %s596 = smul.addr %s592, 16
          %s597 = scalar_lea.hbm %s4, %s596
          %s599 = sshll.u32 %s591, 4
          %s600 = int_to_ptr.vmem [resolvable:$true] %s599
          %602 = dma.hbm_to_vmem [thread:$0]  %s597, 32, %s600, %s588
        $region80: #{tpu_custom_call.1} parent=67 // pred_fallthru
          _
      $region68: #{tpu_custom_call.1} parent=5 // pred_fallthru
        _
      %p603 = scmp.le.s32.totalorder 1, %s32
      %p604 = scmp.lt.s32.totalorder %s32, 3
      %p605 = pnand %p603, %p604
      %p606 = pneg %p605
      // Predicated region
      $region81: #{tpu_custom_call.1} parent=5 // pred_check
        _
      $region82: #{tpu_custom_call.1} parent=5 // pred_check_branch
        %608 = sbr.rel (%p605) target = $region84
      $region83: #{tpu_custom_call.1} parent=5 // pred_region
        %s609 = ssub.s32 %s32, 1
        // Predicated region
        $region85: #{tpu_custom_call.1} parent=83 // pred_check
          %p610 = pneg %p53
        $region86: #{tpu_custom_call.1} parent=83 // pred_check_branch
          %612 = sbr.rel (%p610) target = $region88
        $region87: #{tpu_custom_call.1} parent=83 // pred_region
          %613 = dma.done [#allocation8], 1024
        $region88: #{tpu_custom_call.1} parent=83 // pred_fallthru
          _
        %s614 = sand.u32 %s37, 1
        %s615 = scalar_lea.sflag [#allocation11], %s614
        %s616 = sand.u32 %s139, 1
        %s617 = smul.addr %s616, 2
        %s618 = scalar_lea.vmem [#allocation10], %s617
        // Predicated region
        $region89: #{tpu_custom_call.1} parent=83 // pred_check
          %p619 = pneg %p152
        $region90: #{tpu_custom_call.1} parent=83 // pred_check_branch
          %621 = sbr.rel (%p619) target = $region92
        $region91: #{tpu_custom_call.1} parent=83 // pred_region
          %622 = dma.done %s615, 32
        $region92: #{tpu_custom_call.1} parent=83 // pred_fallthru
          _
        // Predicated region
        $region93: #{tpu_custom_call.1} parent=83 // pred_check
          %p623 = pneg %p173
        $region94: #{tpu_custom_call.1} parent=83 // pred_check_branch
          %625 = sbr.rel (%p623) target = $region96
        $region95: #{tpu_custom_call.1} parent=83 // pred_region
          %626 = dma.done [#allocation11], 2048
        $region96: #{tpu_custom_call.1} parent=83 // pred_fallthru
          _
        // Predicated region
        $region97: #{tpu_custom_call.1} parent=83 // pred_check
          %p627 = pneg %p194
        $region98: #{tpu_custom_call.1} parent=83 // pred_check_branch
          %629 = sbr.rel (%p627) target = $region100
        $region99: #{tpu_custom_call.1} parent=83 // pred_region
          %630 = dma.done [#allocation14], 32
        $region100: #{tpu_custom_call.1} parent=83 // pred_fallthru
          _
        // Predicated region
        $region101: #{tpu_custom_call.1} parent=83 // pred_check
          %p631 = pneg %p215
        $region102: #{tpu_custom_call.1} parent=83 // pred_check_branch
          %633 = sbr.rel (%p631) target = $region104
        $region103: #{tpu_custom_call.1} parent=83 // pred_region
          %634 = dma.done [#allocation14], 128
        $region104: #{tpu_custom_call.1} parent=83 // pred_fallthru
          _
        // Predicated region
        $region105: #{tpu_custom_call.1} parent=83 // pred_check
          %p635 = pneg %p236
        $region106: #{tpu_custom_call.1} parent=83 // pred_check_branch
          %637 = sbr.rel (%p635) target = $region108
        $region107: #{tpu_custom_call.1} parent=83 // pred_region
          %638 = dma.done [#allocation17], 1024
        $region108: #{tpu_custom_call.1} parent=83 // pred_fallthru
          _
        // Predicated region
        $region109: #{tpu_custom_call.1} parent=83 // pred_check
          %p639 = pneg %p257
        $region110: #{tpu_custom_call.1} parent=83 // pred_check_branch
          %641 = sbr.rel (%p639) target = $region112
        $region111: #{tpu_custom_call.1} parent=83 // pred_region
          %642 = dma.done [#allocation17], 1024
        $region112: #{tpu_custom_call.1} parent=83 // pred_fallthru
          _
        // Predicated region
        $region113: #{tpu_custom_call.1} parent=83 // pred_check
          %p643 = pneg %p278
        $region114: #{tpu_custom_call.1} parent=83 // pred_check_branch
          %645 = sbr.rel (%p643) target = $region116
        $region115: #{tpu_custom_call.1} parent=83 // pred_region
          %646 = dma.done [#allocation20], 2048
        $region116: #{tpu_custom_call.1} parent=83 // pred_fallthru
          _
        // Predicated region
        $region117: #{tpu_custom_call.1} parent=83 // pred_check
          %p647 = pneg %p299
        $region118: #{tpu_custom_call.1} parent=83 // pred_check_branch
          %649 = sbr.rel (%p647) target = $region120
        $region119: #{tpu_custom_call.1} parent=83 // pred_region
          %650 = dma.done [#allocation20], 32
        $region120: #{tpu_custom_call.1} parent=83 // pred_fallthru
          _
        // Predicated region
        $region121: #{tpu_custom_call.1} parent=83 // pred_check
          %p651 = pneg %p320
        $region122: #{tpu_custom_call.1} parent=83 // pred_check_branch
          %653 = sbr.rel (%p651) target = $region124
        $region123: #{tpu_custom_call.1} parent=83 // pred_region
          %654 = dma.done [#allocation23], 1024
        $region124: #{tpu_custom_call.1} parent=83 // pred_fallthru
          _
        // Predicated region
        $region125: #{tpu_custom_call.1} parent=83 // pred_check
          %p655 = pneg %p341
        $region126: #{tpu_custom_call.1} parent=83 // pred_check_branch
          %657 = sbr.rel (%p655) target = $region128
        $region127: #{tpu_custom_call.1} parent=83 // pred_region
          %658 = dma.done [#allocation23], 16
        $region128: #{tpu_custom_call.1} parent=83 // pred_fallthru
          _
        // Predicated region
        $region129: #{tpu_custom_call.1} parent=83 // pred_check
          %p659 = pneg %p383
        $region130: #{tpu_custom_call.1} parent=83 // pred_check_branch
          %661 = sbr.rel (%p659) target = $region132
        $region131: #{tpu_custom_call.1} parent=83 // pred_region
          %662 = dma.done [#allocation26], 32
        $region132: #{tpu_custom_call.1} parent=83 // pred_fallthru
          _
        %p663 = pneg %p53
        %p664 = pneg %p50
        %p665 = pneg %p74
        %p666 = pneg %p71
        %s667 = smul.u32 32, %s37
        %p668 = scmp.lt.s32.totalorder %s667, 63
        %s669 = scalar_select %p668, %s667, 63
        %s670 = smul.addr %s669, 8
        %s671 = scalar_lea.vmem %s2, %s670
        %p672 = pneg %p100
        %p673 = pneg %p97
        %s674 = smul.u32 32, %s37
        %p675 = scmp.lt.s32.totalorder %s674, 63
        %s676 = scalar_select %p675, %s674, 63
        %s677 = smul.addr %s676, 8
        %s678 = scalar_lea.vmem %s3, %s677
        %p679 = pneg %p126
        %p680 = pneg %p123
        %s681 = sand.u32 %s37, 1
        %s682 = scalar_lea.sflag [#allocation11], %s681
        %s683 = sand.u32 %s139, 1
        %s684 = smul.addr %s683, 2
        %s685 = scalar_lea.vmem [#allocation10], %s684
        %p686 = pneg %p152
        %p687 = pneg %p149
        %p688 = pneg %p173
        %p689 = pneg %p170
        %p690 = pneg %p194
        %p691 = pneg %p191
        %p692 = pneg %p215
        %p693 = pneg %p212
        %p694 = pneg %p236
        %p695 = pneg %p233
        %p696 = pneg %p257
        %p697 = pneg %p254
        %p698 = pneg %p278
        %p699 = pneg %p275
        %p700 = pneg %p299
        %p701 = pneg %p296
        %p702 = pneg %p320
        %p703 = pneg %p317
        %p704 = pneg %p341
        %p705 = pneg %p338
        %p706 = pneg %p362
        %p707 = pneg %p359
        %p708 = pneg %p383
        %p709 = pneg %p380
        %p710 = pneg %p404
        %p711 = pneg %p401
        %s712 = smul.u32 32, %s37
        %p713 = scmp.lt.s32.totalorder %s712, 63
        %s714 = scalar_select %p713, %s712, 63
        %s715 = smul.addr %s714, 8
        %s716 = scalar_lea.vmem %s2, %s715
        %s717 = smul.u32 32, %s37
        %s718 = smul.u32 32, %s37
        %p719 = scmp.lt.s32.totalorder %s718, 63
        %s720 = scalar_select %p719, %s718, 63
        %s721 = smul.addr %s720, 8
        %s722 = scalar_lea.vmem %s3, %s721
        %s723 = smul.u32 32, %s37
        %s724 = smul.u32 2, %s37
        %p726 = scmp.eq.s32.totalorder %s37, 0
        // Predicated region
        $region133: #{tpu_custom_call.1} parent=83 // pred_check
          %p727 = pneg %p726
        $region134: #{tpu_custom_call.1} parent=83 // pred_check_branch
          %729 = sbr.rel (%p727) target = $region136
        $region135: #{tpu_custom_call.1} parent=83 // pred_region
          %v730 = vlaneseq
          %v731 = vand.u32 %v730, 127
          %vm732 = vcmask 523264
          %733 = vst.msk [vmem:[#allocation5] sm:$0xff] %vm732, %v731
          %734 = vst.msk [vmem:[#allocation5 + $0x8] sm:$0xff] %vm732, %v731
          %735 = vst.msk [vmem:[#allocation5 + $0x10] sm:$0xff] %vm732, %v731
          %736 = vst.msk [vmem:[#allocation5 + $0x18] sm:$0xff] %vm732, %v731
          %737 = vst.msk [vmem:[#allocation5 + $0x20] sm:$0xff] %vm732, %v731
          %738 = vst.msk [vmem:[#allocation5 + $0x28] sm:$0xff] %vm732, %v731
          %739 = vst.msk [vmem:[#allocation5 + $0x30] sm:$0xff] %vm732, %v731
          %740 = vst.msk [vmem:[#allocation5 + $0x38] sm:$0xff] %vm732, %v731
          %741 = vst.msk [vmem:[#allocation5 + $0x40] sm:$0xff] %vm732, %v731
          %742 = vst.msk [vmem:[#allocation5 + $0x48] sm:$0xff] %vm732, %v731
          %743 = vst.msk [vmem:[#allocation5 + $0x50] sm:$0xff] %vm732, %v731
          %744 = vst.msk [vmem:[#allocation5 + $0x58] sm:$0xff] %vm732, %v731
          %745 = vst.msk [vmem:[#allocation5 + $0x60] sm:$0xff] %vm732, %v731
          %746 = vst.msk [vmem:[#allocation5 + $0x68] sm:$0xff] %vm732, %v731
          %747 = vst.msk [vmem:[#allocation5 + $0x70] sm:$0xff] %vm732, %v731
          %748 = vst.msk [vmem:[#allocation5 + $0x78] sm:$0xff] %vm732, %v731
          %749 = vst.msk [vmem:[#allocation5 + $0x80] sm:$0xff] %vm732, %v731
          %750 = vst.msk [vmem:[#allocation5 + $0x88] sm:$0xff] %vm732, %v731
          %751 = vst.msk [vmem:[#allocation5 + $0x90] sm:$0xff] %vm732, %v731
          %752 = vst.msk [vmem:[#allocation5 + $0x98] sm:$0xff] %vm732, %v731
          %753 = vst.msk [vmem:[#allocation5 + $0xa0] sm:$0xff] %vm732, %v731
          %754 = vst.msk [vmem:[#allocation5 + $0xa8] sm:$0xff] %vm732, %v731
          %755 = vst.msk [vmem:[#allocation5 + $0xb0] sm:$0xff] %vm732, %v731
          %756 = vst.msk [vmem:[#allocation5 + $0xb8] sm:$0xff] %vm732, %v731
          %757 = vst.msk [vmem:[#allocation5 + $0xc0] sm:$0xff] %vm732, %v731
          %758 = vst.msk [vmem:[#allocation5 + $0xc8] sm:$0xff] %vm732, %v731
          %759 = vst.msk [vmem:[#allocation5 + $0xd0] sm:$0xff] %vm732, %v731
          %760 = vst.msk [vmem:[#allocation5 + $0xd8] sm:$0xff] %vm732, %v731
          %761 = vst.msk [vmem:[#allocation5 + $0xe0] sm:$0xff] %vm732, %v731
          %762 = vst.msk [vmem:[#allocation5 + $0xe8] sm:$0xff] %vm732, %v731
          %763 = vst.msk [vmem:[#allocation5 + $0xf0] sm:$0xff] %vm732, %v731
          %764 = vst.msk [vmem:[#allocation5 + $0xf8] sm:$0xff] %vm732, %v731
          %v765 = vlaneseq
          %v766 = vshrl.u32 %v765, 7
          %v767 = vadd.s32 %v766, 8
          %v768 = vadd.s32 %v766, 16
          %v769 = vadd.s32 %v766, 24
          %v770 = vadd.s32 %v766, 32
          %v771 = vadd.s32 %v766, 40
          %v772 = vadd.s32 %v766, 48
          %v773 = vadd.s32 %v766, 56
          %774 = vst [vmem:[#allocation6] sm:$0xff] %v766
          %775 = vst [vmem:[#allocation6 + $0x8] sm:$0xff] %v766
          %776 = vst [vmem:[#allocation6 + $0x10] sm:$0xff] %v767
          %777 = vst [vmem:[#allocation6 + $0x18] sm:$0xff] %v767
          %778 = vst [vmem:[#allocation6 + $0x20] sm:$0xff] %v768
          %779 = vst [vmem:[#allocation6 + $0x28] sm:$0xff] %v768
          %780 = vst [vmem:[#allocation6 + $0x30] sm:$0xff] %v769
          %781 = vst [vmem:[#allocation6 + $0x38] sm:$0xff] %v769
          %782 = vst [vmem:[#allocation6 + $0x40] sm:$0xff] %v770
          %783 = vst [vmem:[#allocation6 + $0x48] sm:$0xff] %v770
          %784 = vst [vmem:[#allocation6 + $0x50] sm:$0xff] %v771
          %785 = vst [vmem:[#allocation6 + $0x58] sm:$0xff] %v771
          %786 = vst [vmem:[#allocation6 + $0x60] sm:$0xff] %v772
          %787 = vst [vmem:[#allocation6 + $0x68] sm:$0xff] %v772
          %788 = vst [vmem:[#allocation6 + $0x70] sm:$0xff] %v773
          %789 = vst [vmem:[#allocation6 + $0x78] sm:$0xff] %v773
          %v790 = vld [vmem:[#allocation7] sm:$0xff]
          %v791 = vld [vmem:[#allocation7 + $0x8] sm:$0xff]
          %v792 = vld [vmem:[#allocation7 + $0x10] sm:$0xff]
          %v793 = vld [vmem:[#allocation7 + $0x18] sm:$0xff]
          %v794 = vld [vmem:[#allocation7 + $0x20] sm:$0xff]
          %v795 = vld [vmem:[#allocation7 + $0x28] sm:$0xff]
          %v796 = vld [vmem:[#allocation7 + $0x30] sm:$0xff]
          %v797 = vld [vmem:[#allocation7 + $0x38] sm:$0xff]
          %v798 = vld [vmem:[#allocation12] sm:$0xff]
          %v799 = vld [vmem:[#allocation12 + $0x8] sm:$0xff]
          %v800 = vld [vmem:[#allocation12 + $0x10] sm:$0xff]
          %v801 = vld [vmem:[#allocation12 + $0x18] sm:$0xff]
          %v802 = vld [vmem:[#allocation12 + $0x20] sm:$0xff]
          %v803 = vld [vmem:[#allocation12 + $0x28] sm:$0xff]
          %v804 = vld [vmem:[#allocation12 + $0x30] sm:$0xff]
          %v805 = vld [vmem:[#allocation12 + $0x38] sm:$0xff]
          %v806 = vld [vmem:[#allocation12 + $0x40] sm:$0xff]
          %v807 = vld [vmem:[#allocation12 + $0x48] sm:$0xff]
          %v808 = vld [vmem:[#allocation12 + $0x50] sm:$0xff]
          %v809 = vld [vmem:[#allocation12 + $0x58] sm:$0xff]
          %v810 = vld [vmem:[#allocation12 + $0x60] sm:$0xff]
          %v811 = vld [vmem:[#allocation12 + $0x68] sm:$0xff]
          %v812 = vld [vmem:[#allocation12 + $0x70] sm:$0xff]
          %v813 = vld [vmem:[#allocation12 + $0x78] sm:$0xff]
          %v814 = vld [vmem:[#allocation13] sm:$0x3]
          %v816 = vlaneseq
          %v817 = vshrl.u32 %v816, 7
          %v818 = vsub.s32 0, %v817
          %v819 = vrot.slane %v814, %v818
          %v820 = vlaneseq
          %v821 = vshrl.u32 %v820, 7
          %v822 = vsub.s32 1, %v821
          %v823 = vrot.slane %v814, %v822
          %v842 = vunpack.c.l.b16 %v798
          %v843 = vunpack.c.h.b16 %v798
          %v844 = vunpack.c.l.b16 %v799
          %v845 = vunpack.c.h.b16 %v799
          %v846 = vunpack.c.l.b16 %v800
          %v847 = vunpack.c.h.b16 %v800
          %v848 = vunpack.c.l.b16 %v801
          %v849 = vunpack.c.h.b16 %v801
          %v850 = vunpack.c.l.b16 %v802
          %v851 = vunpack.c.h.b16 %v802
          %v852 = vunpack.c.l.b16 %v803
          %v853 = vunpack.c.h.b16 %v803
          %v854 = vunpack.c.l.b16 %v804
          %v855 = vunpack.c.h.b16 %v804
          %v856 = vunpack.c.l.b16 %v805
          %v857 = vunpack.c.h.b16 %v805
          %v858 = vunpack.c.l.b16 %v806
          %v859 = vunpack.c.h.b16 %v806
          %v860 = vunpack.c.l.b16 %v807
          %v861 = vunpack.c.h.b16 %v807
          %v862 = vunpack.c.l.b16 %v808
          %v863 = vunpack.c.h.b16 %v808
          %v864 = vunpack.c.l.b16 %v809
          %v865 = vunpack.c.h.b16 %v809
          %v866 = vunpack.c.l.b16 %v810
          %v867 = vunpack.c.h.b16 %v810
          %v868 = vunpack.c.l.b16 %v811
          %v869 = vunpack.c.h.b16 %v811
          %v870 = vunpack.c.l.b16 %v812
          %v871 = vunpack.c.h.b16 %v812
          %v872 = vunpack.c.l.b16 %v813
          %v873 = vunpack.c.h.b16 %v813
          %v874 = vpack.c.b16 %v844, %v842
          %v875 = vpack.c.b16 %v845, %v843
          %v876 = vpack.c.b16 %v848, %v846
          %v877 = vpack.c.b16 %v849, %v847
          %v878 = vpack.c.b16 %v852, %v850
          %v879 = vpack.c.b16 %v853, %v851
          %v880 = vpack.c.b16 %v856, %v854
          %v881 = vpack.c.b16 %v857, %v855
          %v882 = vpack.c.b16 %v860, %v858
          %v883 = vpack.c.b16 %v861, %v859
          %v884 = vpack.c.b16 %v864, %v862
          %v885 = vpack.c.b16 %v865, %v863
          %v886 = vpack.c.b16 %v868, %v866
          %v887 = vpack.c.b16 %v869, %v867
          %v888 = vpack.c.b16 %v872, %v870
          %v889 = vpack.c.b16 %v873, %v871
          %906 = vmatprep.subr.bf16.mxu0 %v875
          %907 = vmatpush1.bf16.msra.mxu0 %v874
          %908 = vmatprep.subr.bf16.mxu0 %v877
          %909 = vmatpush1.bf16.msra.mxu0 %v876
          %910 = vmatprep.subr.bf16.mxu0 %v879
          %911 = vmatpush1.bf16.msra.mxu0 %v878
          %912 = vmatprep.subr.bf16.mxu0 %v881
          %913 = vmatpush1.bf16.msra.mxu0 %v880
          %914 = vmatprep.subr.bf16.mxu0 %v883
          %915 = vmatpush1.bf16.msra.mxu0 %v882
          %916 = vmatprep.subr.bf16.mxu0 %v885
          %917 = vmatpush1.bf16.msra.mxu0 %v884
          %918 = vmatprep.subr.bf16.mxu0 %v887
          %919 = vmatpush1.bf16.msra.mxu0 %v886
          %920 = vmatprep.subr.bf16.mxu0 %v889
          %921 = vmatpush1.bf16.msra.mxu0 %v888
          %922 = vmatprep.subr.bf16.mxu0 0
          %923 = vmatpush1.bf16.msra.mxu0 0
          %924 = vmatprep.subr.bf16.mxu0 0
          %925 = vmatpush1.bf16.msra.mxu0 0
          %926 = vmatprep.subr.bf16.mxu0 0
          %927 = vmatpush1.bf16.msra.mxu0 0
          %928 = vmatprep.subr.bf16.mxu0 0
          %929 = vmatpush1.bf16.msra.mxu0 0
          %930 = vmatprep.subr.bf16.mxu0 0
          %931 = vmatpush1.bf16.msra.mxu0 0
          %932 = vmatprep.subr.bf16.mxu0 0
          %933 = vmatpush1.bf16.msra.mxu0 0
          %934 = vmatprep.subr.bf16.mxu0 0
          %935 = vmatpush1.bf16.msra.mxu0 0
          %936 = vmatprep.subr.bf16.mxu0 0
          %937 = vmatpush1.bf16.msra.mxu0 0
          %938 = vmatprep.mubr.f32.mxu0 0.0
          %939 = vmatmul.mubr.f32.gmra.mrb[0].mxu0 %v790
          %v940 = vpop.f32.mrb[0].mxu0
          %v941 = vadd.f32 %v819, %v940
          %v942 = vpop.f32.mrb[0].mxu0
          %v943 = vadd.f32 %v823, %v942
          %944 = vmatprep.mubr.f32.mxu0 0.0
          %945 = vmatmul.mubr.f32.gmra.mrb[0].mxu0 %v791
          %v946 = vpop.f32.mrb[0].mxu0
          %v947 = vadd.f32 %v819, %v946
          %v948 = vpop.f32.mrb[0].mxu0
          %v949 = vadd.f32 %v823, %v948
          %950 = vmatprep.mubr.f32.mxu0 0.0
          %951 = vmatmul.mubr.f32.gmra.mrb[0].mxu0 %v792
          %v952 = vpop.f32.mrb[0].mxu0
          %v953 = vadd.f32 %v819, %v952
          %v954 = vpop.f32.mrb[0].mxu0
          %v955 = vadd.f32 %v823, %v954
          %956 = vmatprep.mubr.f32.mxu0 0.0
          %957 = vmatmul.mubr.f32.gmra.mrb[0].mxu0 %v793
          %v958 = vpop.f32.mrb[0].mxu0
          %v959 = vadd.f32 %v819, %v958
          %v960 = vpop.f32.mrb[0].mxu0
          %v961 = vadd.f32 %v823, %v960
          %962 = vmatprep.mubr.f32.mxu0 0.0
          %963 = vmatmul.mubr.f32.gmra.mrb[0].mxu0 %v794
          %v964 = vpop.f32.mrb[0].mxu0
          %v965 = vadd.f32 %v819, %v964
          %v966 = vpop.f32.mrb[0].mxu0
          %v967 = vadd.f32 %v823, %v966
          %968 = vmatprep.mubr.f32.mxu0 0.0
          %969 = vmatmul.mubr.f32.gmra.mrb[0].mxu0 %v795
          %v970 = vpop.f32.mrb[0].mxu0
          %v971 = vadd.f32 %v819, %v970
          %v972 = vpop.f32.mrb[0].mxu0
          %v973 = vadd.f32 %v823, %v972
          %974 = vmatprep.mubr.f32.mxu0 0.0
          %975 = vmatmul.mubr.f32.gmra.mrb[0].mxu0 %v796
          %v976 = vpop.f32.mrb[0].mxu0
          %v977 = vadd.f32 %v819, %v976
          %v978 = vpop.f32.mrb[0].mxu0
          %v979 = vadd.f32 %v823, %v978
          %980 = vmatprep.mubr.f32.mxu0 0.0
          %981 = vmatmul.mubr.f32.gmra.mrb[0].mxu0 %v797
          %v982 = vpop.f32.mrb[0].mxu0
          %v983 = vadd.f32 %v819, %v982
          %v984 = vpop.f32.mrb[0].mxu0
          %v985 = vadd.f32 %v823, %v984
          %986 = vdwg.mxu0
          %v987 = vxor.u32 %v941, 2147483648
          %v988 = vxor.u32 %v943, 2147483648
          %v989 = vxor.u32 %v947, 2147483648
          %v990 = vxor.u32 %v949, 2147483648
          %v991 = vxor.u32 %v953, 2147483648
          %v992 = vxor.u32 %v955, 2147483648
          %v993 = vxor.u32 %v959, 2147483648
          %v994 = vxor.u32 %v961, 2147483648
          %v995 = vxor.u32 %v965, 2147483648
          %v996 = vxor.u32 %v967, 2147483648
          %v997 = vxor.u32 %v971, 2147483648
          %v998 = vxor.u32 %v973, 2147483648
          %v999 = vxor.u32 %v977, 2147483648
          %v1000 = vxor.u32 %v979, 2147483648
          %v1001 = vxor.u32 %v983, 2147483648
          %v1002 = vxor.u32 %v985, 2147483648
          %v1003 = vmul.f32 %v987, 1.442695
          %v1004 = vpow.pop %v1003
          %v1005 = vmul.f32 %v988, 1.442695
          %v1006 = vpow.pop %v1005
          %v1007 = vmul.f32 %v989, 1.442695
          %v1008 = vpow.pop %v1007
          %v1009 = vmul.f32 %v990, 1.442695
          %v1010 = vpow.pop %v1009
          %v1011 = vmul.f32 %v991, 1.442695
          %v1012 = vpow.pop %v1011
          %v1013 = vmul.f32 %v992, 1.442695
          %v1014 = vpow.pop %v1013
          %v1015 = vmul.f32 %v993, 1.442695
          %v1016 = vpow.pop %v1015
          %v1017 = vmul.f32 %v994, 1.442695
          %v1018 = vpow.pop %v1017
          %v1019 = vmul.f32 %v995, 1.442695
          %v1020 = vpow.pop %v1019
          %v1021 = vmul.f32 %v996, 1.442695
          %v1022 = vpow.pop %v1021
          %v1023 = vmul.f32 %v997, 1.442695
          %v1024 = vpow.pop %v1023
          %v1025 = vmul.f32 %v998, 1.442695
          %v1026 = vpow.pop %v1025
          %v1027 = vmul.f32 %v999, 1.442695
          %v1028 = vpow.pop %v1027
          %v1029 = vmul.f32 %v1000, 1.442695
          %v1030 = vpow.pop %v1029
          %v1031 = vmul.f32 %v1001, 1.442695
          %v1032 = vpow.pop %v1031
          %v1033 = vmul.f32 %v1002, 1.442695
          %v1034 = vpow.pop %v1033
          %v1035 = vadd.f32 %v1004, 1.0
          %v1036 = vadd.f32 %v1006, 1.0
          %v1037 = vadd.f32 %v1008, 1.0
          %v1038 = vadd.f32 %v1010, 1.0
          %v1039 = vadd.f32 %v1012, 1.0
          %v1040 = vadd.f32 %v1014, 1.0
          %v1041 = vadd.f32 %v1016, 1.0
          %v1042 = vadd.f32 %v1018, 1.0
          %v1043 = vadd.f32 %v1020, 1.0
          %v1044 = vadd.f32 %v1022, 1.0
          %v1045 = vadd.f32 %v1024, 1.0
          %v1046 = vadd.f32 %v1026, 1.0
          %v1047 = vadd.f32 %v1028, 1.0
          %v1048 = vadd.f32 %v1030, 1.0
          %v1049 = vadd.f32 %v1032, 1.0
          %v1050 = vadd.f32 %v1034, 1.0
          %v1051 = vrcp.pop %v1035
          %v1052 = vmul.f32 1.0, %v1051
          %v1053 = vrcp.pop %v1036
          %v1054 = vmul.f32 1.0, %v1053
          %v1055 = vrcp.pop %v1037
          %v1056 = vmul.f32 1.0, %v1055
          %v1057 = vrcp.pop %v1038
          %v1058 = vmul.f32 1.0, %v1057
          %v1059 = vrcp.pop %v1039
          %v1060 = vmul.f32 1.0, %v1059
          %v1061 = vrcp.pop %v1040
          %v1062 = vmul.f32 1.0, %v1061
          %v1063 = vrcp.pop %v1041
          %v1064 = vmul.f32 1.0, %v1063
          %v1065 = vrcp.pop %v1042
          %v1066 = vmul.f32 1.0, %v1065
          %v1067 = vrcp.pop %v1043
          %v1068 = vmul.f32 1.0, %v1067
          %v1069 = vrcp.pop %v1044
          %v1070 = vmul.f32 1.0, %v1069
          %v1071 = vrcp.pop %v1045
          %v1072 = vmul.f32 1.0, %v1071
          %v1073 = vrcp.pop %v1046
          %v1074 = vmul.f32 1.0, %v1073
          %v1075 = vrcp.pop %v1047
          %v1076 = vmul.f32 1.0, %v1075
          %v1077 = vrcp.pop %v1048
          %v1078 = vmul.f32 1.0, %v1077
          %v1079 = vrcp.pop %v1049
          %v1080 = vmul.f32 1.0, %v1079
          %v1081 = vrcp.pop %v1050
          %v1082 = vmul.f32 1.0, %v1081
          %v1083 = vmul.f32 %v941, %v1052
          %v1084 = vmul.f32 %v943, %v1054
          %v1085 = vmul.f32 %v947, %v1056
          %v1086 = vmul.f32 %v949, %v1058
          %v1087 = vmul.f32 %v953, %v1060
          %v1088 = vmul.f32 %v955, %v1062
          %v1089 = vmul.f32 %v959, %v1064
          %v1090 = vmul.f32 %v961, %v1066
          %v1091 = vmul.f32 %v965, %v1068
          %v1092 = vmul.f32 %v967, %v1070
          %v1093 = vmul.f32 %v971, %v1072
          %v1094 = vmul.f32 %v973, %v1074
          %v1095 = vmul.f32 %v977, %v1076
          %v1096 = vmul.f32 %v979, %v1078
          %v1097 = vmul.f32 %v983, %v1080
          %v1098 = vmul.f32 %v985, %v1082
          %v1099 = vld [vmem:[%s1] sm:$0xff]
          %v1100 = vld [vmem:[%s1 + $0x8] sm:$0xff]
          %v1101 = vld [vmem:[%s1 + $0x10] sm:$0xff]
          %v1102 = vld [vmem:[%s1 + $0x18] sm:$0xff]
          %v1103 = vld [vmem:[%s1 + $0x20] sm:$0xff]
          %v1104 = vld [vmem:[%s1 + $0x28] sm:$0xff]
          %v1105 = vld [vmem:[%s1 + $0x30] sm:$0xff]
          %v1106 = vld [vmem:[%s1 + $0x38] sm:$0xff]
          %v1107 = vld [vmem:[#allocation15] sm:$0xff]
          %vm1108 = vcmask 64512
          %v1110 = vsel %vm1108, %v1099, 0
          %v1113 = vsel %vm1108, %v1100, 0
          %v1116 = vsel %vm1108, %v1101, 0
          %v1119 = vsel %vm1108, %v1102, 0
          %v1122 = vsel %vm1108, %v1103, 0
          %v1125 = vsel %vm1108, %v1104, 0
          %v1128 = vsel %vm1108, %v1105, 0
          %v1131 = vsel %vm1108, %v1106, 0
          %1133 = vmatprep.subr.mxu0 0.0
          %1134 = vmatpush1.msra.mxu0 %v1107
          %1135 = vmatprep.subr.mxu0 0.0
          %1136 = vmatpush1.msra.mxu0 0.0
          %1137 = vmatprep.subr.mxu0 0.0
          %1138 = vmatpush1.msra.mxu0 0.0
          %1139 = vmatprep.subr.mxu0 0.0
          %1140 = vmatpush1.msra.mxu0 0.0
          %1141 = vmatprep.subr.mxu0 0.0
          %1142 = vmatpush1.msra.mxu0 0.0
          %1143 = vmatprep.subr.mxu0 0.0
          %1144 = vmatpush1.msra.mxu0 0.0
          %1145 = vmatprep.subr.mxu0 0.0
          %1146 = vmatpush1.msra.mxu0 0.0
          %1147 = vmatprep.subr.mxu0 0.0
          %1148 = vmatpush1.msra.mxu0 0.0
          %1149 = vmatprep.subr.mxu0 0.0
          %1150 = vmatpush1.msra.mxu0 0.0
          %1151 = vmatprep.subr.mxu0 0.0
          %1152 = vmatpush1.msra.mxu0 0.0
          %1153 = vmatprep.subr.mxu0 0.0
          %1154 = vmatpush1.msra.mxu0 0.0
          %1155 = vmatprep.subr.mxu0 0.0
          %1156 = vmatpush1.msra.mxu0 0.0
          %1157 = vmatprep.subr.mxu0 0.0
          %1158 = vmatpush1.msra.mxu0 0.0
          %1159 = vmatprep.subr.mxu0 0.0
          %1160 = vmatpush1.msra.mxu0 0.0
          %1161 = vmatprep.subr.mxu0 0.0
          %1162 = vmatpush1.msra.mxu0 0.0
          %1163 = vmatprep.subr.mxu0 0.0
          %1164 = vmatpush1.msra.mxu0 0.0
          %1165 = vmatprep.subr.mxu0 0.0
          %1166 = vmatpush1.msra.mxu0 0.0
          %1167 = vmatprep.subr.mxu0 0.0
          %1168 = vmatpush1.msra.mxu0 0.0
          %1169 = vmatprep.subr.mxu0 0.0
          %1170 = vmatpush1.msra.mxu0 0.0
          %1171 = vmatprep.subr.mxu0 0.0
          %1172 = vmatpush1.msra.mxu0 0.0
          %1173 = vmatprep.subr.mxu0 0.0
          %1174 = vmatpush1.msra.mxu0 0.0
          %1175 = vmatprep.subr.mxu0 0.0
          %1176 = vmatpush1.msra.mxu0 0.0
          %1177 = vmatprep.subr.mxu0 0.0
          %1178 = vmatpush1.msra.mxu0 0.0
          %1179 = vmatprep.subr.mxu0 0.0
          %1180 = vmatpush1.msra.mxu0 0.0
          %1181 = vmatprep.subr.mxu0 0.0
          %1182 = vmatpush1.msra.mxu0 0.0
          %1183 = vmatprep.subr.mxu0 0.0
          %1184 = vmatpush1.msra.mxu0 0.0
          %1185 = vmatprep.subr.mxu0 0.0
          %1186 = vmatpush1.msra.mxu0 0.0
          %1187 = vmatprep.subr.mxu0 0.0
          %1188 = vmatpush1.msra.mxu0 0.0
          %1189 = vmatprep.subr.mxu0 0.0
          %1190 = vmatpush1.msra.mxu0 0.0
          %1191 = vmatprep.subr.mxu0 0.0
          %1192 = vmatpush1.msra.mxu0 0.0
          %1193 = vmatprep.subr.mxu0 0.0
          %1194 = vmatpush1.msra.mxu0 0.0
          %1195 = vmatprep.subr.mxu0 0.0
          %1196 = vmatpush1.msra.mxu0 0.0
          %1197 = vmatprep.mubr.f32.mxu0 0.0
          %1198 = vmatmul.mubr.f32.gmra.mrb[0].mxu0 %v1110
          %v1199 = vpop.f32.mrb[0].mxu0
          %v1200 = vadd.f32 0.0, %v1199
          %v1201 = vpop.f32.mrb[0].mxu0
          %1202 = vmatprep.mubr.f32.mxu0 0.0
          %1203 = vmatmul.mubr.f32.gmra.mrb[0].mxu0 %v1113
          %v1204 = vpop.f32.mrb[0].mxu0
          %v1205 = vadd.f32 0.0, %v1204
          %v1206 = vpop.f32.mrb[0].mxu0
          %1207 = vmatprep.mubr.f32.mxu0 0.0
          %1208 = vmatmul.mubr.f32.gmra.mrb[0].mxu0 %v1116
          %v1209 = vpop.f32.mrb[0].mxu0
          %v1210 = vadd.f32 0.0, %v1209
          %v1211 = vpop.f32.mrb[0].mxu0
          %1212 = vmatprep.mubr.f32.mxu0 0.0
          %1213 = vmatmul.mubr.f32.gmra.mrb[0].mxu0 %v1119
          %v1214 = vpop.f32.mrb[0].mxu0
          %v1215 = vadd.f32 0.0, %v1214
          %v1216 = vpop.f32.mrb[0].mxu0
          %1217 = vmatprep.mubr.f32.mxu0 0.0
          %1218 = vmatmul.mubr.f32.gmra.mrb[0].mxu0 %v1122
          %v1219 = vpop.f32.mrb[0].mxu0
          %v1220 = vadd.f32 0.0, %v1219
          %v1221 = vpop.f32.mrb[0].mxu0
          %1222 = vmatprep.mubr.f32.mxu0 0.0
          %1223 = vmatmul.mubr.f32.gmra.mrb[0].mxu0 %v1125
          %v1224 = vpop.f32.mrb[0].mxu0
          %v1225 = vadd.f32 0.0, %v1224
          %v1226 = vpop.f32.mrb[0].mxu0
          %1227 = vmatprep.mubr.f32.mxu0 0.0
          %1228 = vmatmul.mubr.f32.gmra.mrb[0].mxu0 %v1128
          %v1229 = vpop.f32.mrb[0].mxu0
          %v1230 = vadd.f32 0.0, %v1229
          %v1231 = vpop.f32.mrb[0].mxu0
          %1232 = vmatprep.mubr.f32.mxu0 0.0
          %1233 = vmatmul.mubr.f32.gmra.mrb[0].mxu0 %v1131
          %v1234 = vpop.f32.mrb[0].mxu0
          %v1235 = vadd.f32 0.0, %v1234
          %v1236 = vpop.f32.mrb[0].mxu0
          %1237 = vdwg.mxu0
          %v1238 = vmul.f32 %v1084, %v1200
          %v1239 = vmul.f32 %v1086, %v1205
          %v1240 = vmul.f32 %v1088, %v1210
          %v1241 = vmul.f32 %v1090, %v1215
          %v1242 = vmul.f32 %v1092, %v1220
          %v1243 = vmul.f32 %v1094, %v1225
          %v1244 = vmul.f32 %v1096, %v1230
          %v1245 = vmul.f32 %v1098, %v1235
          %1246 = vst [vmem:[#allocation4] sm:$0xff] %v1083
          %1247 = vst [vmem:[#allocation4 + $0x8] sm:$0xff] %v1085
          %1248 = vst [vmem:[#allocation4 + $0x10] sm:$0xff] %v1087
          %1249 = vst [vmem:[#allocation4 + $0x18] sm:$0xff] %v1089
          %1250 = vst [vmem:[#allocation4 + $0x20] sm:$0xff] %v1091
          %1251 = vst [vmem:[#allocation4 + $0x28] sm:$0xff] %v1093
          %1252 = vst [vmem:[#allocation4 + $0x30] sm:$0xff] %v1095
          %1253 = vst [vmem:[#allocation4 + $0x38] sm:$0xff] %v1097
          %v1254 = vld [vmem:[#allocation16] sm:$0xf]
          %v1255 = vld [vmem:[#allocation16 + $0x4] sm:$0xf]
          %v1256 = vld [vmem:[#allocation16 + $0x8] sm:$0xf]
          %v1257 = vld [vmem:[#allocation16 + $0xc] sm:$0xf]
          %v1258 = vld [vmem:[#allocation16 + $0x10] sm:$0xf]
          %v1259 = vld [vmem:[#allocation16 + $0x14] sm:$0xf]
          %v1260 = vld [vmem:[#allocation16 + $0x18] sm:$0xf]
          %v1261 = vld [vmem:[#allocation16 + $0x1c] sm:$0xf]
          %v1262 = vld [vmem:[#allocation16 + $0x20] sm:$0xf]
          %v1263 = vld [vmem:[#allocation16 + $0x24] sm:$0xf]
          %v1264 = vld [vmem:[#allocation16 + $0x28] sm:$0xf]
          %v1265 = vld [vmem:[#allocation16 + $0x2c] sm:$0xf]
          %v1266 = vld [vmem:[#allocation16 + $0x30] sm:$0xf]
          %v1267 = vld [vmem:[#allocation16 + $0x34] sm:$0xf]
          %v1268 = vld [vmem:[#allocation16 + $0x38] sm:$0xf]
          %v1269 = vld [vmem:[#allocation16 + $0x3c] sm:$0xf]
          %v1286 = vunpack.c.l.b16 %v1254
          %v1287 = vunpack.c.l.b16 %v1255
          %v1288 = vunpack.c.l.b16 %v1256
          %v1289 = vunpack.c.l.b16 %v1257
          %v1290 = vunpack.c.l.b16 %v1258
          %v1291 = vunpack.c.l.b16 %v1259
          %v1292 = vunpack.c.l.b16 %v1260
          %v1293 = vunpack.c.l.b16 %v1261
          %v1294 = vunpack.c.l.b16 %v1262
          %v1295 = vunpack.c.l.b16 %v1263
          %v1296 = vunpack.c.l.b16 %v1264
          %v1297 = vunpack.c.l.b16 %v1265
          %v1298 = vunpack.c.l.b16 %v1266
          %v1299 = vunpack.c.l.b16 %v1267
          %v1300 = vunpack.c.l.b16 %v1268
          %v1301 = vunpack.c.l.b16 %v1269
          %v1302 = vpack.c.b16 %v1287, %v1286
          %v1303 = vpack.c.b16 %v1289, %v1288
          %v1304 = vpack.c.b16 %v1291, %v1290
          %v1305 = vpack.c.b16 %v1293, %v1292
          %v1306 = vpack.c.b16 %v1295, %v1294
          %v1307 = vpack.c.b16 %v1297, %v1296
          %v1308 = vpack.c.b16 %v1299, %v1298
          %v1309 = vpack.c.b16 %v1301, %v1300
          %1318 = vmatprep.subr.bf16.mxu0 0
          %1319 = vmatpush1.bf16.msra.mxu0 %v1302
          %1320 = vmatprep.subr.bf16.mxu0 0
          %1321 = vmatpush1.bf16.msra.mxu0 %v1303
          %1322 = vmatprep.subr.bf16.mxu0 0
          %1323 = vmatpush1.bf16.msra.mxu0 %v1304
          %1324 = vmatprep.subr.bf16.mxu0 0
          %1325 = vmatpush1.bf16.msra.mxu0 %v1305
          %1326 = vmatprep.subr.bf16.mxu0 0
          %1327 = vmatpush1.bf16.msra.mxu0 %v1306
          %1328 = vmatprep.subr.bf16.mxu0 0
          %1329 = vmatpush1.bf16.msra.mxu0 %v1307
          %1330 = vmatprep.subr.bf16.mxu0 0
          %1331 = vmatpush1.bf16.msra.mxu0 %v1308
          %1332 = vmatprep.subr.bf16.mxu0 0
          %1333 = vmatpush1.bf16.msra.mxu0 %v1309
          %1334 = vmatprep.subr.bf16.mxu0 0
          %1335 = vmatpush1.bf16.msra.mxu0 0
          %1336 = vmatprep.subr.bf16.mxu0 0
          %1337 = vmatpush1.bf16.msra.mxu0 0
          %1338 = vmatprep.subr.bf16.mxu0 0
          %1339 = vmatpush1.bf16.msra.mxu0 0
          %1340 = vmatprep.subr.bf16.mxu0 0
          %1341 = vmatpush1.bf16.msra.mxu0 0
          %1342 = vmatprep.subr.bf16.mxu0 0
          %1343 = vmatpush1.bf16.msra.mxu0 0
          %1344 = vmatprep.subr.bf16.mxu0 0
          %1345 = vmatpush1.bf16.msra.mxu0 0
          %1346 = vmatprep.subr.bf16.mxu0 0
          %1347 = vmatpush1.bf16.msra.mxu0 0
          %1348 = vmatprep.subr.bf16.mxu0 0
          %1349 = vmatpush1.bf16.msra.mxu0 0
          %1350 = vmatprep.mubr.f32.mxu0 0.0
          %1351 = vmatmul.mubr.f32.gmra.mrb[0].mxu0 %v1238
          %v1352 = vpop.f32.mrb[0].mxu0
          %v1353 = vadd.f32 0.0, %v1352
          %v1354 = vpop.f32.mrb[0].mxu0
          %1355 = vmatprep.mubr.f32.mxu0 0.0
          %1356 = vmatmul.mubr.f32.gmra.mrb[0].mxu0 %v1239
          %v1357 = vpop.f32.mrb[0].mxu0
          %v1358 = vadd.f32 0.0, %v1357
          %v1359 = vpop.f32.mrb[0].mxu0
          %1360 = vmatprep.mubr.f32.mxu0 0.0
          %1361 = vmatmul.mubr.f32.gmra.mrb[0].mxu0 %v1240
          %v1362 = vpop.f32.mrb[0].mxu0
          %v1363 = vadd.f32 0.0, %v1362
          %v1364 = vpop.f32.mrb[0].mxu0
          %1365 = vmatprep.mubr.f32.mxu0 0.0
          %1366 = vmatmul.mubr.f32.gmra.mrb[0].mxu0 %v1241
          %v1367 = vpop.f32.mrb[0].mxu0
          %v1368 = vadd.f32 0.0, %v1367
          %v1369 = vpop.f32.mrb[0].mxu0
          %1370 = vmatprep.mubr.f32.mxu0 0.0
          %1371 = vmatmul.mubr.f32.gmra.mrb[0].mxu0 %v1242
          %v1372 = vpop.f32.mrb[0].mxu0
          %v1373 = vadd.f32 0.0, %v1372
          %v1374 = vpop.f32.mrb[0].mxu0
          %1375 = vmatprep.mubr.f32.mxu0 0.0
          %1376 = vmatmul.mubr.f32.gmra.mrb[0].mxu0 %v1243
          %v1377 = vpop.f32.mrb[0].mxu0
          %v1378 = vadd.f32 0.0, %v1377
          %v1379 = vpop.f32.mrb[0].mxu0
          %1380 = vmatprep.mubr.f32.mxu0 0.0
          %1381 = vmatmul.mubr.f32.gmra.mrb[0].mxu0 %v1244
          %v1382 = vpop.f32.mrb[0].mxu0
          %v1383 = vadd.f32 0.0, %v1382
          %v1384 = vpop.f32.mrb[0].mxu0
          %1385 = vmatprep.mubr.f32.mxu0 0.0
          %1386 = vmatmul.mubr.f32.gmra.mrb[0].mxu0 %v1245
          %v1387 = vpop.f32.mrb[0].mxu0
          %v1388 = vadd.f32 0.0, %v1387
          %v1389 = vpop.f32.mrb[0].mxu0
          %1390 = vdwg.mxu0
          %v1391 = vxor.u32 %v1353, 2147483648
          %v1392 = vxor.u32 %v1358, 2147483648
          %v1393 = vxor.u32 %v1363, 2147483648
          %v1394 = vxor.u32 %v1368, 2147483648
          %v1395 = vxor.u32 %v1373, 2147483648
          %v1396 = vxor.u32 %v1378, 2147483648
          %v1397 = vxor.u32 %v1383, 2147483648
          %v1398 = vxor.u32 %v1388, 2147483648
          %v1399 = vmul.f32 %v1391, 1.442695
          %v1400 = vpow.pop %v1399
          %v1401 = vmul.f32 %v1392, 1.442695
          %v1402 = vpow.pop %v1401
          %v1403 = vmul.f32 %v1393, 1.442695
          %v1404 = vpow.pop %v1403
          %v1405 = vmul.f32 %v1394, 1.442695
          %v1406 = vpow.pop %v1405
          %v1407 = vmul.f32 %v1395, 1.442695
          %v1408 = vpow.pop %v1407
          %v1409 = vmul.f32 %v1396, 1.442695
          %v1410 = vpow.pop %v1409
          %v1411 = vmul.f32 %v1397, 1.442695
          %v1412 = vpow.pop %v1411
          %v1413 = vmul.f32 %v1398, 1.442695
          %v1414 = vpow.pop %v1413
          %v1415 = vadd.f32 %v1400, 1.0
          %v1416 = vadd.f32 %v1402, 1.0
          %v1417 = vadd.f32 %v1404, 1.0
          %v1418 = vadd.f32 %v1406, 1.0
          %v1419 = vadd.f32 %v1408, 1.0
          %v1420 = vadd.f32 %v1410, 1.0
          %v1421 = vadd.f32 %v1412, 1.0
          %v1422 = vadd.f32 %v1414, 1.0
          %v1423 = vrcp.pop %v1415
          %v1424 = vmul.f32 1.0, %v1423
          %v1425 = vrcp.pop %v1416
          %v1426 = vmul.f32 1.0, %v1425
          %v1427 = vrcp.pop %v1417
          %v1428 = vmul.f32 1.0, %v1427
          %v1429 = vrcp.pop %v1418
          %v1430 = vmul.f32 1.0, %v1429
          %v1431 = vrcp.pop %v1419
          %v1432 = vmul.f32 1.0, %v1431
          %v1433 = vrcp.pop %v1420
          %v1434 = vmul.f32 1.0, %v1433
          %v1435 = vrcp.pop %v1421
          %v1436 = vmul.f32 1.0, %v1435
          %v1437 = vrcp.pop %v1422
          %v1438 = vmul.f32 1.0, %v1437
          %v1439 = vmul.f32 %v1353, %v1424
          %v1440 = vmul.f32 %v1358, %v1426
          %v1441 = vmul.f32 %v1363, %v1428
          %v1442 = vmul.f32 %v1368, %v1430
          %v1443 = vmul.f32 %v1373, %v1432
          %v1444 = vmul.f32 %v1378, %v1434
          %v1445 = vmul.f32 %v1383, %v1436
          %v1446 = vmul.f32 %v1388, %v1438
          %v1447 = vpack.c.bf16 %v1440, %v1439
          %v1448 = vpack.c.bf16 %v1442, %v1441
          %v1449 = vpack.c.bf16 %v1444, %v1443
          %v1450 = vpack.c.bf16 %v1446, %v1445
          %1451 = vst [vmem:[#allocation3] sm:$0xff] %v1447
          %1452 = vst [vmem:[#allocation3 + $0x8] sm:$0xff] %v1448
          %1453 = vst [vmem:[#allocation3 + $0x10] sm:$0xff] %v1449
          %1454 = vst [vmem:[#allocation3 + $0x18] sm:$0xff] %v1450
          %1455 = vst [vmem:[#allocation2] sm:$0xff] 0.0
          %1456 = vst [vmem:[#allocation2 + $0x8] sm:$0xff] 0.0
          %1457 = vst [vmem:[#allocation2 + $0x10] sm:$0xff] 0.0
          %1458 = vst [vmem:[#allocation2 + $0x18] sm:$0xff] 0.0
          %1459 = vst [vmem:[#allocation2 + $0x20] sm:$0xff] 0.0
          %1460 = vst [vmem:[#allocation2 + $0x28] sm:$0xff] 0.0
          %1461 = vst [vmem:[#allocation2 + $0x30] sm:$0xff] 0.0
          %1462 = vst [vmem:[#allocation2 + $0x38] sm:$0xff] 0.0
        $region136: #{tpu_custom_call.1} parent=83 // pred_fallthru
          _
        %v1463 = vld [vmem:[%s716] sm:$0xff]
        %v1464 = vld [vmem:[%s716 + $0x8] sm:$0xff]
        %v1465 = vld [vmem:[%s716 + $0x10] sm:$0xff]
        %v1466 = vld [vmem:[%s716 + $0x18] sm:$0xff]
        %v1467 = vld [vmem:[%s716 + $0x20] sm:$0xff]
        %v1468 = vld [vmem:[%s716 + $0x28] sm:$0xff]
        %v1469 = vld [vmem:[%s716 + $0x30] sm:$0xff]
        %v1470 = vld [vmem:[%s716 + $0x38] sm:$0xff]
        %v1471 = vld [vmem:[%s716 + $0x40] sm:$0xff]
        %v1472 = vld [vmem:[%s716 + $0x48] sm:$0xff]
        %v1473 = vld [vmem:[%s716 + $0x50] sm:$0xff]
        %v1474 = vld [vmem:[%s716 + $0x58] sm:$0xff]
        %v1475 = vld [vmem:[%s716 + $0x60] sm:$0xff]
        %v1476 = vld [vmem:[%s716 + $0x68] sm:$0xff]
        %v1477 = vld [vmem:[%s716 + $0x70] sm:$0xff]
        %v1478 = vld [vmem:[%s716 + $0x78] sm:$0xff]
        %v1479 = vld [vmem:[%s716 + $0x80] sm:$0xff]
        %v1480 = vld [vmem:[%s716 + $0x88] sm:$0xff]
        %v1481 = vld [vmem:[%s716 + $0x90] sm:$0xff]
        %v1482 = vld [vmem:[%s716 + $0x98] sm:$0xff]
        %v1483 = vld [vmem:[%s716 + $0xa0] sm:$0xff]
        %v1484 = vld [vmem:[%s716 + $0xa8] sm:$0xff]
        %v1485 = vld [vmem:[%s716 + $0xb0] sm:$0xff]
        %v1486 = vld [vmem:[%s716 + $0xb8] sm:$0xff]
        %v1487 = vld [vmem:[%s716 + $0xc0] sm:$0xff]
        %v1488 = vld [vmem:[%s716 + $0xc8] sm:$0xff]
        %v1489 = vld [vmem:[%s716 + $0xd0] sm:$0xff]
        %v1490 = vld [vmem:[%s716 + $0xd8] sm:$0xff]
        %v1491 = vld [vmem:[%s716 + $0xe0] sm:$0xff]
        %v1492 = vld [vmem:[%s716 + $0xe8] sm:$0xff]
        %v1493 = vld [vmem:[%s716 + $0xf0] sm:$0xff]
        %v1494 = vld [vmem:[%s716 + $0xf8] sm:$0xff]
        %v1495 = vld [vmem:[%s722] sm:$0xff]
        %v1496 = vld [vmem:[%s722 + $0x8] sm:$0xff]
        %v1497 = vld [vmem:[%s722 + $0x10] sm:$0xff]
        %v1498 = vld [vmem:[%s722 + $0x18] sm:$0xff]
        %v1499 = vld [vmem:[%s722 + $0x20] sm:$0xff]
        %v1500 = vld [vmem:[%s722 + $0x28] sm:$0xff]
        %v1501 = vld [vmem:[%s722 + $0x30] sm:$0xff]
        %v1502 = vld [vmem:[%s722 + $0x38] sm:$0xff]
        %v1503 = vld [vmem:[%s722 + $0x40] sm:$0xff]
        %v1504 = vld [vmem:[%s722 + $0x48] sm:$0xff]
        %v1505 = vld [vmem:[%s722 + $0x50] sm:$0xff]
        %v1506 = vld [vmem:[%s722 + $0x58] sm:$0xff]
        %v1507 = vld [vmem:[%s722 + $0x60] sm:$0xff]
        %v1508 = vld [vmem:[%s722 + $0x68] sm:$0xff]
        %v1509 = vld [vmem:[%s722 + $0x70] sm:$0xff]
        %v1510 = vld [vmem:[%s722 + $0x78] sm:$0xff]
        %v1511 = vld [vmem:[%s722 + $0x80] sm:$0xff]
        %v1512 = vld [vmem:[%s722 + $0x88] sm:$0xff]
        %v1513 = vld [vmem:[%s722 + $0x90] sm:$0xff]
        %v1514 = vld [vmem:[%s722 + $0x98] sm:$0xff]
        %v1515 = vld [vmem:[%s722 + $0xa0] sm:$0xff]
        %v1516 = vld [vmem:[%s722 + $0xa8] sm:$0xff]
        %v1517 = vld [vmem:[%s722 + $0xb0] sm:$0xff]
        %v1518 = vld [vmem:[%s722 + $0xb8] sm:$0xff]
        %v1519 = vld [vmem:[%s722 + $0xc0] sm:$0xff]
        %v1520 = vld [vmem:[%s722 + $0xc8] sm:$0xff]
        %v1521 = vld [vmem:[%s722 + $0xd0] sm:$0xff]
        %v1522 = vld [vmem:[%s722 + $0xd8] sm:$0xff]
        %v1523 = vld [vmem:[%s722 + $0xe0] sm:$0xff]
        %v1524 = vld [vmem:[%s722 + $0xe8] sm:$0xff]
        %v1525 = vld [vmem:[%s722 + $0xf0] sm:$0xff]
        %v1526 = vld [vmem:[%s722 + $0xf8] sm:$0xff]
        %v1527 = vld [vmem:[#allocation5] sm:$0xff]
        %v1528 = vld [vmem:[#allocation5 + $0x8] sm:$0xff]
        %v1529 = vld [vmem:[#allocation5 + $0x10] sm:$0xff]
        %v1530 = vld [vmem:[#allocation5 + $0x18] sm:$0xff]
        %v1531 = vld [vmem:[#allocation5 + $0x20] sm:$0xff]
        %v1532 = vld [vmem:[#allocation5 + $0x28] sm:$0xff]
        %v1533 = vld [vmem:[#allocation5 + $0x30] sm:$0xff]
        %v1534 = vld [vmem:[#allocation5 + $0x38] sm:$0xff]
        %v1535 = vld [vmem:[#allocation5 + $0x40] sm:$0xff]
        %v1536 = vld [vmem:[#allocation5 + $0x48] sm:$0xff]
        %v1537 = vld [vmem:[#allocation5 + $0x50] sm:$0xff]
        %v1538 = vld [vmem:[#allocation5 + $0x58] sm:$0xff]
        %v1539 = vld [vmem:[#allocation5 + $0x60] sm:$0xff]
        %v1540 = vld [vmem:[#allocation5 + $0x68] sm:$0xff]
        %v1541 = vld [vmem:[#allocation5 + $0x70] sm:$0xff]
        %v1542 = vld [vmem:[#allocation5 + $0x78] sm:$0xff]
        %v1543 = vld [vmem:[#allocation5 + $0x80] sm:$0xff]
        %v1544 = vld [vmem:[#allocation5 + $0x88] sm:$0xff]
        %v1545 = vld [vmem:[#allocation5 + $0x90] sm:$0xff]
        %v1546 = vld [vmem:[#allocation5 + $0x98] sm:$0xff]
        %v1547 = vld [vmem:[#allocation5 + $0xa0] sm:$0xff]
        %v1548 = vld [vmem:[#allocation5 + $0xa8] sm:$0xff]
        %v1549 = vld [vmem:[#allocation5 + $0xb0] sm:$0xff]
        %v1550 = vld [vmem:[#allocation5 + $0xb8] sm:$0xff]
        %v1551 = vld [vmem:[#allocation5 + $0xc0] sm:$0xff]
        %v1552 = vld [vmem:[#allocation5 + $0xc8] sm:$0xff]
        %v1553 = vld [vmem:[#allocation5 + $0xd0] sm:$0xff]
        %v1554 = vld [vmem:[#allocation5 + $0xd8] sm:$0xff]
        %v1555 = vld [vmem:[#allocation5 + $0xe0] sm:$0xff]
        %v1556 = vld [vmem:[#allocation5 + $0xe8] sm:$0xff]
        %v1557 = vld [vmem:[#allocation5 + $0xf0] sm:$0xff]
        %v1558 = vld [vmem:[#allocation5 + $0xf8] sm:$0xff]
        %1559 = vset.pattern.permute.xlu0 0
        %1560 = vperm.xlu0 %1559, %v1495
        %v1561 = vpop.permute.xlu0 %1560
        %1562 = vset.pattern.permute.xlu0 0
        %1563 = vperm.xlu0 %1562, %v1496
        %v1564 = vpop.permute.xlu0 %1563
        %1565 = vset.pattern.permute.xlu0 0
        %1566 = vperm.xlu0 %1565, %v1497
        %v1567 = vpop.permute.xlu0 %1566
        %1568 = vset.pattern.permute.xlu0 0
        %1569 = vperm.xlu0 %1568, %v1498
        %v1570 = vpop.permute.xlu0 %1569
        %1571 = vset.pattern.permute.xlu0 0
        %1572 = vperm.xlu0 %1571, %v1499
        %v1573 = vpop.permute.xlu0 %1572
        %1574 = vset.pattern.permute.xlu0 0
        %1575 = vperm.xlu0 %1574, %v1500
        %v1576 = vpop.permute.xlu0 %1575
        %1577 = vset.pattern.permute.xlu0 0
        %1578 = vperm.xlu0 %1577, %v1501
        %v1579 = vpop.permute.xlu0 %1578
        %1580 = vset.pattern.permute.xlu0 0
        %1581 = vperm.xlu0 %1580, %v1502
        %v1582 = vpop.permute.xlu0 %1581
        %1583 = vset.pattern.permute.xlu0 0
        %1584 = vperm.xlu0 %1583, %v1503
        %v1585 = vpop.permute.xlu0 %1584
        %1586 = vset.pattern.permute.xlu0 0
        %1587 = vperm.xlu0 %1586, %v1504
        %v1588 = vpop.permute.xlu0 %1587
        %1589 = vset.pattern.permute.xlu0 0
        %1590 = vperm.xlu0 %1589, %v1505
        %v1591 = vpop.permute.xlu0 %1590
        %1592 = vset.pattern.permute.xlu0 0
        %1593 = vperm.xlu0 %1592, %v1506
        %v1594 = vpop.permute.xlu0 %1593
        %1595 = vset.pattern.permute.xlu0 0
        %1596 = vperm.xlu0 %1595, %v1507
        %v1597 = vpop.permute.xlu0 %1596
        %1598 = vset.pattern.permute.xlu0 0
        %1599 = vperm.xlu0 %1598, %v1508
        %v1600 = vpop.permute.xlu0 %1599
        %1601 = vset.pattern.permute.xlu0 0
        %1602 = vperm.xlu0 %1601, %v1509
        %v1603 = vpop.permute.xlu0 %1602
        %1604 = vset.pattern.permute.xlu0 0
        %1605 = vperm.xlu0 %1604, %v1510
        %v1606 = vpop.permute.xlu0 %1605
        %1607 = vset.pattern.permute.xlu0 0
        %1608 = vperm.xlu0 %1607, %v1511
        %v1609 = vpop.permute.xlu0 %1608
        %1610 = vset.pattern.permute.xlu0 0
        %1611 = vperm.xlu0 %1610, %v1512
        %v1612 = vpop.permute.xlu0 %1611
        %1613 = vset.pattern.permute.xlu0 0
        %1614 = vperm.xlu0 %1613, %v1513
        %v1615 = vpop.permute.xlu0 %1614
        %1616 = vset.pattern.permute.xlu0 0
        %1617 = vperm.xlu0 %1616, %v1514
        %v1618 = vpop.permute.xlu0 %1617
        %1619 = vset.pattern.permute.xlu0 0
        %1620 = vperm.xlu0 %1619, %v1515
        %v1621 = vpop.permute.xlu0 %1620
        %1622 = vset.pattern.permute.xlu0 0
        %1623 = vperm.xlu0 %1622, %v1516
        %v1624 = vpop.permute.xlu0 %1623
        %1625 = vset.pattern.permute.xlu0 0
        %1626 = vperm.xlu0 %1625, %v1517
        %v1627 = vpop.permute.xlu0 %1626
        %1628 = vset.pattern.permute.xlu0 0
        %1629 = vperm.xlu0 %1628, %v1518
        %v1630 = vpop.permute.xlu0 %1629
        %1631 = vset.pattern.permute.xlu0 0
        %1632 = vperm.xlu0 %1631, %v1519
        %v1633 = vpop.permute.xlu0 %1632
        %1634 = vset.pattern.permute.xlu0 0
        %1635 = vperm.xlu0 %1634, %v1520
        %v1636 = vpop.permute.xlu0 %1635
        %1637 = vset.pattern.permute.xlu0 0
        %1638 = vperm.xlu0 %1637, %v1521
        %v1639 = vpop.permute.xlu0 %1638
        %1640 = vset.pattern.permute.xlu0 0
        %1641 = vperm.xlu0 %1640, %v1522
        %v1642 = vpop.permute.xlu0 %1641
        %1643 = vset.pattern.permute.xlu0 0
        %1644 = vperm.xlu0 %1643, %v1523
        %v1645 = vpop.permute.xlu0 %1644
        %1646 = vset.pattern.permute.xlu0 0
        %1647 = vperm.xlu0 %1646, %v1524
        %v1648 = vpop.permute.xlu0 %1647
        %1649 = vset.pattern.permute.xlu0 0
        %1650 = vperm.xlu0 %1649, %v1525
        %v1651 = vpop.permute.xlu0 %1650
        %1652 = vset.pattern.permute.xlu0 0
        %1653 = vperm.xlu0 %1652, %v1526
        %v1654 = vpop.permute.xlu0 %1653
        %vm1655 = vcmp.eq.s32.totalorder %v1561, %v1527
        %vm1656 = vcmp.eq.s32.totalorder %v1564, %v1528
        %vm1657 = vcmp.eq.s32.totalorder %v1567, %v1529
        %vm1658 = vcmp.eq.s32.totalorder %v1570, %v1530
        %vm1659 = vcmp.eq.s32.totalorder %v1573, %v1531
        %vm1660 = vcmp.eq.s32.totalorder %v1576, %v1532
        %vm1661 = vcmp.eq.s32.totalorder %v1579, %v1533
        %vm1662 = vcmp.eq.s32.totalorder %v1582, %v1534
        %vm1663 = vcmp.eq.s32.totalorder %v1585, %v1535
        %vm1664 = vcmp.eq.s32.totalorder %v1588, %v1536
        %vm1665 = vcmp.eq.s32.totalorder %v1591, %v1537
        %vm1666 = vcmp.eq.s32.totalorder %v1594, %v1538
        %vm1667 = vcmp.eq.s32.totalorder %v1597, %v1539
        %vm1668 = vcmp.eq.s32.totalorder %v1600, %v1540
        %vm1669 = vcmp.eq.s32.totalorder %v1603, %v1541
        %vm1670 = vcmp.eq.s32.totalorder %v1606, %v1542
        %vm1671 = vcmp.eq.s32.totalorder %v1609, %v1543
        %vm1672 = vcmp.eq.s32.totalorder %v1612, %v1544
        %vm1673 = vcmp.eq.s32.totalorder %v1615, %v1545
        %vm1674 = vcmp.eq.s32.totalorder %v1618, %v1546
        %vm1675 = vcmp.eq.s32.totalorder %v1621, %v1547
        %vm1676 = vcmp.eq.s32.totalorder %v1624, %v1548
        %vm1677 = vcmp.eq.s32.totalorder %v1627, %v1549
        %vm1678 = vcmp.eq.s32.totalorder %v1630, %v1550
        %vm1679 = vcmp.eq.s32.totalorder %v1633, %v1551
        %vm1680 = vcmp.eq.s32.totalorder %v1636, %v1552
        %vm1681 = vcmp.eq.s32.totalorder %v1639, %v1553
        %vm1682 = vcmp.eq.s32.totalorder %v1642, %v1554
        %vm1683 = vcmp.eq.s32.totalorder %v1645, %v1555
        %vm1684 = vcmp.eq.s32.totalorder %v1648, %v1556
        %vm1685 = vcmp.eq.s32.totalorder %v1651, %v1557
        %vm1686 = vcmp.eq.s32.totalorder %v1654, %v1558
        %v1687 = vsel %vm1655, 1, 0
        %v1688 = vsel %vm1656, 1, 0
        %v1689 = vsel %vm1657, 1, 0
        %v1690 = vsel %vm1658, 1, 0
        %v1691 = vsel %vm1659, 1, 0
        %v1692 = vsel %vm1660, 1, 0
        %v1693 = vsel %vm1661, 1, 0
        %v1694 = vsel %vm1662, 1, 0
        %v1695 = vsel %vm1663, 1, 0
        %v1696 = vsel %vm1664, 1, 0
        %v1697 = vsel %vm1665, 1, 0
        %v1698 = vsel %vm1666, 1, 0
        %v1699 = vsel %vm1667, 1, 0
        %v1700 = vsel %vm1668, 1, 0
        %v1701 = vsel %vm1669, 1, 0
        %v1702 = vsel %vm1670, 1, 0
        %v1703 = vsel %vm1671, 1, 0
        %v1704 = vsel %vm1672, 1, 0
        %v1705 = vsel %vm1673, 1, 0
        %v1706 = vsel %vm1674, 1, 0
        %v1707 = vsel %vm1675, 1, 0
        %v1708 = vsel %vm1676, 1, 0
        %v1709 = vsel %vm1677, 1, 0
        %v1710 = vsel %vm1678, 1, 0
        %v1711 = vsel %vm1679, 1, 0
        %v1712 = vsel %vm1680, 1, 0
        %v1713 = vsel %vm1681, 1, 0
        %v1714 = vsel %vm1682, 1, 0
        %v1715 = vsel %vm1683, 1, 0
        %v1716 = vsel %vm1684, 1, 0
        %v1717 = vsel %vm1685, 1, 0
        %v1718 = vsel %vm1686, 1, 0
        %v1719 = vcvt.s32.f32 %v1687
        %v1720 = vcvt.s32.f32 %v1688
        %v1721 = vcvt.s32.f32 %v1689
        %v1722 = vcvt.s32.f32 %v1690
        %v1723 = vcvt.s32.f32 %v1691
        %v1724 = vcvt.s32.f32 %v1692
        %v1725 = vcvt.s32.f32 %v1693
        %v1726 = vcvt.s32.f32 %v1694
        %v1727 = vcvt.s32.f32 %v1695
        %v1728 = vcvt.s32.f32 %v1696
        %v1729 = vcvt.s32.f32 %v1697
        %v1730 = vcvt.s32.f32 %v1698
        %v1731 = vcvt.s32.f32 %v1699
        %v1732 = vcvt.s32.f32 %v1700
        %v1733 = vcvt.s32.f32 %v1701
        %v1734 = vcvt.s32.f32 %v1702
        %v1735 = vcvt.s32.f32 %v1703
        %v1736 = vcvt.s32.f32 %v1704
        %v1737 = vcvt.s32.f32 %v1705
        %v1738 = vcvt.s32.f32 %v1706
        %v1739 = vcvt.s32.f32 %v1707
        %v1740 = vcvt.s32.f32 %v1708
        %v1741 = vcvt.s32.f32 %v1709
        %v1742 = vcvt.s32.f32 %v1710
        %v1743 = vcvt.s32.f32 %v1711
        %v1744 = vcvt.s32.f32 %v1712
        %v1745 = vcvt.s32.f32 %v1713
        %v1746 = vcvt.s32.f32 %v1714
        %v1747 = vcvt.s32.f32 %v1715
        %v1748 = vcvt.s32.f32 %v1716
        %v1749 = vcvt.s32.f32 %v1717
        %v1750 = vcvt.s32.f32 %v1718
        %v1751 = vpack.c.bf16 %v1720, %v1719
        %v1752 = vpack.c.bf16 %v1722, %v1721
        %v1753 = vpack.c.bf16 %v1724, %v1723
        %v1754 = vpack.c.bf16 %v1726, %v1725
        %v1755 = vpack.c.bf16 %v1728, %v1727
        %v1756 = vpack.c.bf16 %v1730, %v1729
        %v1757 = vpack.c.bf16 %v1732, %v1731
        %v1758 = vpack.c.bf16 %v1734, %v1733
        %v1759 = vpack.c.bf16 %v1736, %v1735
        %v1760 = vpack.c.bf16 %v1738, %v1737
        %v1761 = vpack.c.bf16 %v1740, %v1739
        %v1762 = vpack.c.bf16 %v1742, %v1741
        %v1763 = vpack.c.bf16 %v1744, %v1743
        %v1764 = vpack.c.bf16 %v1746, %v1745
        %v1765 = vpack.c.bf16 %v1748, %v1747
        %v1766 = vpack.c.bf16 %v1750, %v1749
        %v1767 = vld [vmem:[#allocation3] sm:$0xff]
        %v1768 = vld [vmem:[#allocation3 + $0x8] sm:$0xff]
        %v1769 = vld [vmem:[#allocation3 + $0x10] sm:$0xff]
        %v1770 = vld [vmem:[#allocation3 + $0x18] sm:$0xff]
        %vm1771 = vcmask 523264
        %v1773 = vsel %vm1771, %v1751, 0
        %v1776 = vsel %vm1771, %v1752, 0
        %v1779 = vsel %vm1771, %v1753, 0
        %v1782 = vsel %vm1771, %v1754, 0
        %v1785 = vsel %vm1771, %v1755, 0
        %v1788 = vsel %vm1771, %v1756, 0
        %v1791 = vsel %vm1771, %v1757, 0
        %v1794 = vsel %vm1771, %v1758, 0
        %v1797 = vsel %vm1771, %v1759, 0
        %v1800 = vsel %vm1771, %v1760, 0
        %v1803 = vsel %vm1771, %v1761, 0
        %v1806 = vsel %vm1771, %v1762, 0
        %v1809 = vsel %vm1771, %v1763, 0
        %v1812 = vsel %vm1771, %v1764, 0
        %v1815 = vsel %vm1771, %v1765, 0
        %v1818 = vsel %vm1771, %v1766, 0
        %1820 = vmatprep.subr.bf16.mxu0 0
        %1821 = vmatpush1.bf16.msra.mxu0 %v1767
        %1822 = vmatprep.subr.bf16.mxu0 0
        %1823 = vmatpush1.bf16.msra.mxu0 %v1768
        %1824 = vmatprep.subr.bf16.mxu0 0
        %1825 = vmatpush1.bf16.msra.mxu0 %v1769
        %1826 = vmatprep.subr.bf16.mxu0 0
        %1827 = vmatpush1.bf16.msra.mxu0 %v1770
        %1828 = vmatprep.subr.bf16.mxu0 0
        %1829 = vmatpush1.bf16.msra.mxu0 0
        %1830 = vmatprep.subr.bf16.mxu0 0
        %1831 = vmatpush1.bf16.msra.mxu0 0
        %1832 = vmatprep.subr.bf16.mxu0 0
        %1833 = vmatpush1.bf16.msra.mxu0 0
        %1834 = vmatprep.subr.bf16.mxu0 0
        %1835 = vmatpush1.bf16.msra.mxu0 0
        %1836 = vmatprep.subr.bf16.mxu0 0
        %1837 = vmatpush1.bf16.msra.mxu0 0
        %1838 = vmatprep.subr.bf16.mxu0 0
        %1839 = vmatpush1.bf16.msra.mxu0 0
        %1840 = vmatprep.subr.bf16.mxu0 0
        %1841 = vmatpush1.bf16.msra.mxu0 0
        %1842 = vmatprep.subr.bf16.mxu0 0
        %1843 = vmatpush1.bf16.msra.mxu0 0
        %1844 = vmatprep.subr.bf16.mxu0 0
        %1845 = vmatpush1.bf16.msra.mxu0 0
        %1846 = vmatprep.subr.bf16.mxu0 0
        %1847 = vmatpush1.bf16.msra.mxu0 0
        %1848 = vmatprep.subr.bf16.mxu0 0
        %1849 = vmatpush1.bf16.msra.mxu0 0
        %1850 = vmatprep.subr.bf16.mxu0 0
        %1851 = vmatpush1.bf16.msra.mxu0 0
        %1852 = vmatprep.mubr.bf16.mxu0 0
        %1853 = vmatmul.mubr.bf16.gmra.mrb[0].mxu0 %v1773
        %v1854 = vpop.f32.mrb[0].mxu0
        %v1855 = vadd.f32 0.0, %v1854
        %v1856 = vpop.f32.mrb[0].mxu0
        %v1857 = vpop.f32.mrb[0].mxu0
        %v1858 = vadd.f32 0.0, %v1857
        %v1859 = vpop.f32.mrb[0].mxu0
        %1860 = vmatprep.mubr.bf16.mxu0 0
        %1861 = vmatmul.mubr.bf16.gmra.mrb[0].mxu0 %v1776
        %v1862 = vpop.f32.mrb[0].mxu0
        %v1863 = vadd.f32 0.0, %v1862
        %v1864 = vpop.f32.mrb[0].mxu0
        %v1865 = vpop.f32.mrb[0].mxu0
        %v1866 = vadd.f32 0.0, %v1865
        %v1867 = vpop.f32.mrb[0].mxu0
        %1868 = vmatprep.mubr.bf16.mxu0 0
        %1869 = vmatmul.mubr.bf16.gmra.mrb[0].mxu0 %v1779
        %v1870 = vpop.f32.mrb[0].mxu0
        %v1871 = vadd.f32 0.0, %v1870
        %v1872 = vpop.f32.mrb[0].mxu0
        %v1873 = vpop.f32.mrb[0].mxu0
        %v1874 = vadd.f32 0.0, %v1873
        %v1875 = vpop.f32.mrb[0].mxu0
        %1876 = vmatprep.mubr.bf16.mxu0 0
        %1877 = vmatmul.mubr.bf16.gmra.mrb[0].mxu0 %v1782
        %v1878 = vpop.f32.mrb[0].mxu0
        %v1879 = vadd.f32 0.0, %v1878
        %v1880 = vpop.f32.mrb[0].mxu0
        %v1881 = vpop.f32.mrb[0].mxu0
        %v1882 = vadd.f32 0.0, %v1881
        %v1883 = vpop.f32.mrb[0].mxu0
        %1884 = vmatprep.mubr.bf16.mxu0 0
        %1885 = vmatmul.mubr.bf16.gmra.mrb[0].mxu0 %v1785
        %v1886 = vpop.f32.mrb[0].mxu0
        %v1887 = vadd.f32 0.0, %v1886
        %v1888 = vpop.f32.mrb[0].mxu0
        %v1889 = vpop.f32.mrb[0].mxu0
        %v1890 = vadd.f32 0.0, %v1889
        %v1891 = vpop.f32.mrb[0].mxu0
        %1892 = vmatprep.mubr.bf16.mxu0 0
        %1893 = vmatmul.mubr.bf16.gmra.mrb[0].mxu0 %v1788
        %v1894 = vpop.f32.mrb[0].mxu0
        %v1895 = vadd.f32 0.0, %v1894
        %v1896 = vpop.f32.mrb[0].mxu0
        %v1897 = vpop.f32.mrb[0].mxu0
        %v1898 = vadd.f32 0.0, %v1897
        %v1899 = vpop.f32.mrb[0].mxu0
        %1900 = vmatprep.mubr.bf16.mxu0 0
        %1901 = vmatmul.mubr.bf16.gmra.mrb[0].mxu0 %v1791
        %v1902 = vpop.f32.mrb[0].mxu0
        %v1903 = vadd.f32 0.0, %v1902
        %v1904 = vpop.f32.mrb[0].mxu0
        %v1905 = vpop.f32.mrb[0].mxu0
        %v1906 = vadd.f32 0.0, %v1905
        %v1907 = vpop.f32.mrb[0].mxu0
        %1908 = vmatprep.mubr.bf16.mxu0 0
        %1909 = vmatmul.mubr.bf16.gmra.mrb[0].mxu0 %v1794
        %v1910 = vpop.f32.mrb[0].mxu0
        %v1911 = vadd.f32 0.0, %v1910
        %v1912 = vpop.f32.mrb[0].mxu0
        %v1913 = vpop.f32.mrb[0].mxu0
        %v1914 = vadd.f32 0.0, %v1913
        %v1915 = vpop.f32.mrb[0].mxu0
        %1916 = vmatprep.mubr.bf16.mxu0 0
        %1917 = vmatmul.mubr.bf16.gmra.mrb[0].mxu0 %v1797
        %v1918 = vpop.f32.mrb[0].mxu0
        %v1919 = vadd.f32 0.0, %v1918
        %v1920 = vpop.f32.mrb[0].mxu0
        %v1921 = vpop.f32.mrb[0].mxu0
        %v1922 = vadd.f32 0.0, %v1921
        %v1923 = vpop.f32.mrb[0].mxu0
        %1924 = vmatprep.mubr.bf16.mxu0 0
        %1925 = vmatmul.mubr.bf16.gmra.mrb[0].mxu0 %v1800
        %v1926 = vpop.f32.mrb[0].mxu0
        %v1927 = vadd.f32 0.0, %v1926
        %v1928 = vpop.f32.mrb[0].mxu0
        %v1929 = vpop.f32.mrb[0].mxu0
        %v1930 = vadd.f32 0.0, %v1929
        %v1931 = vpop.f32.mrb[0].mxu0
        %1932 = vmatprep.mubr.bf16.mxu0 0
        %1933 = vmatmul.mubr.bf16.gmra.mrb[0].mxu0 %v1803
        %v1934 = vpop.f32.mrb[0].mxu0
        %v1935 = vadd.f32 0.0, %v1934
        %v1936 = vpop.f32.mrb[0].mxu0
        %v1937 = vpop.f32.mrb[0].mxu0
        %v1938 = vadd.f32 0.0, %v1937
        %v1939 = vpop.f32.mrb[0].mxu0
        %1940 = vmatprep.mubr.bf16.mxu0 0
        %1941 = vmatmul.mubr.bf16.gmra.mrb[0].mxu0 %v1806
        %v1942 = vpop.f32.mrb[0].mxu0
        %v1943 = vadd.f32 0.0, %v1942
        %v1944 = vpop.f32.mrb[0].mxu0
        %v1945 = vpop.f32.mrb[0].mxu0
        %v1946 = vadd.f32 0.0, %v1945
        %v1947 = vpop.f32.mrb[0].mxu0
        %1948 = vmatprep.mubr.bf16.mxu0 0
        %1949 = vmatmul.mubr.bf16.gmra.mrb[0].mxu0 %v1809
        %v1950 = vpop.f32.mrb[0].mxu0
        %v1951 = vadd.f32 0.0, %v1950
        %v1952 = vpop.f32.mrb[0].mxu0
        %v1953 = vpop.f32.mrb[0].mxu0
        %v1954 = vadd.f32 0.0, %v1953
        %v1955 = vpop.f32.mrb[0].mxu0
        %1956 = vmatprep.mubr.bf16.mxu0 0
        %1957 = vmatmul.mubr.bf16.gmra.mrb[0].mxu0 %v1812
        %v1958 = vpop.f32.mrb[0].mxu0
        %v1959 = vadd.f32 0.0, %v1958
        %v1960 = vpop.f32.mrb[0].mxu0
        %v1961 = vpop.f32.mrb[0].mxu0
        %v1962 = vadd.f32 0.0, %v1961
        %v1963 = vpop.f32.mrb[0].mxu0
        %1964 = vmatprep.mubr.bf16.mxu0 0
        %1965 = vmatmul.mubr.bf16.gmra.mrb[0].mxu0 %v1815
        %v1966 = vpop.f32.mrb[0].mxu0
        %v1967 = vadd.f32 0.0, %v1966
        %v1968 = vpop.f32.mrb[0].mxu0
        %v1969 = vpop.f32.mrb[0].mxu0
        %v1970 = vadd.f32 0.0, %v1969
        %v1971 = vpop.f32.mrb[0].mxu0
        %1972 = vmatprep.mubr.bf16.mxu0 0
        %1973 = vmatmul.mubr.bf16.gmra.mrb[0].mxu0 %v1818
        %v1974 = vpop.f32.mrb[0].mxu0
        %v1975 = vadd.f32 0.0, %v1974
        %v1976 = vpop.f32.mrb[0].mxu0
        %v1977 = vpop.f32.mrb[0].mxu0
        %v1978 = vadd.f32 0.0, %v1977
        %v1979 = vpop.f32.mrb[0].mxu0
        %1980 = vdwg.mxu0
        %v1981 = vmul.f32 %v1855, %v1463
        %v1982 = vmul.f32 %v1858, %v1464
        %v1983 = vmul.f32 %v1863, %v1465
        %v1984 = vmul.f32 %v1866, %v1466
        %v1985 = vmul.f32 %v1871, %v1467
        %v1986 = vmul.f32 %v1874, %v1468
        %v1987 = vmul.f32 %v1879, %v1469
        %v1988 = vmul.f32 %v1882, %v1470
        %v1989 = vmul.f32 %v1887, %v1471
        %v1990 = vmul.f32 %v1890, %v1472
        %v1991 = vmul.f32 %v1895, %v1473
        %v1992 = vmul.f32 %v1898, %v1474
        %v1993 = vmul.f32 %v1903, %v1475
        %v1994 = vmul.f32 %v1906, %v1476
        %v1995 = vmul.f32 %v1911, %v1477
        %v1996 = vmul.f32 %v1914, %v1478
        %v1997 = vmul.f32 %v1919, %v1479
        %v1998 = vmul.f32 %v1922, %v1480
        %v1999 = vmul.f32 %v1927, %v1481
        %v2000 = vmul.f32 %v1930, %v1482
        %v2001 = vmul.f32 %v1935, %v1483
        %v2002 = vmul.f32 %v1938, %v1484
        %v2003 = vmul.f32 %v1943, %v1485
        %v2004 = vmul.f32 %v1946, %v1486
        %v2005 = vmul.f32 %v1951, %v1487
        %v2006 = vmul.f32 %v1954, %v1488
        %v2007 = vmul.f32 %v1959, %v1489
        %v2008 = vmul.f32 %v1962, %v1490
        %v2009 = vmul.f32 %v1967, %v1491
        %v2010 = vmul.f32 %v1970, %v1492
        %v2011 = vmul.f32 %v1975, %v1493
        %v2012 = vmul.f32 %v1978, %v1494
        %v2013 = vld [vmem:[%s618] sm:$0x3]
        %v2014 = vld [vmem:[#allocation6] sm:$0xff]
        %v2015 = vld [vmem:[#allocation6 + $0x8] sm:$0xff]
        %v2016 = vld [vmem:[#allocation6 + $0x10] sm:$0xff]
        %v2017 = vld [vmem:[#allocation6 + $0x18] sm:$0xff]
        %v2018 = vld [vmem:[#allocation6 + $0x20] sm:$0xff]
        %v2019 = vld [vmem:[#allocation6 + $0x28] sm:$0xff]
        %v2020 = vld [vmem:[#allocation6 + $0x30] sm:$0xff]
        %v2021 = vld [vmem:[#allocation6 + $0x38] sm:$0xff]
        %v2022 = vld [vmem:[#allocation6 + $0x40] sm:$0xff]
        %v2023 = vld [vmem:[#allocation6 + $0x48] sm:$0xff]
        %v2024 = vld [vmem:[#allocation6 + $0x50] sm:$0xff]
        %v2025 = vld [vmem:[#allocation6 + $0x58] sm:$0xff]
        %v2026 = vld [vmem:[#allocation6 + $0x60] sm:$0xff]
        %v2027 = vld [vmem:[#allocation6 + $0x68] sm:$0xff]
        %v2028 = vld [vmem:[#allocation6 + $0x70] sm:$0xff]
        %v2029 = vld [vmem:[#allocation6 + $0x78] sm:$0xff]
        %v2030 = vlaneseq
        %v2031 = vshrl.u32 %v2030, 7
        %v2032 = vsub.s32 0, %v2031
        %v2033 = vrot.slane %v2013, %v2032
        %v2034 = vlaneseq
        %v2035 = vshrl.u32 %v2034, 7
        %v2036 = vsub.s32 1, %v2035
        %v2037 = vrot.slane %v2013, %v2036
        %vm2038 = vcmp.eq.s32.totalorder %v2033, %v2014
        %vm2039 = vcmp.eq.s32.totalorder %v2037, %v2015
        %vm2040 = vcmp.eq.s32.totalorder %v2033, %v2016
        %vm2041 = vcmp.eq.s32.totalorder %v2037, %v2017
        %vm2042 = vcmp.eq.s32.totalorder %v2033, %v2018
        %vm2043 = vcmp.eq.s32.totalorder %v2037, %v2019
        %vm2044 = vcmp.eq.s32.totalorder %v2033, %v2020
        %vm2045 = vcmp.eq.s32.totalorder %v2037, %v2021
        %vm2046 = vcmp.eq.s32.totalorder %v2033, %v2022
        %vm2047 = vcmp.eq.s32.totalorder %v2037, %v2023
        %vm2048 = vcmp.eq.s32.totalorder %v2033, %v2024
        %vm2049 = vcmp.eq.s32.totalorder %v2037, %v2025
        %vm2050 = vcmp.eq.s32.totalorder %v2033, %v2026
        %vm2051 = vcmp.eq.s32.totalorder %v2037, %v2027
        %vm2052 = vcmp.eq.s32.totalorder %v2033, %v2028
        %vm2053 = vcmp.eq.s32.totalorder %v2037, %v2029
        %v2054 = vsel %vm2038, 1, 0
        %v2055 = vsel %vm2039, 1, 0
        %v2056 = vsel %vm2040, 1, 0
        %v2057 = vsel %vm2041, 1, 0
        %v2058 = vsel %vm2042, 1, 0
        %v2059 = vsel %vm2043, 1, 0
        %v2060 = vsel %vm2044, 1, 0
        %v2061 = vsel %vm2045, 1, 0
        %v2062 = vsel %vm2046, 1, 0
        %v2063 = vsel %vm2047, 1, 0
        %v2064 = vsel %vm2048, 1, 0
        %v2065 = vsel %vm2049, 1, 0
        %v2066 = vsel %vm2050, 1, 0
        %v2067 = vsel %vm2051, 1, 0
        %v2068 = vsel %vm2052, 1, 0
        %v2069 = vsel %vm2053, 1, 0
        %v2070 = vcvt.s32.f32 %v2054
        %v2071 = vcvt.s32.f32 %v2055
        %v2072 = vcvt.s32.f32 %v2056
        %v2073 = vcvt.s32.f32 %v2057
        %v2074 = vcvt.s32.f32 %v2058
        %v2075 = vcvt.s32.f32 %v2059
        %v2076 = vcvt.s32.f32 %v2060
        %v2077 = vcvt.s32.f32 %v2061
        %v2078 = vcvt.s32.f32 %v2062
        %v2079 = vcvt.s32.f32 %v2063
        %v2080 = vcvt.s32.f32 %v2064
        %v2081 = vcvt.s32.f32 %v2065
        %v2082 = vcvt.s32.f32 %v2066
        %v2083 = vcvt.s32.f32 %v2067
        %v2084 = vcvt.s32.f32 %v2068
        %v2085 = vcvt.s32.f32 %v2069
        %v2086 = vpack.c.bf16 %v2072, %v2070
        %v2087 = vpack.c.bf16 %v2073, %v2071
        %v2088 = vpack.c.bf16 %v2076, %v2074
        %v2089 = vpack.c.bf16 %v2077, %v2075
        %v2090 = vpack.c.bf16 %v2080, %v2078
        %v2091 = vpack.c.bf16 %v2081, %v2079
        %v2092 = vpack.c.bf16 %v2084, %v2082
        %v2093 = vpack.c.bf16 %v2085, %v2083
        %v2094 = vld [vmem:[#allocation2] sm:$0xff]
        %v2095 = vld [vmem:[#allocation2 + $0x8] sm:$0xff]
        %v2096 = vld [vmem:[#allocation2 + $0x10] sm:$0xff]
        %v2097 = vld [vmem:[#allocation2 + $0x18] sm:$0xff]
        %v2098 = vld [vmem:[#allocation2 + $0x20] sm:$0xff]
        %v2099 = vld [vmem:[#allocation2 + $0x28] sm:$0xff]
        %v2100 = vld [vmem:[#allocation2 + $0x30] sm:$0xff]
        %v2101 = vld [vmem:[#allocation2 + $0x38] sm:$0xff]
        %v2102 = vpack.c.bf16 %v1982, %v1981
        %v2103 = vpack.c.bf16 %v1984, %v1983
        %v2104 = vpack.c.bf16 %v1986, %v1985
        %v2105 = vpack.c.bf16 %v1988, %v1987
        %v2106 = vpack.c.bf16 %v1990, %v1989
        %v2107 = vpack.c.bf16 %v1992, %v1991
        %v2108 = vpack.c.bf16 %v1994, %v1993
        %v2109 = vpack.c.bf16 %v1996, %v1995
        %v2110 = vpack.c.bf16 %v1998, %v1997
        %v2111 = vpack.c.bf16 %v2000, %v1999
        %v2112 = vpack.c.bf16 %v2002, %v2001
        %v2113 = vpack.c.bf16 %v2004, %v2003
        %v2114 = vpack.c.bf16 %v2006, %v2005
        %v2115 = vpack.c.bf16 %v2008, %v2007
        %v2116 = vpack.c.bf16 %v2010, %v2009
        %v2117 = vpack.c.bf16 %v2012, %v2011
        %2118 = vmatprep.subr.bf16.mxu0 0
        %2119 = vmatpush1.bf16.msra.mxu0 %v2102
        %2120 = vmatprep.subr.bf16.mxu0 0
        %2121 = vmatpush1.bf16.msra.mxu0 %v2103
        %2122 = vmatprep.subr.bf16.mxu0 0
        %2123 = vmatpush1.bf16.msra.mxu0 %v2104
        %2124 = vmatprep.subr.bf16.mxu0 0
        %2125 = vmatpush1.bf16.msra.mxu0 %v2105
        %2126 = vmatprep.subr.bf16.mxu0 0
        %2127 = vmatpush1.bf16.msra.mxu0 %v2106
        %2128 = vmatprep.subr.bf16.mxu0 0
        %2129 = vmatpush1.bf16.msra.mxu0 %v2107
        %2130 = vmatprep.subr.bf16.mxu0 0
        %2131 = vmatpush1.bf16.msra.mxu0 %v2108
        %2132 = vmatprep.subr.bf16.mxu0 0
        %2133 = vmatpush1.bf16.msra.mxu0 %v2109
        %2134 = vmatprep.subr.bf16.mxu0 0
        %2135 = vmatpush1.bf16.msra.mxu0 %v2110
        %2136 = vmatprep.subr.bf16.mxu0 0
        %2137 = vmatpush1.bf16.msra.mxu0 %v2111
        %2138 = vmatprep.subr.bf16.mxu0 0
        %2139 = vmatpush1.bf16.msra.mxu0 %v2112
        %2140 = vmatprep.subr.bf16.mxu0 0
        %2141 = vmatpush1.bf16.msra.mxu0 %v2113
        %2142 = vmatprep.subr.bf16.mxu0 0
        %2143 = vmatpush1.bf16.msra.mxu0 %v2114
        %2144 = vmatprep.subr.bf16.mxu0 0
        %2145 = vmatpush1.bf16.msra.mxu0 %v2115
        %2146 = vmatprep.subr.bf16.mxu0 0
        %2147 = vmatpush1.bf16.msra.mxu0 %v2116
        %2148 = vmatprep.subr.bf16.mxu0 0
        %2149 = vmatpush1.bf16.msra.mxu0 %v2117
        %2150 = vmatprep.mubr.bf16.mxu0 %v2087
        %2151 = vmatmul.mubr.bf16.gmra.mrb[0].mxu0 %v2086
        %v2152 = vpop.f32.mrb[0].mxu0
        %v2153 = vadd.f32 0.0, %v2152
        %v2154 = vpop.f32.mrb[0].mxu0
        %v2155 = vpop.f32.mrb[0].mxu0
        %v2156 = vadd.f32 0.0, %v2155
        %v2157 = vpop.f32.mrb[0].mxu0
        %2158 = vmatprep.mubr.bf16.mxu0 %v2089
        %2159 = vmatmul.mubr.bf16.gmra.mrb[0].mxu0 %v2088
        %v2160 = vpop.f32.mrb[0].mxu0
        %v2161 = vadd.f32 0.0, %v2160
        %v2162 = vpop.f32.mrb[0].mxu0
        %v2163 = vpop.f32.mrb[0].mxu0
        %v2164 = vadd.f32 0.0, %v2163
        %v2165 = vpop.f32.mrb[0].mxu0
        %2166 = vmatprep.mubr.bf16.mxu0 %v2091
        %2167 = vmatmul.mubr.bf16.gmra.mrb[0].mxu0 %v2090
        %v2168 = vpop.f32.mrb[0].mxu0
        %v2169 = vadd.f32 0.0, %v2168
        %v2170 = vpop.f32.mrb[0].mxu0
        %v2171 = vpop.f32.mrb[0].mxu0
        %v2172 = vadd.f32 0.0, %v2171
        %v2173 = vpop.f32.mrb[0].mxu0
        %2174 = vmatprep.mubr.bf16.mxu0 %v2093
        %2175 = vmatmul.mubr.bf16.gmra.mrb[0].mxu0 %v2092
        %v2176 = vpop.f32.mrb[0].mxu0
        %v2177 = vadd.f32 0.0, %v2176
        %v2178 = vpop.f32.mrb[0].mxu0
        %v2179 = vpop.f32.mrb[0].mxu0
        %v2180 = vadd.f32 0.0, %v2179
        %v2181 = vpop.f32.mrb[0].mxu0
        %2182 = vdwg.mxu0
        %v2183 = vadd.f32 %v2094, %v2153
        %v2184 = vadd.f32 %v2095, %v2156
        %v2185 = vadd.f32 %v2096, %v2161
        %v2186 = vadd.f32 %v2097, %v2164
        %v2187 = vadd.f32 %v2098, %v2169
        %v2188 = vadd.f32 %v2099, %v2172
        %v2189 = vadd.f32 %v2100, %v2177
        %v2190 = vadd.f32 %v2101, %v2180
        %2191 = vst [vmem:[#allocation2] sm:$0xff] %v2183
        %2192 = vst [vmem:[#allocation2 + $0x8] sm:$0xff] %v2184
        %2193 = vst [vmem:[#allocation2 + $0x10] sm:$0xff] %v2185
        %2194 = vst [vmem:[#allocation2 + $0x18] sm:$0xff] %v2186
        %2195 = vst [vmem:[#allocation2 + $0x20] sm:$0xff] %v2187
        %2196 = vst [vmem:[#allocation2 + $0x28] sm:$0xff] %v2188
        %2197 = vst [vmem:[#allocation2 + $0x30] sm:$0xff] %v2189
        %2198 = vst [vmem:[#allocation2 + $0x38] sm:$0xff] %v2190
        %p2199 = scmp.eq.s32.totalorder %s37, 1
        // Predicated region
        $region137: #{tpu_custom_call.1} parent=83 // pred_check
          %p2200 = pneg %p2199
        $region138: #{tpu_custom_call.1} parent=83 // pred_check_branch
          %2202 = sbr.rel (%p2200) target = $region140
        $region139: #{tpu_custom_call.1} parent=83 // pred_region
          %v2203 = vld [vmem:[#allocation7] sm:$0xff]
          %v2204 = vld [vmem:[#allocation7 + $0x8] sm:$0xff]
          %v2205 = vld [vmem:[#allocation7 + $0x10] sm:$0xff]
          %v2206 = vld [vmem:[#allocation7 + $0x18] sm:$0xff]
          %v2207 = vld [vmem:[#allocation7 + $0x20] sm:$0xff]
          %v2208 = vld [vmem:[#allocation7 + $0x28] sm:$0xff]
          %v2209 = vld [vmem:[#allocation7 + $0x30] sm:$0xff]
          %v2210 = vld [vmem:[#allocation7 + $0x38] sm:$0xff]
          %v2211 = vld [vmem:[#allocation2] sm:$0xff]
          %v2212 = vld [vmem:[#allocation2 + $0x8] sm:$0xff]
          %v2213 = vld [vmem:[#allocation2 + $0x10] sm:$0xff]
          %v2214 = vld [vmem:[#allocation2 + $0x18] sm:$0xff]
          %v2215 = vld [vmem:[#allocation2 + $0x20] sm:$0xff]
          %v2216 = vld [vmem:[#allocation2 + $0x28] sm:$0xff]
          %v2217 = vld [vmem:[#allocation2 + $0x30] sm:$0xff]
          %v2218 = vld [vmem:[#allocation2 + $0x38] sm:$0xff]
          %v2219 = vld [vmem:[#allocation18] sm:$0xf]
          %v2220 = vld [vmem:[#allocation18 + $0x4] sm:$0xf]
          %v2221 = vld [vmem:[#allocation18 + $0x8] sm:$0xf]
          %v2222 = vld [vmem:[#allocation18 + $0xc] sm:$0xf]
          %v2223 = vld [vmem:[#allocation18 + $0x10] sm:$0xf]
          %v2224 = vld [vmem:[#allocation18 + $0x14] sm:$0xf]
          %v2225 = vld [vmem:[#allocation18 + $0x18] sm:$0xf]
          %v2226 = vld [vmem:[#allocation18 + $0x1c] sm:$0xf]
          %v2227 = vld [vmem:[#allocation18 + $0x20] sm:$0xf]
          %v2228 = vld [vmem:[#allocation18 + $0x24] sm:$0xf]
          %v2229 = vld [vmem:[#allocation18 + $0x28] sm:$0xf]
          %v2230 = vld [vmem:[#allocation18 + $0x2c] sm:$0xf]
          %v2231 = vld [vmem:[#allocation18 + $0x30] sm:$0xf]
          %v2232 = vld [vmem:[#allocation18 + $0x34] sm:$0xf]
          %v2233 = vld [vmem:[#allocation18 + $0x38] sm:$0xf]
          %v2234 = vld [vmem:[#allocation18 + $0x3c] sm:$0xf]
          %v2251 = vunpack.c.l.b16 %v2219
          %v2252 = vunpack.c.l.b16 %v2220
          %v2253 = vunpack.c.l.b16 %v2221
          %v2254 = vunpack.c.l.b16 %v2222
          %v2255 = vunpack.c.l.b16 %v2223
          %v2256 = vunpack.c.l.b16 %v2224
          %v2257 = vunpack.c.l.b16 %v2225
          %v2258 = vunpack.c.l.b16 %v2226
          %v2259 = vunpack.c.l.b16 %v2227
          %v2260 = vunpack.c.l.b16 %v2228
          %v2261 = vunpack.c.l.b16 %v2229
          %v2262 = vunpack.c.l.b16 %v2230
          %v2263 = vunpack.c.l.b16 %v2231
          %v2264 = vunpack.c.l.b16 %v2232
          %v2265 = vunpack.c.l.b16 %v2233
          %v2266 = vunpack.c.l.b16 %v2234
          %v2267 = vpack.c.b16 %v2252, %v2251
          %v2268 = vpack.c.b16 %v2254, %v2253
          %v2269 = vpack.c.b16 %v2256, %v2255
          %v2270 = vpack.c.b16 %v2258, %v2257
          %v2271 = vpack.c.b16 %v2260, %v2259
          %v2272 = vpack.c.b16 %v2262, %v2261
          %v2273 = vpack.c.b16 %v2264, %v2263
          %v2274 = vpack.c.b16 %v2266, %v2265
          %2283 = vmatprep.subr.bf16.mxu0 0
          %2284 = vmatpush1.bf16.msra.mxu0 %v2267
          %2285 = vmatprep.subr.bf16.mxu0 0
          %2286 = vmatpush1.bf16.msra.mxu0 %v2268
          %2287 = vmatprep.subr.bf16.mxu0 0
          %2288 = vmatpush1.bf16.msra.mxu0 %v2269
          %2289 = vmatprep.subr.bf16.mxu0 0
          %2290 = vmatpush1.bf16.msra.mxu0 %v2270
          %2291 = vmatprep.subr.bf16.mxu0 0
          %2292 = vmatpush1.bf16.msra.mxu0 %v2271
          %2293 = vmatprep.subr.bf16.mxu0 0
          %2294 = vmatpush1.bf16.msra.mxu0 %v2272
          %2295 = vmatprep.subr.bf16.mxu0 0
          %2296 = vmatpush1.bf16.msra.mxu0 %v2273
          %2297 = vmatprep.subr.bf16.mxu0 0
          %2298 = vmatpush1.bf16.msra.mxu0 %v2274
          %2299 = vmatprep.subr.bf16.mxu0 0
          %2300 = vmatpush1.bf16.msra.mxu0 0
          %2301 = vmatprep.subr.bf16.mxu0 0
          %2302 = vmatpush1.bf16.msra.mxu0 0
          %2303 = vmatprep.subr.bf16.mxu0 0
          %2304 = vmatpush1.bf16.msra.mxu0 0
          %2305 = vmatprep.subr.bf16.mxu0 0
          %2306 = vmatpush1.bf16.msra.mxu0 0
          %2307 = vmatprep.subr.bf16.mxu0 0
          %2308 = vmatpush1.bf16.msra.mxu0 0
          %2309 = vmatprep.subr.bf16.mxu0 0
          %2310 = vmatpush1.bf16.msra.mxu0 0
          %2311 = vmatprep.subr.bf16.mxu0 0
          %2312 = vmatpush1.bf16.msra.mxu0 0
          %2313 = vmatprep.subr.bf16.mxu0 0
          %2314 = vmatpush1.bf16.msra.mxu0 0
          %2315 = vmatprep.mubr.f32.mxu0 0.0
          %2316 = vmatmul.mubr.f32.gmra.mrb[0].mxu0 %v2211
          %v2317 = vpop.f32.mrb[0].mxu0
          %v2318 = vadd.f32 0.0, %v2317
          %v2319 = vpop.f32.mrb[0].mxu0
          %2320 = vmatprep.mubr.f32.mxu0 0.0
          %2321 = vmatmul.mubr.f32.gmra.mrb[0].mxu0 %v2212
          %v2322 = vpop.f32.mrb[0].mxu0
          %v2323 = vadd.f32 0.0, %v2322
          %v2324 = vpop.f32.mrb[0].mxu0
          %2325 = vmatprep.mubr.f32.mxu0 0.0
          %2326 = vmatmul.mubr.f32.gmra.mrb[0].mxu0 %v2213
          %v2327 = vpop.f32.mrb[0].mxu0
          %v2328 = vadd.f32 0.0, %v2327
          %v2329 = vpop.f32.mrb[0].mxu0
          %2330 = vmatprep.mubr.f32.mxu0 0.0
          %2331 = vmatmul.mubr.f32.gmra.mrb[0].mxu0 %v2214
          %v2332 = vpop.f32.mrb[0].mxu0
          %v2333 = vadd.f32 0.0, %v2332
          %v2334 = vpop.f32.mrb[0].mxu0
          %2335 = vmatprep.mubr.f32.mxu0 0.0
          %2336 = vmatmul.mubr.f32.gmra.mrb[0].mxu0 %v2215
          %v2337 = vpop.f32.mrb[0].mxu0
          %v2338 = vadd.f32 0.0, %v2337
          %v2339 = vpop.f32.mrb[0].mxu0
          %2340 = vmatprep.mubr.f32.mxu0 0.0
          %2341 = vmatmul.mubr.f32.gmra.mrb[0].mxu0 %v2216
          %v2342 = vpop.f32.mrb[0].mxu0
          %v2343 = vadd.f32 0.0, %v2342
          %v2344 = vpop.f32.mrb[0].mxu0
          %2345 = vmatprep.mubr.f32.mxu0 0.0
          %2346 = vmatmul.mubr.f32.gmra.mrb[0].mxu0 %v2217
          %v2347 = vpop.f32.mrb[0].mxu0
          %v2348 = vadd.f32 0.0, %v2347
          %v2349 = vpop.f32.mrb[0].mxu0
          %2350 = vmatprep.mubr.f32.mxu0 0.0
          %2351 = vmatmul.mubr.f32.gmra.mrb[0].mxu0 %v2218
          %v2352 = vpop.f32.mrb[0].mxu0
          %v2353 = vadd.f32 0.0, %v2352
          %v2354 = vpop.f32.mrb[0].mxu0
          %2355 = vdwg.mxu0
          %v2356 = vxor.u32 %v2318, 2147483648
          %v2357 = vxor.u32 %v2323, 2147483648
          %v2358 = vxor.u32 %v2328, 2147483648
          %v2359 = vxor.u32 %v2333, 2147483648
          %v2360 = vxor.u32 %v2338, 2147483648
          %v2361 = vxor.u32 %v2343, 2147483648
          %v2362 = vxor.u32 %v2348, 2147483648
          %v2363 = vxor.u32 %v2353, 2147483648
          %v2364 = vmul.f32 %v2356, 1.442695
          %v2365 = vpow.pop %v2364
          %v2366 = vmul.f32 %v2357, 1.442695
          %v2367 = vpow.pop %v2366
          %v2368 = vmul.f32 %v2358, 1.442695
          %v2369 = vpow.pop %v2368
          %v2370 = vmul.f32 %v2359, 1.442695
          %v2371 = vpow.pop %v2370
          %v2372 = vmul.f32 %v2360, 1.442695
          %v2373 = vpow.pop %v2372
          %v2374 = vmul.f32 %v2361, 1.442695
          %v2375 = vpow.pop %v2374
          %v2376 = vmul.f32 %v2362, 1.442695
          %v2377 = vpow.pop %v2376
          %v2378 = vmul.f32 %v2363, 1.442695
          %v2379 = vpow.pop %v2378
          %v2380 = vadd.f32 %v2365, 1.0
          %v2381 = vadd.f32 %v2367, 1.0
          %v2382 = vadd.f32 %v2369, 1.0
          %v2383 = vadd.f32 %v2371, 1.0
          %v2384 = vadd.f32 %v2373, 1.0
          %v2385 = vadd.f32 %v2375, 1.0
          %v2386 = vadd.f32 %v2377, 1.0
          %v2387 = vadd.f32 %v2379, 1.0
          %v2388 = vrcp.pop %v2380
          %v2389 = vmul.f32 1.0, %v2388
          %v2390 = vrcp.pop %v2381
          %v2391 = vmul.f32 1.0, %v2390
          %v2392 = vrcp.pop %v2382
          %v2393 = vmul.f32 1.0, %v2392
          %v2394 = vrcp.pop %v2383
          %v2395 = vmul.f32 1.0, %v2394
          %v2396 = vrcp.pop %v2384
          %v2397 = vmul.f32 1.0, %v2396
          %v2398 = vrcp.pop %v2385
          %v2399 = vmul.f32 1.0, %v2398
          %v2400 = vrcp.pop %v2386
          %v2401 = vmul.f32 1.0, %v2400
          %v2402 = vrcp.pop %v2387
          %v2403 = vmul.f32 1.0, %v2402
          %v2404 = vmul.f32 %v2318, %v2389
          %v2405 = vmul.f32 %v2323, %v2391
          %v2406 = vmul.f32 %v2328, %v2393
          %v2407 = vmul.f32 %v2333, %v2395
          %v2408 = vmul.f32 %v2338, %v2397
          %v2409 = vmul.f32 %v2343, %v2399
          %v2410 = vmul.f32 %v2348, %v2401
          %v2411 = vmul.f32 %v2353, %v2403
          %v2412 = vld [vmem:[#allocation4] sm:$0xff]
          %v2413 = vld [vmem:[#allocation4 + $0x8] sm:$0xff]
          %v2414 = vld [vmem:[#allocation4 + $0x10] sm:$0xff]
          %v2415 = vld [vmem:[#allocation4 + $0x18] sm:$0xff]
          %v2416 = vld [vmem:[#allocation4 + $0x20] sm:$0xff]
          %v2417 = vld [vmem:[#allocation4 + $0x28] sm:$0xff]
          %v2418 = vld [vmem:[#allocation4 + $0x30] sm:$0xff]
          %v2419 = vld [vmem:[#allocation4 + $0x38] sm:$0xff]
          %v2420 = vadd.f32 %v2412, %v2404
          %v2421 = vadd.f32 %v2413, %v2405
          %v2422 = vadd.f32 %v2414, %v2406
          %v2423 = vadd.f32 %v2415, %v2407
          %v2424 = vadd.f32 %v2416, %v2408
          %v2425 = vadd.f32 %v2417, %v2409
          %v2426 = vadd.f32 %v2418, %v2410
          %v2427 = vadd.f32 %v2419, %v2411
          %v2428 = vld [vmem:[#allocation19] sm:$0xf]
          %v2429 = vld [vmem:[#allocation19 + $0x4] sm:$0xf]
          %v2430 = vld [vmem:[#allocation19 + $0x8] sm:$0xf]
          %v2431 = vld [vmem:[#allocation19 + $0xc] sm:$0xf]
          %v2432 = vld [vmem:[#allocation19 + $0x10] sm:$0xf]
          %v2433 = vld [vmem:[#allocation19 + $0x14] sm:$0xf]
          %v2434 = vld [vmem:[#allocation19 + $0x18] sm:$0xf]
          %v2435 = vld [vmem:[#allocation19 + $0x1c] sm:$0xf]
          %v2436 = vld [vmem:[#allocation19 + $0x20] sm:$0xf]
          %v2437 = vld [vmem:[#allocation19 + $0x24] sm:$0xf]
          %v2438 = vld [vmem:[#allocation19 + $0x28] sm:$0xf]
          %v2439 = vld [vmem:[#allocation19 + $0x2c] sm:$0xf]
          %v2440 = vld [vmem:[#allocation19 + $0x30] sm:$0xf]
          %v2441 = vld [vmem:[#allocation19 + $0x34] sm:$0xf]
          %v2442 = vld [vmem:[#allocation19 + $0x38] sm:$0xf]
          %v2443 = vld [vmem:[#allocation19 + $0x3c] sm:$0xf]
          %v2444 = vld [vmem:[#allocation21] sm:$0x1]
          %v2446 = vlaneseq
          %v2447 = vshrl.u32 %v2446, 7
          %v2448 = vsub.s32 0, %v2447
          %v2449 = vrot.slane %v2444, %v2448
          %v2467 = vunpack.c.l.b16 %v2428
          %v2468 = vunpack.c.l.b16 %v2429
          %v2469 = vunpack.c.l.b16 %v2430
          %v2470 = vunpack.c.l.b16 %v2431
          %v2471 = vunpack.c.l.b16 %v2432
          %v2472 = vunpack.c.l.b16 %v2433
          %v2473 = vunpack.c.l.b16 %v2434
          %v2474 = vunpack.c.l.b16 %v2435
          %v2475 = vunpack.c.l.b16 %v2436
          %v2476 = vunpack.c.l.b16 %v2437
          %v2477 = vunpack.c.l.b16 %v2438
          %v2478 = vunpack.c.l.b16 %v2439
          %v2479 = vunpack.c.l.b16 %v2440
          %v2480 = vunpack.c.l.b16 %v2441
          %v2481 = vunpack.c.l.b16 %v2442
          %v2482 = vunpack.c.l.b16 %v2443
          %v2483 = vpack.c.b16 %v2468, %v2467
          %v2484 = vpack.c.b16 %v2470, %v2469
          %v2485 = vpack.c.b16 %v2472, %v2471
          %v2486 = vpack.c.b16 %v2474, %v2473
          %v2487 = vpack.c.b16 %v2476, %v2475
          %v2488 = vpack.c.b16 %v2478, %v2477
          %v2489 = vpack.c.b16 %v2480, %v2479
          %v2490 = vpack.c.b16 %v2482, %v2481
          %2499 = vmatprep.subr.bf16.mxu0 0
          %2500 = vmatpush1.bf16.msra.mxu0 %v2483
          %2501 = vmatprep.subr.bf16.mxu0 0
          %2502 = vmatpush1.bf16.msra.mxu0 %v2484
          %2503 = vmatprep.subr.bf16.mxu0 0
          %2504 = vmatpush1.bf16.msra.mxu0 %v2485
          %2505 = vmatprep.subr.bf16.mxu0 0
          %2506 = vmatpush1.bf16.msra.mxu0 %v2486
          %2507 = vmatprep.subr.bf16.mxu0 0
          %2508 = vmatpush1.bf16.msra.mxu0 %v2487
          %2509 = vmatprep.subr.bf16.mxu0 0
          %2510 = vmatpush1.bf16.msra.mxu0 %v2488
          %2511 = vmatprep.subr.bf16.mxu0 0
          %2512 = vmatpush1.bf16.msra.mxu0 %v2489
          %2513 = vmatprep.subr.bf16.mxu0 0
          %2514 = vmatpush1.bf16.msra.mxu0 %v2490
          %2515 = vmatprep.subr.bf16.mxu0 0
          %2516 = vmatpush1.bf16.msra.mxu0 0
          %2517 = vmatprep.subr.bf16.mxu0 0
          %2518 = vmatpush1.bf16.msra.mxu0 0
          %2519 = vmatprep.subr.bf16.mxu0 0
          %2520 = vmatpush1.bf16.msra.mxu0 0
          %2521 = vmatprep.subr.bf16.mxu0 0
          %2522 = vmatpush1.bf16.msra.mxu0 0
          %2523 = vmatprep.subr.bf16.mxu0 0
          %2524 = vmatpush1.bf16.msra.mxu0 0
          %2525 = vmatprep.subr.bf16.mxu0 0
          %2526 = vmatpush1.bf16.msra.mxu0 0
          %2527 = vmatprep.subr.bf16.mxu0 0
          %2528 = vmatpush1.bf16.msra.mxu0 0
          %2529 = vmatprep.subr.bf16.mxu0 0
          %2530 = vmatpush1.bf16.msra.mxu0 0
          %2531 = vmatprep.mubr.f32.mxu0 0.0
          %2532 = vmatmul.mubr.f32.gmra.mrb[0].mxu0 %v2420
          %v2533 = vpop.f32.mrb[0].mxu0
          %v2534 = vadd.f32 %v2449, %v2533
          %v2535 = vpop.f32.mrb[0].mxu0
          %2536 = vmatprep.mubr.f32.mxu0 0.0
          %2537 = vmatmul.mubr.f32.gmra.mrb[0].mxu0 %v2421
          %v2538 = vpop.f32.mrb[0].mxu0
          %v2539 = vadd.f32 %v2449, %v2538
          %v2540 = vpop.f32.mrb[0].mxu0
          %2541 = vmatprep.mubr.f32.mxu0 0.0
          %2542 = vmatmul.mubr.f32.gmra.mrb[0].mxu0 %v2422
          %v2543 = vpop.f32.mrb[0].mxu0
          %v2544 = vadd.f32 %v2449, %v2543
          %v2545 = vpop.f32.mrb[0].mxu0
          %2546 = vmatprep.mubr.f32.mxu0 0.0
          %2547 = vmatmul.mubr.f32.gmra.mrb[0].mxu0 %v2423
          %v2548 = vpop.f32.mrb[0].mxu0
          %v2549 = vadd.f32 %v2449, %v2548
          %v2550 = vpop.f32.mrb[0].mxu0
          %2551 = vmatprep.mubr.f32.mxu0 0.0
          %2552 = vmatmul.mubr.f32.gmra.mrb[0].mxu0 %v2424
          %v2553 = vpop.f32.mrb[0].mxu0
          %v2554 = vadd.f32 %v2449, %v2553
          %v2555 = vpop.f32.mrb[0].mxu0
          %2556 = vmatprep.mubr.f32.mxu0 0.0
          %2557 = vmatmul.mubr.f32.gmra.mrb[0].mxu0 %v2425
          %v2558 = vpop.f32.mrb[0].mxu0
          %v2559 = vadd.f32 %v2449, %v2558
          %v2560 = vpop.f32.mrb[0].mxu0
          %2561 = vmatprep.mubr.f32.mxu0 0.0
          %2562 = vmatmul.mubr.f32.gmra.mrb[0].mxu0 %v2426
          %v2563 = vpop.f32.mrb[0].mxu0
          %v2564 = vadd.f32 %v2449, %v2563
          %v2565 = vpop.f32.mrb[0].mxu0
          %2566 = vmatprep.mubr.f32.mxu0 0.0
          %2567 = vmatmul.mubr.f32.gmra.mrb[0].mxu0 %v2427
          %v2568 = vpop.f32.mrb[0].mxu0
          %v2569 = vadd.f32 %v2449, %v2568
          %v2570 = vpop.f32.mrb[0].mxu0
          %2571 = vdwg.mxu0
          %v2572 = vxor.u32 %v2534, 2147483648
          %v2573 = vxor.u32 %v2539, 2147483648
          %v2574 = vxor.u32 %v2544, 2147483648
          %v2575 = vxor.u32 %v2549, 2147483648
          %v2576 = vxor.u32 %v2554, 2147483648
          %v2577 = vxor.u32 %v2559, 2147483648
          %v2578 = vxor.u32 %v2564, 2147483648
          %v2579 = vxor.u32 %v2569, 2147483648
          %v2580 = vmul.f32 %v2572, 1.442695
          %v2581 = vpow.pop %v2580
          %v2582 = vmul.f32 %v2573, 1.442695
          %v2583 = vpow.pop %v2582
          %v2584 = vmul.f32 %v2574, 1.442695
          %v2585 = vpow.pop %v2584
          %v2586 = vmul.f32 %v2575, 1.442695
          %v2587 = vpow.pop %v2586
          %v2588 = vmul.f32 %v2576, 1.442695
          %v2589 = vpow.pop %v2588
          %v2590 = vmul.f32 %v2577, 1.442695
          %v2591 = vpow.pop %v2590
          %v2592 = vmul.f32 %v2578, 1.442695
          %v2593 = vpow.pop %v2592
          %v2594 = vmul.f32 %v2579, 1.442695
          %v2595 = vpow.pop %v2594
          %v2596 = vadd.f32 %v2581, 1.0
          %v2597 = vadd.f32 %v2583, 1.0
          %v2598 = vadd.f32 %v2585, 1.0
          %v2599 = vadd.f32 %v2587, 1.0
          %v2600 = vadd.f32 %v2589, 1.0
          %v2601 = vadd.f32 %v2591, 1.0
          %v2602 = vadd.f32 %v2593, 1.0
          %v2603 = vadd.f32 %v2595, 1.0
          %v2604 = vrcp.pop %v2596
          %v2605 = vmul.f32 1.0, %v2604
          %v2606 = vrcp.pop %v2597
          %v2607 = vmul.f32 1.0, %v2606
          %v2608 = vrcp.pop %v2598
          %v2609 = vmul.f32 1.0, %v2608
          %v2610 = vrcp.pop %v2599
          %v2611 = vmul.f32 1.0, %v2610
          %v2612 = vrcp.pop %v2600
          %v2613 = vmul.f32 1.0, %v2612
          %v2614 = vrcp.pop %v2601
          %v2615 = vmul.f32 1.0, %v2614
          %v2616 = vrcp.pop %v2602
          %v2617 = vmul.f32 1.0, %v2616
          %v2618 = vrcp.pop %v2603
          %v2619 = vmul.f32 1.0, %v2618
          %v2620 = vmul.f32 %v2534, %v2605
          %v2621 = vmul.f32 %v2539, %v2607
          %v2622 = vmul.f32 %v2544, %v2609
          %v2623 = vmul.f32 %v2549, %v2611
          %v2624 = vmul.f32 %v2554, %v2613
          %v2625 = vmul.f32 %v2559, %v2615
          %v2626 = vmul.f32 %v2564, %v2617
          %v2627 = vmul.f32 %v2569, %v2619
          %s2628 = scalar_lea.vmem [#allocation19], 64
          %v2629 = vld [vmem:[%s2628] sm:$0xf]
          %v2630 = vld [vmem:[%s2628 + $0x4] sm:$0xf]
          %v2631 = vld [vmem:[%s2628 + $0x8] sm:$0xf]
          %v2632 = vld [vmem:[%s2628 + $0xc] sm:$0xf]
          %v2633 = vld [vmem:[%s2628 + $0x10] sm:$0xf]
          %v2634 = vld [vmem:[%s2628 + $0x14] sm:$0xf]
          %v2635 = vld [vmem:[%s2628 + $0x18] sm:$0xf]
          %v2636 = vld [vmem:[%s2628 + $0x1c] sm:$0xf]
          %v2637 = vld [vmem:[%s2628 + $0x20] sm:$0xf]
          %v2638 = vld [vmem:[%s2628 + $0x24] sm:$0xf]
          %v2639 = vld [vmem:[%s2628 + $0x28] sm:$0xf]
          %v2640 = vld [vmem:[%s2628 + $0x2c] sm:$0xf]
          %v2641 = vld [vmem:[%s2628 + $0x30] sm:$0xf]
          %v2642 = vld [vmem:[%s2628 + $0x34] sm:$0xf]
          %v2643 = vld [vmem:[%s2628 + $0x38] sm:$0xf]
          %v2644 = vld [vmem:[%s2628 + $0x3c] sm:$0xf]
          %s2645 = scalar_lea.vmem [#allocation21], 1
          %v2646 = vld [vmem:[%s2645] sm:$0x1]
          %v2648 = vlaneseq
          %v2649 = vshrl.u32 %v2648, 7
          %v2650 = vsub.s32 0, %v2649
          %v2651 = vrot.slane %v2646, %v2650
          %v2669 = vunpack.c.l.b16 %v2629
          %v2670 = vunpack.c.l.b16 %v2630
          %v2671 = vunpack.c.l.b16 %v2631
          %v2672 = vunpack.c.l.b16 %v2632
          %v2673 = vunpack.c.l.b16 %v2633
          %v2674 = vunpack.c.l.b16 %v2634
          %v2675 = vunpack.c.l.b16 %v2635
          %v2676 = vunpack.c.l.b16 %v2636
          %v2677 = vunpack.c.l.b16 %v2637
          %v2678 = vunpack.c.l.b16 %v2638
          %v2679 = vunpack.c.l.b16 %v2639
          %v2680 = vunpack.c.l.b16 %v2640
          %v2681 = vunpack.c.l.b16 %v2641
          %v2682 = vunpack.c.l.b16 %v2642
          %v2683 = vunpack.c.l.b16 %v2643
          %v2684 = vunpack.c.l.b16 %v2644
          %v2685 = vpack.c.b16 %v2670, %v2669
          %v2686 = vpack.c.b16 %v2672, %v2671
          %v2687 = vpack.c.b16 %v2674, %v2673
          %v2688 = vpack.c.b16 %v2676, %v2675
          %v2689 = vpack.c.b16 %v2678, %v2677
          %v2690 = vpack.c.b16 %v2680, %v2679
          %v2691 = vpack.c.b16 %v2682, %v2681
          %v2692 = vpack.c.b16 %v2684, %v2683
          %2701 = vmatprep.subr.bf16.mxu0 0
          %2702 = vmatpush1.bf16.msra.mxu0 %v2685
          %2703 = vmatprep.subr.bf16.mxu0 0
          %2704 = vmatpush1.bf16.msra.mxu0 %v2686
          %2705 = vmatprep.subr.bf16.mxu0 0
          %2706 = vmatpush1.bf16.msra.mxu0 %v2687
          %2707 = vmatprep.subr.bf16.mxu0 0
          %2708 = vmatpush1.bf16.msra.mxu0 %v2688
          %2709 = vmatprep.subr.bf16.mxu0 0
          %2710 = vmatpush1.bf16.msra.mxu0 %v2689
          %2711 = vmatprep.subr.bf16.mxu0 0
          %2712 = vmatpush1.bf16.msra.mxu0 %v2690
          %2713 = vmatprep.subr.bf16.mxu0 0
          %2714 = vmatpush1.bf16.msra.mxu0 %v2691
          %2715 = vmatprep.subr.bf16.mxu0 0
          %2716 = vmatpush1.bf16.msra.mxu0 %v2692
          %2717 = vmatprep.subr.bf16.mxu0 0
          %2718 = vmatpush1.bf16.msra.mxu0 0
          %2719 = vmatprep.subr.bf16.mxu0 0
          %2720 = vmatpush1.bf16.msra.mxu0 0
          %2721 = vmatprep.subr.bf16.mxu0 0
          %2722 = vmatpush1.bf16.msra.mxu0 0
          %2723 = vmatprep.subr.bf16.mxu0 0
          %2724 = vmatpush1.bf16.msra.mxu0 0
          %2725 = vmatprep.subr.bf16.mxu0 0
          %2726 = vmatpush1.bf16.msra.mxu0 0
          %2727 = vmatprep.subr.bf16.mxu0 0
          %2728 = vmatpush1.bf16.msra.mxu0 0
          %2729 = vmatprep.subr.bf16.mxu0 0
          %2730 = vmatpush1.bf16.msra.mxu0 0
          %2731 = vmatprep.subr.bf16.mxu0 0
          %2732 = vmatpush1.bf16.msra.mxu0 0
          %2733 = vmatprep.mubr.f32.mxu0 0.0
          %2734 = vmatmul.mubr.f32.gmra.mrb[0].mxu0 %v2620
          %v2735 = vpop.f32.mrb[0].mxu0
          %v2736 = vadd.f32 %v2651, %v2735
          %v2737 = vpop.f32.mrb[0].mxu0
          %2738 = vmatprep.mubr.f32.mxu0 0.0
          %2739 = vmatmul.mubr.f32.gmra.mrb[0].mxu0 %v2621
          %v2740 = vpop.f32.mrb[0].mxu0
          %v2741 = vadd.f32 %v2651, %v2740
          %v2742 = vpop.f32.mrb[0].mxu0
          %2743 = vmatprep.mubr.f32.mxu0 0.0
          %2744 = vmatmul.mubr.f32.gmra.mrb[0].mxu0 %v2622
          %v2745 = vpop.f32.mrb[0].mxu0
          %v2746 = vadd.f32 %v2651, %v2745
          %v2747 = vpop.f32.mrb[0].mxu0
          %2748 = vmatprep.mubr.f32.mxu0 0.0
          %2749 = vmatmul.mubr.f32.gmra.mrb[0].mxu0 %v2623
          %v2750 = vpop.f32.mrb[0].mxu0
          %v2751 = vadd.f32 %v2651, %v2750
          %v2752 = vpop.f32.mrb[0].mxu0
          %2753 = vmatprep.mubr.f32.mxu0 0.0
          %2754 = vmatmul.mubr.f32.gmra.mrb[0].mxu0 %v2624
          %v2755 = vpop.f32.mrb[0].mxu0
          %v2756 = vadd.f32 %v2651, %v2755
          %v2757 = vpop.f32.mrb[0].mxu0
          %2758 = vmatprep.mubr.f32.mxu0 0.0
          %2759 = vmatmul.mubr.f32.gmra.mrb[0].mxu0 %v2625
          %v2760 = vpop.f32.mrb[0].mxu0
          %v2761 = vadd.f32 %v2651, %v2760
          %v2762 = vpop.f32.mrb[0].mxu0
          %2763 = vmatprep.mubr.f32.mxu0 0.0
          %2764 = vmatmul.mubr.f32.gmra.mrb[0].mxu0 %v2626
          %v2765 = vpop.f32.mrb[0].mxu0
          %v2766 = vadd.f32 %v2651, %v2765
          %v2767 = vpop.f32.mrb[0].mxu0
          %2768 = vmatprep.mubr.f32.mxu0 0.0
          %2769 = vmatmul.mubr.f32.gmra.mrb[0].mxu0 %v2627
          %v2770 = vpop.f32.mrb[0].mxu0
          %v2771 = vadd.f32 %v2651, %v2770
          %v2772 = vpop.f32.mrb[0].mxu0
          %2773 = vdwg.mxu0
          %v2774 = vxor.u32 %v2736, 2147483648
          %v2775 = vxor.u32 %v2741, 2147483648
          %v2776 = vxor.u32 %v2746, 2147483648
          %v2777 = vxor.u32 %v2751, 2147483648
          %v2778 = vxor.u32 %v2756, 2147483648
          %v2779 = vxor.u32 %v2761, 2147483648
          %v2780 = vxor.u32 %v2766, 2147483648
          %v2781 = vxor.u32 %v2771, 2147483648
          %v2782 = vmul.f32 %v2774, 1.442695
          %v2783 = vpow.pop %v2782
          %v2784 = vmul.f32 %v2775, 1.442695
          %v2785 = vpow.pop %v2784
          %v2786 = vmul.f32 %v2776, 1.442695
          %v2787 = vpow.pop %v2786
          %v2788 = vmul.f32 %v2777, 1.442695
          %v2789 = vpow.pop %v2788
          %v2790 = vmul.f32 %v2778, 1.442695
          %v2791 = vpow.pop %v2790
          %v2792 = vmul.f32 %v2779, 1.442695
          %v2793 = vpow.pop %v2792
          %v2794 = vmul.f32 %v2780, 1.442695
          %v2795 = vpow.pop %v2794
          %v2796 = vmul.f32 %v2781, 1.442695
          %v2797 = vpow.pop %v2796
          %v2798 = vadd.f32 %v2783, 1.0
          %v2799 = vadd.f32 %v2785, 1.0
          %v2800 = vadd.f32 %v2787, 1.0
          %v2801 = vadd.f32 %v2789, 1.0
          %v2802 = vadd.f32 %v2791, 1.0
          %v2803 = vadd.f32 %v2793, 1.0
          %v2804 = vadd.f32 %v2795, 1.0
          %v2805 = vadd.f32 %v2797, 1.0
          %v2806 = vrcp.pop %v2798
          %v2807 = vmul.f32 1.0, %v2806
          %v2808 = vrcp.pop %v2799
          %v2809 = vmul.f32 1.0, %v2808
          %v2810 = vrcp.pop %v2800
          %v2811 = vmul.f32 1.0, %v2810
          %v2812 = vrcp.pop %v2801
          %v2813 = vmul.f32 1.0, %v2812
          %v2814 = vrcp.pop %v2802
          %v2815 = vmul.f32 1.0, %v2814
          %v2816 = vrcp.pop %v2803
          %v2817 = vmul.f32 1.0, %v2816
          %v2818 = vrcp.pop %v2804
          %v2819 = vmul.f32 1.0, %v2818
          %v2820 = vrcp.pop %v2805
          %v2821 = vmul.f32 1.0, %v2820
          %v2822 = vmul.f32 %v2736, %v2807
          %v2823 = vmul.f32 %v2741, %v2809
          %v2824 = vmul.f32 %v2746, %v2811
          %v2825 = vmul.f32 %v2751, %v2813
          %v2826 = vmul.f32 %v2756, %v2815
          %v2827 = vmul.f32 %v2761, %v2817
          %v2828 = vmul.f32 %v2766, %v2819
          %v2829 = vmul.f32 %v2771, %v2821
          %v2830 = vadd.f32 %v2420, %v2822
          %v2831 = vadd.f32 %v2421, %v2823
          %v2832 = vadd.f32 %v2422, %v2824
          %v2833 = vadd.f32 %v2423, %v2825
          %v2834 = vadd.f32 %v2424, %v2826
          %v2835 = vadd.f32 %v2425, %v2827
          %v2836 = vadd.f32 %v2426, %v2828
          %v2837 = vadd.f32 %v2427, %v2829
          %v2838 = vld [vmem:[#allocation22] sm:$0xf]
          %v2839 = vld [vmem:[#allocation22 + $0x4] sm:$0xf]
          %v2840 = vld [vmem:[#allocation22 + $0x8] sm:$0xf]
          %v2841 = vld [vmem:[#allocation22 + $0xc] sm:$0xf]
          %v2842 = vld [vmem:[#allocation22 + $0x10] sm:$0xf]
          %v2843 = vld [vmem:[#allocation22 + $0x14] sm:$0xf]
          %v2844 = vld [vmem:[#allocation22 + $0x18] sm:$0xf]
          %v2845 = vld [vmem:[#allocation22 + $0x1c] sm:$0xf]
          %v2846 = vld [vmem:[#allocation22 + $0x20] sm:$0xf]
          %v2847 = vld [vmem:[#allocation22 + $0x24] sm:$0xf]
          %v2848 = vld [vmem:[#allocation22 + $0x28] sm:$0xf]
          %v2849 = vld [vmem:[#allocation22 + $0x2c] sm:$0xf]
          %v2850 = vld [vmem:[#allocation22 + $0x30] sm:$0xf]
          %v2851 = vld [vmem:[#allocation22 + $0x34] sm:$0xf]
          %v2852 = vld [vmem:[#allocation22 + $0x38] sm:$0xf]
          %v2853 = vld [vmem:[#allocation22 + $0x3c] sm:$0xf]
          %v2854 = vld [vmem:[#allocation24] sm:$0x1]
          %v2856 = vlaneseq
          %v2857 = vshrl.u32 %v2856, 7
          %v2858 = vsub.s32 0, %v2857
          %v2859 = vrot.slane %v2854, %v2858
          %v2877 = vunpack.c.l.b16 %v2838
          %v2878 = vunpack.c.l.b16 %v2839
          %v2879 = vunpack.c.l.b16 %v2840
          %v2880 = vunpack.c.l.b16 %v2841
          %v2881 = vunpack.c.l.b16 %v2842
          %v2882 = vunpack.c.l.b16 %v2843
          %v2883 = vunpack.c.l.b16 %v2844
          %v2884 = vunpack.c.l.b16 %v2845
          %v2885 = vunpack.c.l.b16 %v2846
          %v2886 = vunpack.c.l.b16 %v2847
          %v2887 = vunpack.c.l.b16 %v2848
          %v2888 = vunpack.c.l.b16 %v2849
          %v2889 = vunpack.c.l.b16 %v2850
          %v2890 = vunpack.c.l.b16 %v2851
          %v2891 = vunpack.c.l.b16 %v2852
          %v2892 = vunpack.c.l.b16 %v2853
          %v2893 = vpack.c.b16 %v2878, %v2877
          %v2894 = vpack.c.b16 %v2880, %v2879
          %v2895 = vpack.c.b16 %v2882, %v2881
          %v2896 = vpack.c.b16 %v2884, %v2883
          %v2897 = vpack.c.b16 %v2886, %v2885
          %v2898 = vpack.c.b16 %v2888, %v2887
          %v2899 = vpack.c.b16 %v2890, %v2889
          %v2900 = vpack.c.b16 %v2892, %v2891
          %2909 = vmatprep.subr.bf16.mxu0 0
          %2910 = vmatpush1.bf16.msra.mxu0 %v2893
          %2911 = vmatprep.subr.bf16.mxu0 0
          %2912 = vmatpush1.bf16.msra.mxu0 %v2894
          %2913 = vmatprep.subr.bf16.mxu0 0
          %2914 = vmatpush1.bf16.msra.mxu0 %v2895
          %2915 = vmatprep.subr.bf16.mxu0 0
          %2916 = vmatpush1.bf16.msra.mxu0 %v2896
          %2917 = vmatprep.subr.bf16.mxu0 0
          %2918 = vmatpush1.bf16.msra.mxu0 %v2897
          %2919 = vmatprep.subr.bf16.mxu0 0
          %2920 = vmatpush1.bf16.msra.mxu0 %v2898
          %2921 = vmatprep.subr.bf16.mxu0 0
          %2922 = vmatpush1.bf16.msra.mxu0 %v2899
          %2923 = vmatprep.subr.bf16.mxu0 0
          %2924 = vmatpush1.bf16.msra.mxu0 %v2900
          %2925 = vmatprep.subr.bf16.mxu0 0
          %2926 = vmatpush1.bf16.msra.mxu0 0
          %2927 = vmatprep.subr.bf16.mxu0 0
          %2928 = vmatpush1.bf16.msra.mxu0 0
          %2929 = vmatprep.subr.bf16.mxu0 0
          %2930 = vmatpush1.bf16.msra.mxu0 0
          %2931 = vmatprep.subr.bf16.mxu0 0
          %2932 = vmatpush1.bf16.msra.mxu0 0
          %2933 = vmatprep.subr.bf16.mxu0 0
          %2934 = vmatpush1.bf16.msra.mxu0 0
          %2935 = vmatprep.subr.bf16.mxu0 0
          %2936 = vmatpush1.bf16.msra.mxu0 0
          %2937 = vmatprep.subr.bf16.mxu0 0
          %2938 = vmatpush1.bf16.msra.mxu0 0
          %2939 = vmatprep.subr.bf16.mxu0 0
          %2940 = vmatpush1.bf16.msra.mxu0 0
          %2941 = vmatprep.mubr.f32.mxu0 0.0
          %2942 = vmatmul.mubr.f32.gmra.mrb[0].mxu0 %v2830
          %v2943 = vpop.f32.mrb[0].mxu0
          %v2944 = vadd.f32 %v2859, %v2943
          %v2945 = vpop.f32.mrb[0].mxu0
          %2946 = vmatprep.mubr.f32.mxu0 0.0
          %2947 = vmatmul.mubr.f32.gmra.mrb[0].mxu0 %v2831
          %v2948 = vpop.f32.mrb[0].mxu0
          %v2949 = vadd.f32 %v2859, %v2948
          %v2950 = vpop.f32.mrb[0].mxu0
          %2951 = vmatprep.mubr.f32.mxu0 0.0
          %2952 = vmatmul.mubr.f32.gmra.mrb[0].mxu0 %v2832
          %v2953 = vpop.f32.mrb[0].mxu0
          %v2954 = vadd.f32 %v2859, %v2953
          %v2955 = vpop.f32.mrb[0].mxu0
          %2956 = vmatprep.mubr.f32.mxu0 0.0
          %2957 = vmatmul.mubr.f32.gmra.mrb[0].mxu0 %v2833
          %v2958 = vpop.f32.mrb[0].mxu0
          %v2959 = vadd.f32 %v2859, %v2958
          %v2960 = vpop.f32.mrb[0].mxu0
          %2961 = vmatprep.mubr.f32.mxu0 0.0
          %2962 = vmatmul.mubr.f32.gmra.mrb[0].mxu0 %v2834
          %v2963 = vpop.f32.mrb[0].mxu0
          %v2964 = vadd.f32 %v2859, %v2963
          %v2965 = vpop.f32.mrb[0].mxu0
          %2966 = vmatprep.mubr.f32.mxu0 0.0
          %2967 = vmatmul.mubr.f32.gmra.mrb[0].mxu0 %v2835
          %v2968 = vpop.f32.mrb[0].mxu0
          %v2969 = vadd.f32 %v2859, %v2968
          %v2970 = vpop.f32.mrb[0].mxu0
          %2971 = vmatprep.mubr.f32.mxu0 0.0
          %2972 = vmatmul.mubr.f32.gmra.mrb[0].mxu0 %v2836
          %v2973 = vpop.f32.mrb[0].mxu0
          %v2974 = vadd.f32 %v2859, %v2973
          %v2975 = vpop.f32.mrb[0].mxu0
          %2976 = vmatprep.mubr.f32.mxu0 0.0
          %2977 = vmatmul.mubr.f32.gmra.mrb[0].mxu0 %v2837
          %v2978 = vpop.f32.mrb[0].mxu0
          %v2979 = vadd.f32 %v2859, %v2978
          %v2980 = vpop.f32.mrb[0].mxu0
          %2981 = vdwg.mxu0
          %v2982 = vxor.u32 %v2944, 2147483648
          %v2983 = vxor.u32 %v2949, 2147483648
          %v2984 = vxor.u32 %v2954, 2147483648
          %v2985 = vxor.u32 %v2959, 2147483648
          %v2986 = vxor.u32 %v2964, 2147483648
          %v2987 = vxor.u32 %v2969, 2147483648
          %v2988 = vxor.u32 %v2974, 2147483648
          %v2989 = vxor.u32 %v2979, 2147483648
          %v2990 = vmul.f32 %v2982, 1.442695
          %v2991 = vpow.pop %v2990
          %v2992 = vmul.f32 %v2983, 1.442695
          %v2993 = vpow.pop %v2992
          %v2994 = vmul.f32 %v2984, 1.442695
          %v2995 = vpow.pop %v2994
          %v2996 = vmul.f32 %v2985, 1.442695
          %v2997 = vpow.pop %v2996
          %v2998 = vmul.f32 %v2986, 1.442695
          %v2999 = vpow.pop %v2998
          %v3000 = vmul.f32 %v2987, 1.442695
          %v3001 = vpow.pop %v3000
          %v3002 = vmul.f32 %v2988, 1.442695
          %v3003 = vpow.pop %v3002
          %v3004 = vmul.f32 %v2989, 1.442695
          %v3005 = vpow.pop %v3004
          %v3006 = vadd.f32 %v2991, 1.0
          %v3007 = vadd.f32 %v2993, 1.0
          %v3008 = vadd.f32 %v2995, 1.0
          %v3009 = vadd.f32 %v2997, 1.0
          %v3010 = vadd.f32 %v2999, 1.0
          %v3011 = vadd.f32 %v3001, 1.0
          %v3012 = vadd.f32 %v3003, 1.0
          %v3013 = vadd.f32 %v3005, 1.0
          %v3014 = vrcp.pop %v3006
          %v3015 = vmul.f32 1.0, %v3014
          %v3016 = vrcp.pop %v3007
          %v3017 = vmul.f32 1.0, %v3016
          %v3018 = vrcp.pop %v3008
          %v3019 = vmul.f32 1.0, %v3018
          %v3020 = vrcp.pop %v3009
          %v3021 = vmul.f32 1.0, %v3020
          %v3022 = vrcp.pop %v3010
          %v3023 = vmul.f32 1.0, %v3022
          %v3024 = vrcp.pop %v3011
          %v3025 = vmul.f32 1.0, %v3024
          %v3026 = vrcp.pop %v3012
          %v3027 = vmul.f32 1.0, %v3026
          %v3028 = vrcp.pop %v3013
          %v3029 = vmul.f32 1.0, %v3028
          %v3030 = vmul.f32 %v2944, %v3015
          %v3031 = vmul.f32 %v2949, %v3017
          %v3032 = vmul.f32 %v2954, %v3019
          %v3033 = vmul.f32 %v2959, %v3021
          %v3034 = vmul.f32 %v2964, %v3023
          %v3035 = vmul.f32 %v2969, %v3025
          %v3036 = vmul.f32 %v2974, %v3027
          %v3037 = vmul.f32 %v2979, %v3029
          %v3038 = vadd.f32 %v3030, %v2203
          %v3039 = vadd.f32 %v3031, %v2204
          %v3040 = vadd.f32 %v3032, %v2205
          %v3041 = vadd.f32 %v3033, %v2206
          %v3042 = vadd.f32 %v3034, %v2207
          %v3043 = vadd.f32 %v3035, %v2208
          %v3044 = vadd.f32 %v3036, %v2209
          %v3045 = vadd.f32 %v3037, %v2210
          %v3046 = vld [vmem:[%s14] sm:$0xf]
          %v3047 = vld [vmem:[%s14 + $0x4] sm:$0xf]
          %v3048 = vld [vmem:[%s14 + $0x8] sm:$0xf]
          %v3049 = vld [vmem:[%s14 + $0xc] sm:$0xf]
          %v3050 = vld [vmem:[%s14 + $0x10] sm:$0xf]
          %v3051 = vld [vmem:[%s14 + $0x14] sm:$0xf]
          %v3052 = vld [vmem:[%s14 + $0x18] sm:$0xf]
          %v3053 = vld [vmem:[%s14 + $0x1c] sm:$0xf]
          %v3054 = vld [vmem:[%s14 + $0x20] sm:$0xf]
          %v3055 = vld [vmem:[%s14 + $0x24] sm:$0xf]
          %v3056 = vld [vmem:[%s14 + $0x28] sm:$0xf]
          %v3057 = vld [vmem:[%s14 + $0x2c] sm:$0xf]
          %v3058 = vld [vmem:[%s14 + $0x30] sm:$0xf]
          %v3059 = vld [vmem:[%s14 + $0x34] sm:$0xf]
          %v3060 = vld [vmem:[%s14 + $0x38] sm:$0xf]
          %v3061 = vld [vmem:[%s14 + $0x3c] sm:$0xf]
          %v3062 = vld [vmem:[#allocation25] sm:$0x1]
          %v3064 = vlaneseq
          %v3065 = vshrl.u32 %v3064, 7
          %v3066 = vsub.s32 0, %v3065
          %v3067 = vrot.slane %v3062, %v3066
          %v3085 = vunpack.c.l.b16 %v3046
          %v3086 = vunpack.c.l.b16 %v3047
          %v3087 = vunpack.c.l.b16 %v3048
          %v3088 = vunpack.c.l.b16 %v3049
          %v3089 = vunpack.c.l.b16 %v3050
          %v3090 = vunpack.c.l.b16 %v3051
          %v3091 = vunpack.c.l.b16 %v3052
          %v3092 = vunpack.c.l.b16 %v3053
          %v3093 = vunpack.c.l.b16 %v3054
          %v3094 = vunpack.c.l.b16 %v3055
          %v3095 = vunpack.c.l.b16 %v3056
          %v3096 = vunpack.c.l.b16 %v3057
          %v3097 = vunpack.c.l.b16 %v3058
          %v3098 = vunpack.c.l.b16 %v3059
          %v3099 = vunpack.c.l.b16 %v3060
          %v3100 = vunpack.c.l.b16 %v3061
          %v3101 = vpack.c.b16 %v3086, %v3085
          %v3102 = vpack.c.b16 %v3088, %v3087
          %v3103 = vpack.c.b16 %v3090, %v3089
          %v3104 = vpack.c.b16 %v3092, %v3091
          %v3105 = vpack.c.b16 %v3094, %v3093
          %v3106 = vpack.c.b16 %v3096, %v3095
          %v3107 = vpack.c.b16 %v3098, %v3097
          %v3108 = vpack.c.b16 %v3100, %v3099
          %3117 = vmatprep.subr.bf16.mxu0 0
          %3118 = vmatpush1.bf16.msra.mxu0 %v3101
          %3119 = vmatprep.subr.bf16.mxu0 0
          %3120 = vmatpush1.bf16.msra.mxu0 %v3102
          %3121 = vmatprep.subr.bf16.mxu0 0
          %3122 = vmatpush1.bf16.msra.mxu0 %v3103
          %3123 = vmatprep.subr.bf16.mxu0 0
          %3124 = vmatpush1.bf16.msra.mxu0 %v3104
          %3125 = vmatprep.subr.bf16.mxu0 0
          %3126 = vmatpush1.bf16.msra.mxu0 %v3105
          %3127 = vmatprep.subr.bf16.mxu0 0
          %3128 = vmatpush1.bf16.msra.mxu0 %v3106
          %3129 = vmatprep.subr.bf16.mxu0 0
          %3130 = vmatpush1.bf16.msra.mxu0 %v3107
          %3131 = vmatprep.subr.bf16.mxu0 0
          %3132 = vmatpush1.bf16.msra.mxu0 %v3108
          %3133 = vmatprep.subr.bf16.mxu0 0
          %3134 = vmatpush1.bf16.msra.mxu0 0
          %3135 = vmatprep.subr.bf16.mxu0 0
          %3136 = vmatpush1.bf16.msra.mxu0 0
          %3137 = vmatprep.subr.bf16.mxu0 0
          %3138 = vmatpush1.bf16.msra.mxu0 0
          %3139 = vmatprep.subr.bf16.mxu0 0
          %3140 = vmatpush1.bf16.msra.mxu0 0
          %3141 = vmatprep.subr.bf16.mxu0 0
          %3142 = vmatpush1.bf16.msra.mxu0 0
          %3143 = vmatprep.subr.bf16.mxu0 0
          %3144 = vmatpush1.bf16.msra.mxu0 0
          %3145 = vmatprep.subr.bf16.mxu0 0
          %3146 = vmatpush1.bf16.msra.mxu0 0
          %3147 = vmatprep.subr.bf16.mxu0 0
          %3148 = vmatpush1.bf16.msra.mxu0 0
          %3149 = vmatprep.mubr.f32.mxu0 0.0
          %3150 = vmatmul.mubr.f32.gmra.mrb[0].mxu0 %v3038
          %v3151 = vpop.f32.mrb[0].mxu0
          %v3152 = vadd.f32 %v3067, %v3151
          %v3153 = vpop.f32.mrb[0].mxu0
          %3154 = vmatprep.mubr.f32.mxu0 0.0
          %3155 = vmatmul.mubr.f32.gmra.mrb[0].mxu0 %v3039
          %v3156 = vpop.f32.mrb[0].mxu0
          %v3157 = vadd.f32 %v3067, %v3156
          %v3158 = vpop.f32.mrb[0].mxu0
          %3159 = vmatprep.mubr.f32.mxu0 0.0
          %3160 = vmatmul.mubr.f32.gmra.mrb[0].mxu0 %v3040
          %v3161 = vpop.f32.mrb[0].mxu0
          %v3162 = vadd.f32 %v3067, %v3161
          %v3163 = vpop.f32.mrb[0].mxu0
          %3164 = vmatprep.mubr.f32.mxu0 0.0
          %3165 = vmatmul.mubr.f32.gmra.mrb[0].mxu0 %v3041
          %v3166 = vpop.f32.mrb[0].mxu0
          %v3167 = vadd.f32 %v3067, %v3166
          %v3168 = vpop.f32.mrb[0].mxu0
          %3169 = vmatprep.mubr.f32.mxu0 0.0
          %3170 = vmatmul.mubr.f32.gmra.mrb[0].mxu0 %v3042
          %v3171 = vpop.f32.mrb[0].mxu0
          %v3172 = vadd.f32 %v3067, %v3171
          %v3173 = vpop.f32.mrb[0].mxu0
          %3174 = vmatprep.mubr.f32.mxu0 0.0
          %3175 = vmatmul.mubr.f32.gmra.mrb[0].mxu0 %v3043
          %v3176 = vpop.f32.mrb[0].mxu0
          %v3177 = vadd.f32 %v3067, %v3176
          %v3178 = vpop.f32.mrb[0].mxu0
          %3179 = vmatprep.mubr.f32.mxu0 0.0
          %3180 = vmatmul.mubr.f32.gmra.mrb[0].mxu0 %v3044
          %v3181 = vpop.f32.mrb[0].mxu0
          %v3182 = vadd.f32 %v3067, %v3181
          %v3183 = vpop.f32.mrb[0].mxu0
          %3184 = vmatprep.mubr.f32.mxu0 0.0
          %3185 = vmatmul.mubr.f32.gmra.mrb[0].mxu0 %v3045
          %v3186 = vpop.f32.mrb[0].mxu0
          %v3187 = vadd.f32 %v3067, %v3186
          %v3188 = vpop.f32.mrb[0].mxu0
          %3189 = vdwg.mxu0
          %v3190 = vxor.u32 %v3152, 2147483648
          %v3191 = vxor.u32 %v3157, 2147483648
          %v3192 = vxor.u32 %v3162, 2147483648
          %v3193 = vxor.u32 %v3167, 2147483648
          %v3194 = vxor.u32 %v3172, 2147483648
          %v3195 = vxor.u32 %v3177, 2147483648
          %v3196 = vxor.u32 %v3182, 2147483648
          %v3197 = vxor.u32 %v3187, 2147483648
          %v3198 = vmul.f32 %v3190, 1.442695
          %v3199 = vpow.pop %v3198
          %v3200 = vmul.f32 %v3191, 1.442695
          %v3201 = vpow.pop %v3200
          %v3202 = vmul.f32 %v3192, 1.442695
          %v3203 = vpow.pop %v3202
          %v3204 = vmul.f32 %v3193, 1.442695
          %v3205 = vpow.pop %v3204
          %v3206 = vmul.f32 %v3194, 1.442695
          %v3207 = vpow.pop %v3206
          %v3208 = vmul.f32 %v3195, 1.442695
          %v3209 = vpow.pop %v3208
          %v3210 = vmul.f32 %v3196, 1.442695
          %v3211 = vpow.pop %v3210
          %v3212 = vmul.f32 %v3197, 1.442695
          %v3213 = vpow.pop %v3212
          %v3214 = vadd.f32 %v3199, 1.0
          %v3215 = vadd.f32 %v3201, 1.0
          %v3216 = vadd.f32 %v3203, 1.0
          %v3217 = vadd.f32 %v3205, 1.0
          %v3218 = vadd.f32 %v3207, 1.0
          %v3219 = vadd.f32 %v3209, 1.0
          %v3220 = vadd.f32 %v3211, 1.0
          %v3221 = vadd.f32 %v3213, 1.0
          %v3222 = vrcp.pop %v3214
          %v3223 = vmul.f32 1.0, %v3222
          %v3224 = vrcp.pop %v3215
          %v3225 = vmul.f32 1.0, %v3224
          %v3226 = vrcp.pop %v3216
          %v3227 = vmul.f32 1.0, %v3226
          %v3228 = vrcp.pop %v3217
          %v3229 = vmul.f32 1.0, %v3228
          %v3230 = vrcp.pop %v3218
          %v3231 = vmul.f32 1.0, %v3230
          %v3232 = vrcp.pop %v3219
          %v3233 = vmul.f32 1.0, %v3232
          %v3234 = vrcp.pop %v3220
          %v3235 = vmul.f32 1.0, %v3234
          %v3236 = vrcp.pop %v3221
          %v3237 = vmul.f32 1.0, %v3236
          %v3238 = vmul.f32 %v3152, %v3223
          %v3239 = vmul.f32 %v3157, %v3225
          %v3240 = vmul.f32 %v3162, %v3227
          %v3241 = vmul.f32 %v3167, %v3229
          %v3242 = vmul.f32 %v3172, %v3231
          %v3243 = vmul.f32 %v3177, %v3233
          %v3244 = vmul.f32 %v3182, %v3235
          %v3245 = vmul.f32 %v3187, %v3237
          %s3246 = scalar_lea.vmem %s14, 64
          %v3247 = vld [vmem:[%s3246] sm:$0xf]
          %v3248 = vld [vmem:[%s3246 + $0x4] sm:$0xf]
          %v3249 = vld [vmem:[%s3246 + $0x8] sm:$0xf]
          %v3250 = vld [vmem:[%s3246 + $0xc] sm:$0xf]
          %v3251 = vld [vmem:[%s3246 + $0x10] sm:$0xf]
          %v3252 = vld [vmem:[%s3246 + $0x14] sm:$0xf]
          %v3253 = vld [vmem:[%s3246 + $0x18] sm:$0xf]
          %v3254 = vld [vmem:[%s3246 + $0x1c] sm:$0xf]
          %v3255 = vld [vmem:[%s3246 + $0x20] sm:$0xf]
          %v3256 = vld [vmem:[%s3246 + $0x24] sm:$0xf]
          %v3257 = vld [vmem:[%s3246 + $0x28] sm:$0xf]
          %v3258 = vld [vmem:[%s3246 + $0x2c] sm:$0xf]
          %v3259 = vld [vmem:[%s3246 + $0x30] sm:$0xf]
          %v3260 = vld [vmem:[%s3246 + $0x34] sm:$0xf]
          %v3261 = vld [vmem:[%s3246 + $0x38] sm:$0xf]
          %v3262 = vld [vmem:[%s3246 + $0x3c] sm:$0xf]
          %s3263 = scalar_lea.vmem [#allocation25], 1
          %v3264 = vld [vmem:[%s3263] sm:$0x1]
          %v3266 = vlaneseq
          %v3267 = vshrl.u32 %v3266, 7
          %v3268 = vsub.s32 0, %v3267
          %v3269 = vrot.slane %v3264, %v3268
          %v3287 = vunpack.c.l.b16 %v3247
          %v3288 = vunpack.c.l.b16 %v3248
          %v3289 = vunpack.c.l.b16 %v3249
          %v3290 = vunpack.c.l.b16 %v3250
          %v3291 = vunpack.c.l.b16 %v3251
          %v3292 = vunpack.c.l.b16 %v3252
          %v3293 = vunpack.c.l.b16 %v3253
          %v3294 = vunpack.c.l.b16 %v3254
          %v3295 = vunpack.c.l.b16 %v3255
          %v3296 = vunpack.c.l.b16 %v3256
          %v3297 = vunpack.c.l.b16 %v3257
          %v3298 = vunpack.c.l.b16 %v3258
          %v3299 = vunpack.c.l.b16 %v3259
          %v3300 = vunpack.c.l.b16 %v3260
          %v3301 = vunpack.c.l.b16 %v3261
          %v3302 = vunpack.c.l.b16 %v3262
          %v3303 = vpack.c.b16 %v3288, %v3287
          %v3304 = vpack.c.b16 %v3290, %v3289
          %v3305 = vpack.c.b16 %v3292, %v3291
          %v3306 = vpack.c.b16 %v3294, %v3293
          %v3307 = vpack.c.b16 %v3296, %v3295
          %v3308 = vpack.c.b16 %v3298, %v3297
          %v3309 = vpack.c.b16 %v3300, %v3299
          %v3310 = vpack.c.b16 %v3302, %v3301
          %3319 = vmatprep.subr.bf16.mxu0 0
          %3320 = vmatpush1.bf16.msra.mxu0 %v3303
          %3321 = vmatprep.subr.bf16.mxu0 0
          %3322 = vmatpush1.bf16.msra.mxu0 %v3304
          %3323 = vmatprep.subr.bf16.mxu0 0
          %3324 = vmatpush1.bf16.msra.mxu0 %v3305
          %3325 = vmatprep.subr.bf16.mxu0 0
          %3326 = vmatpush1.bf16.msra.mxu0 %v3306
          %3327 = vmatprep.subr.bf16.mxu0 0
          %3328 = vmatpush1.bf16.msra.mxu0 %v3307
          %3329 = vmatprep.subr.bf16.mxu0 0
          %3330 = vmatpush1.bf16.msra.mxu0 %v3308
          %3331 = vmatprep.subr.bf16.mxu0 0
          %3332 = vmatpush1.bf16.msra.mxu0 %v3309
          %3333 = vmatprep.subr.bf16.mxu0 0
          %3334 = vmatpush1.bf16.msra.mxu0 %v3310
          %3335 = vmatprep.subr.bf16.mxu0 0
          %3336 = vmatpush1.bf16.msra.mxu0 0
          %3337 = vmatprep.subr.bf16.mxu0 0
          %3338 = vmatpush1.bf16.msra.mxu0 0
          %3339 = vmatprep.subr.bf16.mxu0 0
          %3340 = vmatpush1.bf16.msra.mxu0 0
          %3341 = vmatprep.subr.bf16.mxu0 0
          %3342 = vmatpush1.bf16.msra.mxu0 0
          %3343 = vmatprep.subr.bf16.mxu0 0
          %3344 = vmatpush1.bf16.msra.mxu0 0
          %3345 = vmatprep.subr.bf16.mxu0 0
          %3346 = vmatpush1.bf16.msra.mxu0 0
          %3347 = vmatprep.subr.bf16.mxu0 0
          %3348 = vmatpush1.bf16.msra.mxu0 0
          %3349 = vmatprep.subr.bf16.mxu0 0
          %3350 = vmatpush1.bf16.msra.mxu0 0
          %3351 = vmatprep.mubr.f32.mxu0 0.0
          %3352 = vmatmul.mubr.f32.gmra.mrb[0].mxu0 %v3238
          %v3353 = vpop.f32.mrb[0].mxu0
          %v3354 = vadd.f32 %v3269, %v3353
          %v3355 = vpop.f32.mrb[0].mxu0
          %3356 = vmatprep.mubr.f32.mxu0 0.0
          %3357 = vmatmul.mubr.f32.gmra.mrb[0].mxu0 %v3239
          %v3358 = vpop.f32.mrb[0].mxu0
          %v3359 = vadd.f32 %v3269, %v3358
          %v3360 = vpop.f32.mrb[0].mxu0
          %3361 = vmatprep.mubr.f32.mxu0 0.0
          %3362 = vmatmul.mubr.f32.gmra.mrb[0].mxu0 %v3240
          %v3363 = vpop.f32.mrb[0].mxu0
          %v3364 = vadd.f32 %v3269, %v3363
          %v3365 = vpop.f32.mrb[0].mxu0
          %3366 = vmatprep.mubr.f32.mxu0 0.0
          %3367 = vmatmul.mubr.f32.gmra.mrb[0].mxu0 %v3241
          %v3368 = vpop.f32.mrb[0].mxu0
          %v3369 = vadd.f32 %v3269, %v3368
          %v3370 = vpop.f32.mrb[0].mxu0
          %3371 = vmatprep.mubr.f32.mxu0 0.0
          %3372 = vmatmul.mubr.f32.gmra.mrb[0].mxu0 %v3242
          %v3373 = vpop.f32.mrb[0].mxu0
          %v3374 = vadd.f32 %v3269, %v3373
          %v3375 = vpop.f32.mrb[0].mxu0
          %3376 = vmatprep.mubr.f32.mxu0 0.0
          %3377 = vmatmul.mubr.f32.gmra.mrb[0].mxu0 %v3243
          %v3378 = vpop.f32.mrb[0].mxu0
          %v3379 = vadd.f32 %v3269, %v3378
          %v3380 = vpop.f32.mrb[0].mxu0
          %3381 = vmatprep.mubr.f32.mxu0 0.0
          %3382 = vmatmul.mubr.f32.gmra.mrb[0].mxu0 %v3244
          %v3383 = vpop.f32.mrb[0].mxu0
          %v3384 = vadd.f32 %v3269, %v3383
          %v3385 = vpop.f32.mrb[0].mxu0
          %3386 = vmatprep.mubr.f32.mxu0 0.0
          %3387 = vmatmul.mubr.f32.gmra.mrb[0].mxu0 %v3245
          %v3388 = vpop.f32.mrb[0].mxu0
          %v3389 = vadd.f32 %v3269, %v3388
          %v3390 = vpop.f32.mrb[0].mxu0
          %3391 = vdwg.mxu0
          %v3392 = vxor.u32 %v3354, 2147483648
          %v3393 = vxor.u32 %v3359, 2147483648
          %v3394 = vxor.u32 %v3364, 2147483648
          %v3395 = vxor.u32 %v3369, 2147483648
          %v3396 = vxor.u32 %v3374, 2147483648
          %v3397 = vxor.u32 %v3379, 2147483648
          %v3398 = vxor.u32 %v3384, 2147483648
          %v3399 = vxor.u32 %v3389, 2147483648
          %v3400 = vmul.f32 %v3392, 1.442695
          %v3401 = vpow.pop %v3400
          %v3402 = vmul.f32 %v3393, 1.442695
          %v3403 = vpow.pop %v3402
          %v3404 = vmul.f32 %v3394, 1.442695
          %v3405 = vpow.pop %v3404
          %v3406 = vmul.f32 %v3395, 1.442695
          %v3407 = vpow.pop %v3406
          %v3408 = vmul.f32 %v3396, 1.442695
          %v3409 = vpow.pop %v3408
          %v3410 = vmul.f32 %v3397, 1.442695
          %v3411 = vpow.pop %v3410
          %v3412 = vmul.f32 %v3398, 1.442695
          %v3413 = vpow.pop %v3412
          %v3414 = vmul.f32 %v3399, 1.442695
          %v3415 = vpow.pop %v3414
          %v3416 = vadd.f32 %v3401, 1.0
          %v3417 = vadd.f32 %v3403, 1.0
          %v3418 = vadd.f32 %v3405, 1.0
          %v3419 = vadd.f32 %v3407, 1.0
          %v3420 = vadd.f32 %v3409, 1.0
          %v3421 = vadd.f32 %v3411, 1.0
          %v3422 = vadd.f32 %v3413, 1.0
          %v3423 = vadd.f32 %v3415, 1.0
          %v3424 = vrcp.pop %v3416
          %v3425 = vmul.f32 1.0, %v3424
          %v3426 = vrcp.pop %v3417
          %v3427 = vmul.f32 1.0, %v3426
          %v3428 = vrcp.pop %v3418
          %v3429 = vmul.f32 1.0, %v3428
          %v3430 = vrcp.pop %v3419
          %v3431 = vmul.f32 1.0, %v3430
          %v3432 = vrcp.pop %v3420
          %v3433 = vmul.f32 1.0, %v3432
          %v3434 = vrcp.pop %v3421
          %v3435 = vmul.f32 1.0, %v3434
          %v3436 = vrcp.pop %v3422
          %v3437 = vmul.f32 1.0, %v3436
          %v3438 = vrcp.pop %v3423
          %v3439 = vmul.f32 1.0, %v3438
          %v3440 = vmul.f32 %v3354, %v3425
          %v3441 = vmul.f32 %v3359, %v3427
          %v3442 = vmul.f32 %v3364, %v3429
          %v3443 = vmul.f32 %v3369, %v3431
          %v3444 = vmul.f32 %v3374, %v3433
          %v3445 = vmul.f32 %v3379, %v3435
          %v3446 = vmul.f32 %v3384, %v3437
          %v3447 = vmul.f32 %v3389, %v3439
          %v3448 = vadd.f32 %v3038, %v3440
          %v3449 = vadd.f32 %v3039, %v3441
          %v3450 = vadd.f32 %v3040, %v3442
          %v3451 = vadd.f32 %v3041, %v3443
          %v3452 = vadd.f32 %v3042, %v3444
          %v3453 = vadd.f32 %v3043, %v3445
          %v3454 = vadd.f32 %v3044, %v3446
          %v3455 = vadd.f32 %v3045, %v3447
          %3456 = vst [vmem:[#allocation27] sm:$0xff] %v3448
          %3457 = vst [vmem:[#allocation27 + $0x8] sm:$0xff] %v3449
          %3458 = vst [vmem:[#allocation27 + $0x10] sm:$0xff] %v3450
          %3459 = vst [vmem:[#allocation27 + $0x18] sm:$0xff] %v3451
          %3460 = vst [vmem:[#allocation27 + $0x20] sm:$0xff] %v3452
          %3461 = vst [vmem:[#allocation27 + $0x28] sm:$0xff] %v3453
          %3462 = vst [vmem:[#allocation27 + $0x30] sm:$0xff] %v3454
          %3463 = vst [vmem:[#allocation27 + $0x38] sm:$0xff] %v3455
        $region140: #{tpu_custom_call.1} parent=83 // pred_fallthru
          _
        // Predicated region
        $region141: #{tpu_custom_call.1} parent=83 // pred_check
          %p3464 = pneg %p401
        $region142: #{tpu_custom_call.1} parent=83 // pred_check_branch
          %3466 = sbr.rel (%p3464) target = $region144
        $region143: #{tpu_custom_call.1} parent=83 // pred_region
          %s3468 = ssub.s32 1024, 1024
          %3469 = vsyncadd [#allocation9], %s3468
          %s3470 = sshll.u32 [#allocation27], 4
          %s3471 = int_to_ptr.vmem [resolvable:$true] %s3470
          %3476 = dma.vmem_to_hbm [thread:$0]  %s3471, 1024, %s16, [#allocation9], 128, 128, 8
        $region144: #{tpu_custom_call.1} parent=83 // pred_fallthru
          _
        // Predicated region
        $region145: #{tpu_custom_call.1} parent=83 // pred_check
          %p3477 = pneg %p401
        $region146: #{tpu_custom_call.1} parent=83 // pred_check_branch
          %3479 = sbr.rel (%p3477) target = $region148
        $region147: #{tpu_custom_call.1} parent=83 // pred_region
          %3480 = dma.done [#allocation9], 1024
        $region148: #{tpu_custom_call.1} parent=83 // pred_fallthru
          _
      $region84: #{tpu_custom_call.1} parent=5 // pred_fallthru
        _
      %p3481 = scmp.le.s32.totalorder 2, %s32
      // Predicated region
      $region149: #{tpu_custom_call.1} parent=5 // pred_check
        %p3482 = pneg %p3481
      $region150: #{tpu_custom_call.1} parent=5 // pred_check_branch
        %3484 = sbr.rel (%p3482) target = $region152
      $region151: #{tpu_custom_call.1} parent=5 // pred_region
        %s3485 = ssub.s32 %s32, 2
      $region152: #{tpu_custom_call.1} parent=5 // pred_fallthru
        _
    $region6: #{tpu_custom_call.1} parent=1 // loop_footer
      %s36 = sadd.s32 1, %s32
    $region7: #{tpu_custom_call.1} parent=1 // loop_footer_branch
      %31 = sbr.rel target = $region3
    $region8: #{tpu_custom_call.1} parent=1 // loop_exit
      _
    %3486 = vsyncpa [#allocation8], 1
    %s3487 = scalar_lea.sflag [#allocation8], 1
    %3488 = vsyncpa %s3487, 1
    %3489 = vsyncpa [#allocation11], 1
    %s3490 = scalar_lea.sflag [#allocation11], 1
    %3491 = vsyncpa %s3490, 1
    %3492 = vsyncpa [#allocation14], 1
    %3493 = vsyncpa [#allocation17], 1
    %3494 = vsyncpa [#allocation20], 1
    %3495 = vsyncpa [#allocation23], 1
    %3496 = vsyncpa [#allocation26], 1
    %3497 = vsyncpa [#allocation9], 1
    %s3498 = scalar_lea.sflag [#allocation9], 1
    %3499 = vsyncpa %s3498, 1

</llo_original>
